<compile_context>
chip_gen: v6e
topology: v6e:2x2x1
jax: 0.10.0
libtpu: 0.0.40
codegen_flags: <defaults>
</compile_context>

<pallas_src>
import numpy as np
import jax
import jax.numpy as jnp
from jax.experimental import pallas as pl
from jax.experimental.pallas import tpu as pltpu


def _round_up(x, m):
    return ((x + m - 1) // m) * m


# ----------------------------- kernel helpers -------------------------------

def _leaky_bf16(x, slope=0.2):
    """LeakyReLU(0.2) as a 2-op max, result emitted directly in bf16 for the MXU."""
    return jnp.maximum(x, slope * x).astype(jnp.bfloat16)


def _bn_leaky_bf16(x, gamma, beta, eps, slope=0.2):
    """Training-mode BatchNorm1d (batch stats) fused to scale/shift, then
    LeakyReLU(0.2), result emitted in bf16 for the next dot.  All stats math in f32."""
    mean = jnp.mean(x, axis=0, keepdims=True)
    mean_sq = jnp.mean(x * x, axis=0, keepdims=True)
    var = mean_sq - mean * mean                       # biased variance
    scale = gamma * jax.lax.rsqrt(var + eps)          # EUP rsqrt
    shift = beta - scale * mean
    y = x * scale + shift
    return jnp.maximum(y, slope * y).astype(jnp.bfloat16)


# ------------------------------- the kernel ---------------------------------

def generator_kernel(labels_ref, noise_ref, emb_ref, w1e_ref, w1n_ref, vec_ref,
                     w2_hbm, w3_hbm, w4_hbm, w5_hbm,
                     out_ref,
                     w2_v, w3_v, w4_v, w5_v, dma_sem):
    eps = 0.8  # nn.BatchNorm1d(out_feat, 0.8) -> eps = 0.8

    # Kick off the bulk weight DMAs (HBM -> VMEM scratch) immediately so they
    # drain while the embedding / layer-1 / BN compute runs.
    cp2 = pltpu.make_async_copy(w2_hbm, w2_v, dma_sem.at[0]); cp2.start()
    cp3 = pltpu.make_async_copy(w3_hbm, w3_v, dma_sem.at[1]); cp3.start()
    cp4 = pltpu.make_async_copy(w4_hbm, w4_v, dma_sem.at[2]); cp4.start()
    cp5 = pltpu.make_async_copy(w5_hbm, w5_v, dma_sem.at[3]); cp5.start()

    B = out_ref.shape[0]
    d_out_pad = out_ref.shape[1]

    # Packed per-feature vector slab: [b1, g2, be2, g3, be3, g4, be4, b5].
    vecs = vec_ref[...]                                              # (8, 1024) f32

    # Embedding lookup as a one-hot matmul (gather-free), concat folded into a
    # split first matmul:  gen_input @ W1 = emb @ W1[:nc] + noise @ W1[nc:].
    lane = jax.lax.broadcasted_iota(jnp.int32, (B, 128), 1)
    onehot = (lane == labels_ref[...]).astype(jnp.float32)          # (B, 128)
    emb_vec = jnp.dot(onehot, emb_ref[...],
                      preferred_element_type=jnp.float32)           # (B, 128)

    # block 1: Linear -> LeakyReLU (no norm).  bf16 MXU inputs, f32 accumulate.
    h = jnp.dot(emb_vec.astype(jnp.bfloat16), w1e_ref[...],
                preferred_element_type=jnp.float32)
    h = h + jnp.dot(noise_ref[...].astype(jnp.bfloat16), w1n_ref[...],
                    preferred_element_type=jnp.float32)
    h = h + vecs[0:1, :128]                                          # b1
    h = _leaky_bf16(h)                                               # (B,128) bf16

    # block 2: Linear (bias cancelled by BN) -> BN -> LeakyReLU
    cp2.wait()
    h = jnp.dot(h, w2_v[...], preferred_element_type=jnp.float32)
    h = _bn_leaky_bf16(h, vecs[1:2, :256], vecs[2:3, :256], eps)

    # block 3
    cp3.wait()
    h = jnp.dot(h, w3_v[...], preferred_element_type=jnp.float32)
    h = _bn_leaky_bf16(h, vecs[3:4, :512], vecs[4:5, :512], eps)

    # block 4
    cp4.wait()
    h = jnp.dot(h, w4_v[...], preferred_element_type=jnp.float32)
    h = _bn_leaky_bf16(h, vecs[5:6, :1024], vecs[6:7, :1024], eps)

    # head: Linear -> Tanh  (output lane-padded to a multiple of 128)
    cp5.wait()
    h = jnp.dot(h, w5_v[...], preferred_element_type=jnp.float32)
    h = h + vecs[7:8, :d_out_pad]                                    # b5
    out_ref[...] = jnp.tanh(h)


# ------------------------------ param setup ---------------------------------

def init_generator_params(key, n_classes, latent_dim, img_size):
    """PyTorch-like init.  Linear weights stored as (in, out) in bf16 and zero
    padded to lane-aligned shapes; per-feature vectors packed into one f32 slab.
    Pre-BN biases (layers 2-4) are not created (cancelled by training-mode BN)."""
    assert n_classes <= 128, "one-hot embedding path assumes n_classes <= 128"
    d_in = latent_dim + n_classes
    d_out = int(np.prod(img_size))
    d_out_pad = _round_up(d_out, 128)
    slab_w = max(1024, d_out_pad)

    keys = jax.random.split(key, 8)
    params = {}

    # nn.Embedding default init: N(0, 1); padded to (128, 128) for the one-hot dot.
    emb = jax.random.normal(keys[0], (n_classes, n_classes), jnp.float32)
    params["emb"] = jnp.zeros((128, 128), jnp.float32).at[:n_classes, :n_classes].set(emb)

    def lin_w(k, fan_in, fan_out):
        bound = 1.0 / np.sqrt(fan_in)
        return jax.random.uniform(k, (fan_in, fan_out), jnp.float32, -bound, bound)

    # layer 1: Linear(d_in, 128), split at the concat boundary (emb rows | noise rows)
    bound1 = 1.0 / np.sqrt(d_in)
    w1 = jax.random.uniform(keys[1], (d_in, 128), jnp.float32, -bound1, bound1)
    b1 = jax.random.uniform(keys[2], (128,), jnp.float32, -bound1, bound1)
    params["w1e"] = (jnp.zeros((128, 128), jnp.float32)
                     .at[:n_classes].set(w1[:n_classes])).astype(jnp.bfloat16)
    params["w1n"] = w1[n_classes:].astype(jnp.bfloat16)              # (latent_dim, 128)

    # layers 2-4 (no bias: cancelled by training-mode BN) and head
    params["w2"] = lin_w(keys[3], 128, 256).astype(jnp.bfloat16)
    params["w3"] = lin_w(keys[4], 256, 512).astype(jnp.bfloat16)
    params["w4"] = lin_w(keys[5], 512, 1024).astype(jnp.bfloat16)
    w5 = lin_w(keys[6], 1024, d_out)
    b5 = jax.random.uniform(keys[7], (d_out,), jnp.float32,
                            -1.0 / np.sqrt(1024), 1.0 / np.sqrt(1024))
    params["w5"] = jnp.pad(w5, ((0, 0), (0, d_out_pad - d_out))).astype(jnp.bfloat16)

    # packed per-feature vector slab: rows = [b1, g2, be2, g3, be3, g4, be4, b5]
    slab = jnp.zeros((8, slab_w), jnp.float32)
    slab = slab.at[0, :128].set(b1)
    slab = slab.at[1, :256].set(1.0)     # gamma2   (beta2 row stays 0)
    slab = slab.at[3, :512].set(1.0)     # gamma3   (beta3 row stays 0)
    slab = slab.at[5, :1024].set(1.0)    # gamma4   (beta4 row stays 0)
    slab = slab.at[7, :d_out].set(b5)
    params["vecs"] = slab
    return params


# ------------------------------- wrapper -------------------------------------

def _cost_estimate(B, latent_dim, d_out_pad):
    flops = 2 * B * (128 * 128            # one-hot @ emb
                     + 128 * 128          # emb part of layer 1
                     + latent_dim * 128   # noise part of layer 1
                     + 128 * 256 + 256 * 512 + 512 * 1024 + 1024 * d_out_pad)
    weight_bytes = 2 * (128 * 128 + latent_dim * 128 + 128 * 256
                        + 256 * 512 + 512 * 1024 + 1024 * d_out_pad)
    act_bytes = 4 * B * (1 + latent_dim + d_out_pad) + 4 * (128 * 128 + 8 * 1024)
    return pl.CostEstimate(flops=int(flops),
                           transcendentals=int(B * d_out_pad + 1792),
                           bytes_accessed=int(weight_bytes + act_bytes))


def generator_forward(noise, labels, params, img_size):
    """noise: (B, latent_dim) f32, labels: (B,) int -> (B, *img_size) f32."""
    B, latent_dim = noise.shape
    d_out = int(np.prod(img_size))
    d_out_pad = params["w5"].shape[1]

    labels2d = labels.astype(jnp.int32).reshape(B, 1)

    args = (labels2d, noise, params["emb"], params["w1e"], params["w1n"],
            params["vecs"], params["w2"], params["w3"], params["w4"], params["w5"])

    vmem = pl.BlockSpec(memory_space=pltpu.MemorySpace.VMEM)
    anyspace = pl.BlockSpec(memory_space=pl.ANY)   # bulk weights: manual overlapped DMA
    in_specs = [vmem] * 6 + [anyspace] * 4

    # Single-block footprint scales with B; derive the VMEM limit from it and
    # cap under the smallest physical VMEM (v7x: 64 MiB).
    vmem_limit = int(min(64 * 2**20, 8 * 2**20 + B * 48 * 1024))

    flat = pl.pallas_call(
        generator_kernel,
        out_shape=jax.ShapeDtypeStruct((B, d_out_pad), jnp.float32),
        in_specs=in_specs,
        out_specs=vmem,
        scratch_shapes=[
            pltpu.VMEM((128, 256), jnp.bfloat16),
            pltpu.VMEM((256, 512), jnp.bfloat16),
            pltpu.VMEM((512, 1024), jnp.bfloat16),
            pltpu.VMEM((1024, d_out_pad), jnp.bfloat16),
            pltpu.SemaphoreType.DMA((4,)),
        ],
        compiler_params=pltpu.CompilerParams(vmem_limit_bytes=vmem_limit),
        cost_estimate=_cost_estimate(B, latent_dim, d_out_pad),
    )(*args)

    # Slice off the lane padding, then NCHW view as in PyTorch.
    return flat[:, :d_out].reshape(B, *img_size)


# --------------------------------- main --------------------------------------

if __name__ == "__main__":
    n_classes = 10
    latent_dim = 32
    img_size = (1, 8, 8)      # (C, H, W); prod = 64
    batch = 8

    key = jax.random.PRNGKey(0)
    k_params, k_noise, k_labels = jax.random.split(key, 3)

    params = init_generator_params(k_params, n_classes, latent_dim, img_size)
    noise = jax.random.normal(k_noise, (batch, latent_dim), jnp.float32)
    labels = jax.random.randint(k_labels, (batch,), 0, n_classes, jnp.int32)

    img = generator_forward(noise, labels, params, img_size)
    jax.block_until_ready(img)

    assert img.shape == (batch,) + img_size, img.shape
    assert bool(jnp.all(jnp.isfinite(img)))
    print("KERNEL_OK")
</pallas_src>

<mosaic_0001>
module attributes {stable_mosaic.version = 11 : i64} {
  func.func @generator_kernel(%arg0: memref<8x1xi32, #tpu.memory_space<vmem>>, %arg1: memref<8x32xf32, #tpu.memory_space<vmem>>, %arg2: memref<128x128xf32, #tpu.memory_space<vmem>>, %arg3: memref<128x128xbf16, #tpu.memory_space<vmem>>, %arg4: memref<32x128xbf16, #tpu.memory_space<vmem>>, %arg5: memref<8x1024xf32, #tpu.memory_space<vmem>>, %arg6: memref<128x256xbf16, #tpu.memory_space<any>>, %arg7: memref<256x512xbf16, #tpu.memory_space<any>>, %arg8: memref<512x1024xbf16, #tpu.memory_space<any>>, %arg9: memref<1024x128xbf16, #tpu.memory_space<any>>, %arg10: memref<8x128xf32, #tpu.memory_space<vmem>>, %arg11: memref<128x256xbf16, #tpu.memory_space<vmem>>, %arg12: memref<256x512xbf16, #tpu.memory_space<vmem>>, %arg13: memref<512x1024xbf16, #tpu.memory_space<vmem>>, %arg14: memref<1024x128xbf16, #tpu.memory_space<vmem>>, %arg15: memref<4x!tpu.dma_semaphore, #tpu.memory_space<semaphore_mem>>) attributes {dimension_semantics = [], scalar_prefetch = 0 : i64, scratch_operands = 5 : i64, tpu.core_type = #tpu.core_type<tc>} {
    %c0_i32 = arith.constant 0 : i32
    %0 = tpu.memref_slice %arg15[%c0_i32] : memref<4x!tpu.dma_semaphore, #tpu.memory_space<semaphore_mem>> -> memref<1x!tpu.dma_semaphore, #tpu.memory_space<semaphore_mem>>
    %1 = tpu.memref_squeeze %0 : memref<1x!tpu.dma_semaphore, #tpu.memory_space<semaphore_mem>> -> memref<!tpu.dma_semaphore, #tpu.memory_space<semaphore_mem>>
    tpu.enqueue_dma source(%arg6 : memref<128x256xbf16, #tpu.memory_space<any>>) target(%arg11 : memref<128x256xbf16, #tpu.memory_space<vmem>>) target_semaphore(%1 : memref<!tpu.dma_semaphore, #tpu.memory_space<semaphore_mem>>)
    %c1_i32 = arith.constant 1 : i32
    %2 = tpu.memref_slice %arg15[%c1_i32] : memref<4x!tpu.dma_semaphore, #tpu.memory_space<semaphore_mem>> -> memref<1x!tpu.dma_semaphore, #tpu.memory_space<semaphore_mem>>
    %3 = tpu.memref_squeeze %2 : memref<1x!tpu.dma_semaphore, #tpu.memory_space<semaphore_mem>> -> memref<!tpu.dma_semaphore, #tpu.memory_space<semaphore_mem>>
    tpu.enqueue_dma source(%arg7 : memref<256x512xbf16, #tpu.memory_space<any>>) target(%arg12 : memref<256x512xbf16, #tpu.memory_space<vmem>>) target_semaphore(%3 : memref<!tpu.dma_semaphore, #tpu.memory_space<semaphore_mem>>)
    %c2_i32 = arith.constant 2 : i32
    %4 = tpu.memref_slice %arg15[%c2_i32] : memref<4x!tpu.dma_semaphore, #tpu.memory_space<semaphore_mem>> -> memref<1x!tpu.dma_semaphore, #tpu.memory_space<semaphore_mem>>
    %5 = tpu.memref_squeeze %4 : memref<1x!tpu.dma_semaphore, #tpu.memory_space<semaphore_mem>> -> memref<!tpu.dma_semaphore, #tpu.memory_space<semaphore_mem>>
    tpu.enqueue_dma source(%arg8 : memref<512x1024xbf16, #tpu.memory_space<any>>) target(%arg13 : memref<512x1024xbf16, #tpu.memory_space<vmem>>) target_semaphore(%5 : memref<!tpu.dma_semaphore, #tpu.memory_space<semaphore_mem>>)
    %c3_i32 = arith.constant 3 : i32
    %6 = tpu.memref_slice %arg15[%c3_i32] : memref<4x!tpu.dma_semaphore, #tpu.memory_space<semaphore_mem>> -> memref<1x!tpu.dma_semaphore, #tpu.memory_space<semaphore_mem>>
    %7 = tpu.memref_squeeze %6 : memref<1x!tpu.dma_semaphore, #tpu.memory_space<semaphore_mem>> -> memref<!tpu.dma_semaphore, #tpu.memory_space<semaphore_mem>>
    tpu.enqueue_dma source(%arg9 : memref<1024x128xbf16, #tpu.memory_space<any>>) target(%arg14 : memref<1024x128xbf16, #tpu.memory_space<vmem>>) target_semaphore(%7 : memref<!tpu.dma_semaphore, #tpu.memory_space<semaphore_mem>>)
    %c0 = arith.constant 0 : index
    %c0_0 = arith.constant 0 : index
    %8 = vector.load %arg5[%c0, %c0_0] : memref<8x1024xf32, #tpu.memory_space<vmem>>, vector<8x1024xf32>
    %9 = tpu.iota {dimensions = array<i32: 1>} : vector<8x128xi32>
    %c0_1 = arith.constant 0 : index
    %c0_2 = arith.constant 0 : index
    %10 = vector.load %arg0[%c0_1, %c0_2] : memref<8x1xi32, #tpu.memory_space<vmem>>, vector<8x1xi32>
    %11 = vector.broadcast %10 : vector<8x1xi32> to vector<8x128xi32>
    %12 = arith.cmpi eq, %9, %11 : vector<8x128xi32>
    %13 = arith.extui %12 : vector<8x128xi1> to vector<8x128xi32>
    %14 = arith.sitofp %13 : vector<8x128xi32> to vector<8x128xf32>
    %c0_3 = arith.constant 0 : index
    %c0_4 = arith.constant 0 : index
    %15 = vector.load %arg2[%c0_3, %c0_4] : memref<128x128xf32, #tpu.memory_space<vmem>>, vector<128x128xf32>
    %cst = arith.constant dense<0.000000e+00> : vector<8x128xf32>
    %16 = tpu.matmul %14, %15, %cst {dimension_numbers = #tpu.dot_dimension_numbers<[1], [0], [0], [1], [0, 0, 1, 1], [], []>} : vector<8x128xf32>, vector<128x128xf32>, vector<8x128xf32> -> vector<8x128xf32>
    %17 = arith.truncf %16 : vector<8x128xf32> to vector<8x128xbf16>
    %c0_5 = arith.constant 0 : index
    %c0_6 = arith.constant 0 : index
    %18 = vector.load %arg3[%c0_5, %c0_6] : memref<128x128xbf16, #tpu.memory_space<vmem>>, vector<128x128xbf16>
    %cst_7 = arith.constant dense<0.000000e+00> : vector<8x128xf32>
    %19 = tpu.matmul %17, %18, %cst_7 {dimension_numbers = #tpu.dot_dimension_numbers<[1], [0], [0], [1], [0, 0, 1, 1], [], []>} : vector<8x128xbf16>, vector<128x128xbf16>, vector<8x128xf32> -> vector<8x128xf32>
    %c0_8 = arith.constant 0 : index
    %c0_9 = arith.constant 0 : index
    %20 = vector.load %arg1[%c0_8, %c0_9] : memref<8x32xf32, #tpu.memory_space<vmem>>, vector<8x32xf32>
    %21 = arith.truncf %20 : vector<8x32xf32> to vector<8x32xbf16>
    %c0_10 = arith.constant 0 : index
    %c0_11 = arith.constant 0 : index
    %22 = vector.load %arg4[%c0_10, %c0_11] : memref<32x128xbf16, #tpu.memory_space<vmem>>, vector<32x128xbf16>
    %cst_12 = arith.constant dense<0.000000e+00> : vector<8x128xf32>
    %23 = tpu.matmul %21, %22, %cst_12 {dimension_numbers = #tpu.dot_dimension_numbers<[1], [0], [0], [1], [0, 0, 1, 1], [], []>} : vector<8x32xbf16>, vector<32x128xbf16>, vector<8x128xf32> -> vector<8x128xf32>
    %24 = arith.addf %19, %23 : vector<8x128xf32>
    %25 = vector.extract_strided_slice %8 {offsets = [0, 0], sizes = [1, 128], strides = [1, 1]} : vector<8x1024xf32> to vector<1x128xf32>
    %26 = vector.broadcast %25 : vector<1x128xf32> to vector<8x128xf32>
    %27 = arith.addf %24, %26 : vector<8x128xf32>
    %cst_13 = arith.constant 2.000000e-01 : f32
    %28 = vector.broadcast %cst_13 : f32 to vector<8x128xf32>
    %29 = arith.mulf %28, %27 : vector<8x128xf32>
    %30 = arith.maximumf %27, %29 : vector<8x128xf32>
    %31 = arith.truncf %30 : vector<8x128xf32> to vector<8x128xbf16>
    %c0_i32_14 = arith.constant 0 : i32
    %32 = tpu.memref_slice %arg15[%c0_i32_14] : memref<4x!tpu.dma_semaphore, #tpu.memory_space<semaphore_mem>> -> memref<1x!tpu.dma_semaphore, #tpu.memory_space<semaphore_mem>>
    %33 = tpu.memref_squeeze %32 : memref<1x!tpu.dma_semaphore, #tpu.memory_space<semaphore_mem>> -> memref<!tpu.dma_semaphore, #tpu.memory_space<semaphore_mem>>
    tpu.wait_dma2 semaphore(%33 : memref<!tpu.dma_semaphore, #tpu.memory_space<semaphore_mem>>) src(%arg6 : memref<128x256xbf16, #tpu.memory_space<any>>) dst(%arg11 : memref<128x256xbf16, #tpu.memory_space<vmem>>)
    %c0_15 = arith.constant 0 : index
    %c0_16 = arith.constant 0 : index
    %34 = vector.load %arg11[%c0_15, %c0_16] : memref<128x256xbf16, #tpu.memory_space<vmem>>, vector<128x256xbf16>
    %cst_17 = arith.constant dense<0.000000e+00> : vector<8x256xf32>
    %35 = tpu.matmul %31, %34, %cst_17 {dimension_numbers = #tpu.dot_dimension_numbers<[1], [0], [0], [1], [0, 0, 1, 1], [], []>} : vector<8x128xbf16>, vector<128x256xbf16>, vector<8x256xf32> -> vector<8x256xf32>
    %36 = vector.extract_strided_slice %8 {offsets = [1, 0], sizes = [1, 256], strides = [1, 1]} : vector<8x1024xf32> to vector<1x256xf32>
    %37 = vector.extract_strided_slice %8 {offsets = [2, 0], sizes = [1, 256], strides = [1, 1]} : vector<8x1024xf32> to vector<1x256xf32>
    %cst_18 = arith.constant dense<0.000000e+00> : vector<256xf32>
    %38 = vector.multi_reduction <add>, %35, %cst_18 [0] : vector<8x256xf32> to vector<256xf32>
    %39 = vector.shape_cast %38 : vector<256xf32> to vector<1x256xf32>
    %cst_19 = arith.constant 8.000000e+00 : f32
    %40 = vector.broadcast %cst_19 : f32 to vector<1x256xf32>
    %41 = arith.divf %39, %40 : vector<1x256xf32>
    %42 = arith.mulf %35, %35 : vector<8x256xf32>
    %cst_20 = arith.constant dense<0.000000e+00> : vector<256xf32>
    %43 = vector.multi_reduction <add>, %42, %cst_20 [0] : vector<8x256xf32> to vector<256xf32>
    %44 = vector.shape_cast %43 : vector<256xf32> to vector<1x256xf32>
    %cst_21 = arith.constant 8.000000e+00 : f32
    %45 = vector.broadcast %cst_21 : f32 to vector<1x256xf32>
    %46 = arith.divf %44, %45 : vector<1x256xf32>
    %47 = arith.mulf %41, %41 : vector<1x256xf32>
    %48 = arith.subf %46, %47 : vector<1x256xf32>
    %cst_22 = arith.constant 8.000000e-01 : f32
    %49 = vector.broadcast %cst_22 : f32 to vector<1x256xf32>
    %50 = arith.addf %48, %49 : vector<1x256xf32>
    %51 = math.rsqrt %50 : vector<1x256xf32>
    %52 = arith.mulf %36, %51 : vector<1x256xf32>
    %53 = arith.mulf %52, %41 : vector<1x256xf32>
    %54 = arith.subf %37, %53 : vector<1x256xf32>
    %55 = vector.broadcast %52 : vector<1x256xf32> to vector<8x256xf32>
    %56 = arith.mulf %35, %55 : vector<8x256xf32>
    %57 = vector.broadcast %54 : vector<1x256xf32> to vector<8x256xf32>
    %58 = arith.addf %56, %57 : vector<8x256xf32>
    %cst_23 = arith.constant 2.000000e-01 : f32
    %59 = vector.broadcast %cst_23 : f32 to vector<8x256xf32>
    %60 = arith.mulf %59, %58 : vector<8x256xf32>
    %61 = arith.maximumf %58, %60 : vector<8x256xf32>
    %62 = arith.truncf %61 : vector<8x256xf32> to vector<8x256xbf16>
    %c1_i32_24 = arith.constant 1 : i32
    %63 = tpu.memref_slice %arg15[%c1_i32_24] : memref<4x!tpu.dma_semaphore, #tpu.memory_space<semaphore_mem>> -> memref<1x!tpu.dma_semaphore, #tpu.memory_space<semaphore_mem>>
    %64 = tpu.memref_squeeze %63 : memref<1x!tpu.dma_semaphore, #tpu.memory_space<semaphore_mem>> -> memref<!tpu.dma_semaphore, #tpu.memory_space<semaphore_mem>>
    tpu.wait_dma2 semaphore(%64 : memref<!tpu.dma_semaphore, #tpu.memory_space<semaphore_mem>>) src(%arg7 : memref<256x512xbf16, #tpu.memory_space<any>>) dst(%arg12 : memref<256x512xbf16, #tpu.memory_space<vmem>>)
    %c0_25 = arith.constant 0 : index
    %c0_26 = arith.constant 0 : index
    %65 = vector.load %arg12[%c0_25, %c0_26] : memref<256x512xbf16, #tpu.memory_space<vmem>>, vector<256x512xbf16>
    %cst_27 = arith.constant dense<0.000000e+00> : vector<8x512xf32>
    %66 = tpu.matmul %62, %65, %cst_27 {dimension_numbers = #tpu.dot_dimension_numbers<[1], [0], [0], [1], [0, 0, 1, 1], [], []>} : vector<8x256xbf16>, vector<256x512xbf16>, vector<8x512xf32> -> vector<8x512xf32>
    %67 = vector.extract_strided_slice %8 {offsets = [3, 0], sizes = [1, 512], strides = [1, 1]} : vector<8x1024xf32> to vector<1x512xf32>
    %68 = vector.extract_strided_slice %8 {offsets = [4, 0], sizes = [1, 512], strides = [1, 1]} : vector<8x1024xf32> to vector<1x512xf32>
    %cst_28 = arith.constant dense<0.000000e+00> : vector<512xf32>
    %69 = vector.multi_reduction <add>, %66, %cst_28 [0] : vector<8x512xf32> to vector<512xf32>
    %70 = vector.shape_cast %69 : vector<512xf32> to vector<1x512xf32>
    %cst_29 = arith.constant 8.000000e+00 : f32
    %71 = vector.broadcast %cst_29 : f32 to vector<1x512xf32>
    %72 = arith.divf %70, %71 : vector<1x512xf32>
    %73 = arith.mulf %66, %66 : vector<8x512xf32>
    %cst_30 = arith.constant dense<0.000000e+00> : vector<512xf32>
    %74 = vector.multi_reduction <add>, %73, %cst_30 [0] : vector<8x512xf32> to vector<512xf32>
    %75 = vector.shape_cast %74 : vector<512xf32> to vector<1x512xf32>
    %cst_31 = arith.constant 8.000000e+00 : f32
    %76 = vector.broadcast %cst_31 : f32 to vector<1x512xf32>
    %77 = arith.divf %75, %76 : vector<1x512xf32>
    %78 = arith.mulf %72, %72 : vector<1x512xf32>
    %79 = arith.subf %77, %78 : vector<1x512xf32>
    %cst_32 = arith.constant 8.000000e-01 : f32
    %80 = vector.broadcast %cst_32 : f32 to vector<1x512xf32>
    %81 = arith.addf %79, %80 : vector<1x512xf32>
    %82 = math.rsqrt %81 : vector<1x512xf32>
    %83 = arith.mulf %67, %82 : vector<1x512xf32>
    %84 = arith.mulf %83, %72 : vector<1x512xf32>
    %85 = arith.subf %68, %84 : vector<1x512xf32>
    %86 = vector.broadcast %83 : vector<1x512xf32> to vector<8x512xf32>
    %87 = arith.mulf %66, %86 : vector<8x512xf32>
    %88 = vector.broadcast %85 : vector<1x512xf32> to vector<8x512xf32>
    %89 = arith.addf %87, %88 : vector<8x512xf32>
    %cst_33 = arith.constant 2.000000e-01 : f32
    %90 = vector.broadcast %cst_33 : f32 to vector<8x512xf32>
    %91 = arith.mulf %90, %89 : vector<8x512xf32>
    %92 = arith.maximumf %89, %91 : vector<8x512xf32>
    %93 = arith.truncf %92 : vector<8x512xf32> to vector<8x512xbf16>
    %c2_i32_34 = arith.constant 2 : i32
    %94 = tpu.memref_slice %arg15[%c2_i32_34] : memref<4x!tpu.dma_semaphore, #tpu.memory_space<semaphore_mem>> -> memref<1x!tpu.dma_semaphore, #tpu.memory_space<semaphore_mem>>
    %95 = tpu.memref_squeeze %94 : memref<1x!tpu.dma_semaphore, #tpu.memory_space<semaphore_mem>> -> memref<!tpu.dma_semaphore, #tpu.memory_space<semaphore_mem>>
    tpu.wait_dma2 semaphore(%95 : memref<!tpu.dma_semaphore, #tpu.memory_space<semaphore_mem>>) src(%arg8 : memref<512x1024xbf16, #tpu.memory_space<any>>) dst(%arg13 : memref<512x1024xbf16, #tpu.memory_space<vmem>>)
    %c0_35 = arith.constant 0 : index
    %c0_36 = arith.constant 0 : index
    %96 = vector.load %arg13[%c0_35, %c0_36] : memref<512x1024xbf16, #tpu.memory_space<vmem>>, vector<512x1024xbf16>
    %cst_37 = arith.constant dense<0.000000e+00> : vector<8x1024xf32>
    %97 = tpu.matmul %93, %96, %cst_37 {dimension_numbers = #tpu.dot_dimension_numbers<[1], [0], [0], [1], [0, 0, 1, 1], [], []>} : vector<8x512xbf16>, vector<512x1024xbf16>, vector<8x1024xf32> -> vector<8x1024xf32>
    %98 = vector.extract_strided_slice %8 {offsets = [5, 0], sizes = [1, 1024], strides = [1, 1]} : vector<8x1024xf32> to vector<1x1024xf32>
    %99 = vector.extract_strided_slice %8 {offsets = [6, 0], sizes = [1, 1024], strides = [1, 1]} : vector<8x1024xf32> to vector<1x1024xf32>
    %cst_38 = arith.constant dense<0.000000e+00> : vector<1024xf32>
    %100 = vector.multi_reduction <add>, %97, %cst_38 [0] : vector<8x1024xf32> to vector<1024xf32>
    %101 = vector.shape_cast %100 : vector<1024xf32> to vector<1x1024xf32>
    %cst_39 = arith.constant 8.000000e+00 : f32
    %102 = vector.broadcast %cst_39 : f32 to vector<1x1024xf32>
    %103 = arith.divf %101, %102 : vector<1x1024xf32>
    %104 = arith.mulf %97, %97 : vector<8x1024xf32>
    %cst_40 = arith.constant dense<0.000000e+00> : vector<1024xf32>
    %105 = vector.multi_reduction <add>, %104, %cst_40 [0] : vector<8x1024xf32> to vector<1024xf32>
    %106 = vector.shape_cast %105 : vector<1024xf32> to vector<1x1024xf32>
    %cst_41 = arith.constant 8.000000e+00 : f32
    %107 = vector.broadcast %cst_41 : f32 to vector<1x1024xf32>
    %108 = arith.divf %106, %107 : vector<1x1024xf32>
    %109 = arith.mulf %103, %103 : vector<1x1024xf32>
    %110 = arith.subf %108, %109 : vector<1x1024xf32>
    %cst_42 = arith.constant 8.000000e-01 : f32
    %111 = vector.broadcast %cst_42 : f32 to vector<1x1024xf32>
    %112 = arith.addf %110, %111 : vector<1x1024xf32>
    %113 = math.rsqrt %112 : vector<1x1024xf32>
    %114 = arith.mulf %98, %113 : vector<1x1024xf32>
    %115 = arith.mulf %114, %103 : vector<1x1024xf32>
    %116 = arith.subf %99, %115 : vector<1x1024xf32>
    %117 = vector.broadcast %114 : vector<1x1024xf32> to vector<8x1024xf32>
    %118 = arith.mulf %97, %117 : vector<8x1024xf32>
    %119 = vector.broadcast %116 : vector<1x1024xf32> to vector<8x1024xf32>
    %120 = arith.addf %118, %119 : vector<8x1024xf32>
    %cst_43 = arith.constant 2.000000e-01 : f32
    %121 = vector.broadcast %cst_43 : f32 to vector<8x1024xf32>
    %122 = arith.mulf %121, %120 : vector<8x1024xf32>
    %123 = arith.maximumf %120, %122 : vector<8x1024xf32>
    %124 = arith.truncf %123 : vector<8x1024xf32> to vector<8x1024xbf16>
    %c3_i32_44 = arith.constant 3 : i32
    %125 = tpu.memref_slice %arg15[%c3_i32_44] : memref<4x!tpu.dma_semaphore, #tpu.memory_space<semaphore_mem>> -> memref<1x!tpu.dma_semaphore, #tpu.memory_space<semaphore_mem>>
    %126 = tpu.memref_squeeze %125 : memref<1x!tpu.dma_semaphore, #tpu.memory_space<semaphore_mem>> -> memref<!tpu.dma_semaphore, #tpu.memory_space<semaphore_mem>>
    tpu.wait_dma2 semaphore(%126 : memref<!tpu.dma_semaphore, #tpu.memory_space<semaphore_mem>>) src(%arg9 : memref<1024x128xbf16, #tpu.memory_space<any>>) dst(%arg14 : memref<1024x128xbf16, #tpu.memory_space<vmem>>)
    %c0_45 = arith.constant 0 : index
    %c0_46 = arith.constant 0 : index
    %127 = vector.load %arg14[%c0_45, %c0_46] : memref<1024x128xbf16, #tpu.memory_space<vmem>>, vector<1024x128xbf16>
    %cst_47 = arith.constant dense<0.000000e+00> : vector<8x128xf32>
    %128 = tpu.matmul %124, %127, %cst_47 {dimension_numbers = #tpu.dot_dimension_numbers<[1], [0], [0], [1], [0, 0, 1, 1], [], []>} : vector<8x1024xbf16>, vector<1024x128xbf16>, vector<8x128xf32> -> vector<8x128xf32>
    %129 = vector.extract_strided_slice %8 {offsets = [7, 0], sizes = [1, 128], strides = [1, 1]} : vector<8x1024xf32> to vector<1x128xf32>
    %130 = vector.broadcast %129 : vector<1x128xf32> to vector<8x128xf32>
    %131 = arith.addf %128, %130 : vector<8x128xf32>
    %132 = math.tanh %131 : vector<8x128xf32>
    %c0_48 = arith.constant 0 : index
    %c0_49 = arith.constant 0 : index
    %133 = vector.load %arg10[%c0_48, %c0_49] : memref<8x128xf32, #tpu.memory_space<vmem>>, vector<8x128xf32>
    tpu.vector_store %arg10[%c0_48, %c0_49], %132 {strides = array<i32>} : memref<8x128xf32, #tpu.memory_space<vmem>>, vector<8x128xf32>,
    return
  }
}

</mosaic_0001>

<llo_original>
// kernel: tpu_custom_call.1
$region0: #{tpu_custom_call.1}
  #allocation0 [shape = 'u32[]', space=smem, size = 0x4, offset = 0x4, fixed_abs, tag = 'smem constant byte address 0x4 - core index']
  #allocation1 [shape = 'u32[144,128]{1,0:T(1,128)}', space=vmem, size = 0x12000, scoped, tag = 'internal scratch']
  #allocation2 [shape = 'bf16[128,256]{1,0:T(8,128)(2,1)}', space=vmem, size = 0x10000, scoped, tag = 'scratch operand']
  #allocation3 [shape = 'bf16[256,512]{1,0:T(8,128)(2,1)}', space=vmem, size = 0x40000, scoped, tag = 'scratch operand']
  #allocation4 [shape = 'bf16[512,1024]{1,0:T(8,128)(2,1)}', space=vmem, size = 0x100000, scoped, tag = 'scratch operand']
  #allocation5 [shape = 'bf16[1024,128]{1,0:T(8,128)(2,1)}', space=vmem, size = 0x40000, scoped, tag = 'scratch operand']
  #allocation6 [shape = 's32[4]{0}', space=sflag, size = 0x10, scoped, tag = 'scratch operand']
  #allocation16 [shape = 's32[]', space=sflag, size = 0x4, offset = 0, fixed_abs, tag = 'sflag constant byte address 0x0 - dummy sync flag']
  #allocation17 [shape = 's32[]', space=sflag, size = 0x4, offset = 0, fixed_abs, tag = 'sflag constant byte address 0x0 - dummy sync flag']
  #allocation18 [shape = 'u32[]', space=smem, size = 0x4, offset = 0x44, fixed_abs, tag = 'smem constant byte address 0x44 - assertion arg 0']
  #allocation19 [shape = 'u32[]', space=smem, size = 0x4, offset = 0x48, fixed_abs, tag = 'smem constant byte address 0x48 - assertion arg 1']
  #allocation20 [shape = 's32[]', space=sflag, size = 0x4, offset = 0, fixed_abs, tag = 'sflag constant byte address 0x0 - dummy sync flag']
  #allocation21 [shape = 's32[]', space=sflag, size = 0x4, offset = 0, fixed_abs, tag = 'sflag constant byte address 0x0 - dummy sync flag']
  #allocation22 [shape = 's32[]', space=sflag, size = 0x4, offset = 0, fixed_abs, tag = 'sflag constant byte address 0x0 - dummy sync flag']
  #allocation23 [shape = 's32[]', space=sflag, size = 0x4, offset = 0, fixed_abs, tag = 'sflag constant byte address 0x0 - dummy sync flag']
  #allocation24 [shape = 's32[]', space=sflag, size = 0x4, offset = 0, fixed_abs, tag = 'sflag constant byte address 0x0 - dummy sync flag']
  #allocation25 [shape = 's32[]', space=sflag, size = 0x4, offset = 0, fixed_abs, tag = 'sflag constant byte address 0x0 - dummy sync flag']
  %s0 = inlined_call_operand.vmem [shape: s32[8,1], index: 0, kind: input, shape index: {}]
  %s1 = inlined_call_operand.hbm [shape: f32[8,32], index: 1, kind: input, shape index: {}]
  %s2 = inlined_call_operand.hbm [shape: f32[128,128], index: 2, kind: input, shape index: {}]
  %s3 = inlined_call_operand.hbm [shape: bf16[128,128], index: 3, kind: input, shape index: {}]
  %s4 = inlined_call_operand.vmem [shape: bf16[32,128], index: 4, kind: input, shape index: {}]
  %s5 = inlined_call_operand.hbm [shape: f32[8,1024], index: 5, kind: input, shape index: {}]
  %s6 = inlined_call_operand.hbm [shape: bf16[128,256], index: 6, kind: input, shape index: {}]
  %s7 = inlined_call_operand.hbm [shape: bf16[256,512], index: 7, kind: input, shape index: {}]
  %s8 = inlined_call_operand.hbm [shape: bf16[512,1024], index: 8, kind: input, shape index: {}]
  %s9 = inlined_call_operand.hbm [shape: bf16[1024,128], index: 9, kind: input, shape index: {}]
  %s10 = inlined_call_operand.hbm [shape: f32[8,128], index: 10, kind: output, shape index: {}]
  %s11 = sld [smem:[#allocation0]]
  $region66: #{tpu_custom_call.1} parent=0
    _
  %s13 = ssub.s32 1, %s11
  %s14 = scalar_select 0, %s13, %s11
  $region1: #{tpu_custom_call.1} parent=0
    #allocation7 [shape = 'u8[4096]{0}', space=vmem, size = 0x1000, scoped, tag = 'input window, operand 1, single buffered']
    #allocation8 [shape = 's32[1]{0}', space=sflag, size = 0x4, scoped, tag = 'scoped memory for tpu_custom_call.1']
    #allocation9 [shape = 's32[1]{0}', space=sflag, size = 0x4, scoped, tag = 'scoped memory for tpu_custom_call.1']
    #allocation10 [shape = 'u8[65536]{0}', space=vmem, size = 0x10000, scoped, tag = 'input window, operand 2, single buffered']
    #allocation11 [shape = 's32[1]{0}', space=sflag, size = 0x4, scoped, tag = 'scoped memory for tpu_custom_call.1']
    #allocation12 [shape = 'u8[32768]{0}', space=vmem, size = 0x8000, scoped, tag = 'input window, operand 3, single buffered']
    #allocation13 [shape = 'u8[32768]{0}', space=vmem, size = 0x8000, scoped, tag = 'input window, operand 5, single buffered']
    #allocation14 [shape = 's32[1]{0}', space=sflag, size = 0x4, scoped, tag = 'scoped memory for tpu_custom_call.1']
    #allocation15 [shape = 'u8[4096]{0}', space=vmem, size = 0x1000, scoped, tag = 'output window, operand 0, single buffered']
    %15 = vsyncpa [#allocation8], 0
    %16 = vsyncpa [#allocation11], 0
    %17 = vsyncpa [#allocation14], 0
    %18 = vsyncpa [#allocation9], 0
    // Predicated region
    $region2: #{tpu_custom_call.1} parent=1 // pred_check
      _
    $region3: #{tpu_custom_call.1} parent=1 // pred_check_branch
      %20 = sbr.rel (0) target = $region5
    $region4: #{tpu_custom_call.1} parent=1 // pred_region
      _
    $region5: #{tpu_custom_call.1} parent=1 // pred_fallthru
      _
    // Predicated region
    $region6: #{tpu_custom_call.1} parent=1 // pred_check
      _
    $region7: #{tpu_custom_call.1} parent=1 // pred_check_branch
      %22 = sbr.rel (0) target = $region9
    $region8: #{tpu_custom_call.1} parent=1 // pred_region
      %s24 = ssub.s32 128, 128
      %25 = vsyncadd [#allocation8], %s24
      %s27 = sshll.u32 [#allocation7], 4
      %s28 = int_to_ptr.vmem [resolvable:$true] %s27
      %30 = dma.hbm_to_vmem [thread:$0]  %s1, 128, %s28, [#allocation8]
    $region9: #{tpu_custom_call.1} parent=1 // pred_fallthru
      _
    // Predicated region
    $region10: #{tpu_custom_call.1} parent=1 // pred_check
      _
    $region11: #{tpu_custom_call.1} parent=1 // pred_check_branch
      %32 = sbr.rel (0) target = $region13
    $region12: #{tpu_custom_call.1} parent=1 // pred_region
      %s34 = ssub.s32 2048, 2048
      %35 = vsyncadd [#allocation11], %s34
      %s36 = sshll.u32 [#allocation10], 4
      %s37 = int_to_ptr.vmem [resolvable:$true] %s36
      %42 = dma.hbm_to_vmem [thread:$0]  %s2, 2048, %s37, [#allocation11], 128, 128, 8
    $region13: #{tpu_custom_call.1} parent=1 // pred_fallthru
      _
    // Predicated region
    $region14: #{tpu_custom_call.1} parent=1 // pred_check
      _
    $region15: #{tpu_custom_call.1} parent=1 // pred_check_branch
      %44 = sbr.rel (0) target = $region17
    $region16: #{tpu_custom_call.1} parent=1 // pred_region
      %s46 = ssub.s32 1024, 1024
      %47 = vsyncadd [#allocation11], %s46
      %s48 = sshll.u32 [#allocation12], 4
      %s49 = int_to_ptr.vmem [resolvable:$true] %s48
      %54 = dma.hbm_to_vmem [thread:$0]  %s3, 1024, %s49, [#allocation11], 64, 64, 4
    $region17: #{tpu_custom_call.1} parent=1 // pred_fallthru
      _
    // Predicated region
    $region18: #{tpu_custom_call.1} parent=1 // pred_check
      _
    $region19: #{tpu_custom_call.1} parent=1 // pred_check_branch
      %56 = sbr.rel (0) target = $region21
    $region20: #{tpu_custom_call.1} parent=1 // pred_region
      _
    $region21: #{tpu_custom_call.1} parent=1 // pred_fallthru
      _
    // Predicated region
    $region22: #{tpu_custom_call.1} parent=1 // pred_check
      _
    $region23: #{tpu_custom_call.1} parent=1 // pred_check_branch
      %58 = sbr.rel (0) target = $region25
    $region24: #{tpu_custom_call.1} parent=1 // pred_region
      %s60 = ssub.s32 1024, 1024
      %61 = vsyncadd [#allocation14], %s60
      %s63 = sshll.u32 [#allocation13], 4
      %s64 = int_to_ptr.vmem [resolvable:$true] %s63
      %66 = dma.hbm_to_vmem [thread:$0]  %s5, 1024, %s64, [#allocation14]
    $region25: #{tpu_custom_call.1} parent=1 // pred_fallthru
      _
    // Predicated region
    $region26: #{tpu_custom_call.1} parent=1 // pred_check
      _
    $region27: #{tpu_custom_call.1} parent=1 // pred_check_branch
      %68 = sbr.rel (0) target = $region29
    $region28: #{tpu_custom_call.1} parent=1 // pred_region
      %69 = dma.done [#allocation8], 128
    $region29: #{tpu_custom_call.1} parent=1 // pred_fallthru
      _
    // Predicated region
    $region30: #{tpu_custom_call.1} parent=1 // pred_check
      _
    $region31: #{tpu_custom_call.1} parent=1 // pred_check_branch
      %71 = sbr.rel (0) target = $region33
    $region32: #{tpu_custom_call.1} parent=1 // pred_region
      %72 = dma.done [#allocation11], 2048
    $region33: #{tpu_custom_call.1} parent=1 // pred_fallthru
      _
    // Predicated region
    $region34: #{tpu_custom_call.1} parent=1 // pred_check
      _
    $region35: #{tpu_custom_call.1} parent=1 // pred_check_branch
      %74 = sbr.rel (0) target = $region37
    $region36: #{tpu_custom_call.1} parent=1 // pred_region
      %75 = dma.done [#allocation11], 1024
    $region37: #{tpu_custom_call.1} parent=1 // pred_fallthru
      _
    // Predicated region
    $region38: #{tpu_custom_call.1} parent=1 // pred_check
      _
    $region39: #{tpu_custom_call.1} parent=1 // pred_check_branch
      %77 = sbr.rel (0) target = $region41
    $region40: #{tpu_custom_call.1} parent=1 // pred_region
      %78 = dma.done [#allocation14], 1024
    $region41: #{tpu_custom_call.1} parent=1 // pred_fallthru
      _
    // Predicated region
    $region42: #{tpu_custom_call.1} parent=1 // pred_check
      _
    $region43: #{tpu_custom_call.1} parent=1 // pred_check_branch
      %81 = sbr.rel target = $region45
    $region44: #{tpu_custom_call.1} parent=1 // pred_region
      %82 = sst [smem:[#allocation18]] [#allocation17]
      %83 = sst [smem:[#allocation19]] [#allocation16]
    $region45: #{tpu_custom_call.1} parent=1 // pred_fallthru
      _
    %85 = shalt.err (0)
    %s87 = sshll.u32 [#allocation2], 4
    %s88 = int_to_ptr.vmem [resolvable:$true] %s87
    %90 = dma.hbm_to_vmem [thread:$0]  %s6, 2048, %s88, [#allocation6]
    %s91 = scalar_lea.sflag [#allocation6], 1
    // Predicated region
    $region46: #{tpu_custom_call.1} parent=1 // pred_check
      _
    $region47: #{tpu_custom_call.1} parent=1 // pred_check_branch
      %93 = sbr.rel target = $region49
    $region48: #{tpu_custom_call.1} parent=1 // pred_region
      %94 = sst [smem:[#allocation18]] [#allocation21]
      %95 = sst [smem:[#allocation19]] [#allocation20]
    $region49: #{tpu_custom_call.1} parent=1 // pred_fallthru
      _
    %97 = shalt.err (0)
    %s99 = sshll.u32 [#allocation3], 4
    %s100 = int_to_ptr.vmem [resolvable:$true] %s99
    %102 = dma.hbm_to_vmem [thread:$0]  %s7, 8192, %s100, %s91
    %s103 = scalar_lea.sflag [#allocation6], 2
    // Predicated region
    $region50: #{tpu_custom_call.1} parent=1 // pred_check
      _
    $region51: #{tpu_custom_call.1} parent=1 // pred_check_branch
      %105 = sbr.rel target = $region53
    $region52: #{tpu_custom_call.1} parent=1 // pred_region
      %106 = sst [smem:[#allocation18]] [#allocation23]
      %107 = sst [smem:[#allocation19]] [#allocation22]
    $region53: #{tpu_custom_call.1} parent=1 // pred_fallthru
      _
    %109 = shalt.err (0)
    %s111 = sshll.u32 [#allocation4], 4
    %s112 = int_to_ptr.vmem [resolvable:$true] %s111
    %114 = dma.hbm_to_vmem [thread:$0]  %s8, 32768, %s112, %s103
    %s115 = scalar_lea.sflag [#allocation6], 3
    // Predicated region
    $region54: #{tpu_custom_call.1} parent=1 // pred_check
      _
    $region55: #{tpu_custom_call.1} parent=1 // pred_check_branch
      %117 = sbr.rel target = $region57
    $region56: #{tpu_custom_call.1} parent=1 // pred_region
      %118 = sst [smem:[#allocation18]] [#allocation25]
      %119 = sst [smem:[#allocation19]] [#allocation24]
    $region57: #{tpu_custom_call.1} parent=1 // pred_fallthru
      _
    %121 = shalt.err (0)
    %s123 = sshll.u32 [#allocation5], 4
    %s124 = int_to_ptr.vmem [resolvable:$true] %s123
    %126 = dma.hbm_to_vmem [thread:$0]  %s9, 8192, %s124, %s115
    %v127 = vld [vmem:[#allocation13] sm:$0xff]
    %v128 = vld [vmem:[#allocation13 + $0x8] sm:$0xff]
    %v129 = vld [vmem:[#allocation13 + $0x10] sm:$0xff]
    %v130 = vld [vmem:[#allocation13 + $0x18] sm:$0xff]
    %v131 = vld [vmem:[#allocation13 + $0x20] sm:$0xff]
    %v132 = vld [vmem:[#allocation13 + $0x28] sm:$0xff]
    %v133 = vld [vmem:[#allocation13 + $0x30] sm:$0xff]
    %v134 = vld [vmem:[#allocation13 + $0x38] sm:$0xff]
    %v135 = vlaneseq
    %v136 = vand.u32 %v135, 127
    %v137 = vld [vmem:[%s0] sm:$0xff]
    %138 = vset.pattern.permute.xlu0 0
    %139 = vperm.xlu0 %138, %v137
    %v140 = vpop.permute.xlu0 %139
    %vm141 = vcmp.eq.s32.totalorder %v136, %v140
    %v142 = vsel %vm141, 1, 0
    %v143 = vcvt.s32.f32 %v142
    %v144 = vld [vmem:[#allocation10] sm:$0xff]
    %v145 = vld [vmem:[#allocation10 + $0x8] sm:$0xff]
    %v146 = vld [vmem:[#allocation10 + $0x10] sm:$0xff]
    %v147 = vld [vmem:[#allocation10 + $0x18] sm:$0xff]
    %v148 = vld [vmem:[#allocation10 + $0x20] sm:$0xff]
    %v149 = vld [vmem:[#allocation10 + $0x28] sm:$0xff]
    %v150 = vld [vmem:[#allocation10 + $0x30] sm:$0xff]
    %v151 = vld [vmem:[#allocation10 + $0x38] sm:$0xff]
    %v152 = vld [vmem:[#allocation10 + $0x40] sm:$0xff]
    %v153 = vld [vmem:[#allocation10 + $0x48] sm:$0xff]
    %v154 = vld [vmem:[#allocation10 + $0x50] sm:$0xff]
    %v155 = vld [vmem:[#allocation10 + $0x58] sm:$0xff]
    %v156 = vld [vmem:[#allocation10 + $0x60] sm:$0xff]
    %v157 = vld [vmem:[#allocation10 + $0x68] sm:$0xff]
    %v158 = vld [vmem:[#allocation10 + $0x70] sm:$0xff]
    %v159 = vld [vmem:[#allocation10 + $0x78] sm:$0xff]
    %160 = vmatprep.subr.mxu0 0.0
    %161 = vmatpush1.msra.mxu0 %v159
    %162 = vmatprep.subr.mxu0 0.0
    %163 = vmatpush1.msra.mxu0 %v158
    %164 = vmatprep.subr.mxu0 0.0
    %165 = vmatpush1.msra.mxu0 %v157
    %166 = vmatprep.subr.mxu0 0.0
    %167 = vmatpush1.msra.mxu0 %v156
    %168 = vmatprep.subr.mxu0 0.0
    %169 = vmatpush1.msra.mxu0 %v155
    %170 = vmatprep.subr.mxu0 0.0
    %171 = vmatpush1.msra.mxu0 %v154
    %172 = vmatprep.subr.mxu0 0.0
    %173 = vmatpush1.msra.mxu0 %v153
    %174 = vmatprep.subr.mxu0 0.0
    %175 = vmatpush1.msra.mxu0 %v152
    %176 = vmatprep.subr.mxu0 0.0
    %177 = vmatpush1.msra.mxu0 %v151
    %178 = vmatprep.subr.mxu0 0.0
    %179 = vmatpush1.msra.mxu0 %v150
    %180 = vmatprep.subr.mxu0 0.0
    %181 = vmatpush1.msra.mxu0 %v149
    %182 = vmatprep.subr.mxu0 0.0
    %183 = vmatpush1.msra.mxu0 %v148
    %184 = vmatprep.subr.mxu0 0.0
    %185 = vmatpush1.msra.mxu0 %v147
    %186 = vmatprep.subr.mxu0 0.0
    %187 = vmatpush1.msra.mxu0 %v146
    %188 = vmatprep.subr.mxu0 0.0
    %189 = vmatpush1.msra.mxu0 %v145
    %190 = vmatprep.subr.mxu0 0.0
    %191 = vmatpush1.msra.mxu0 %v144
    %192 = vmatprep.subr.mxu0 0.0
    %193 = vmatpush2.msra.mxu0 0.0
    %194 = vmatprep.subr.mxu0 0.0
    %195 = vmatpush2.msra.mxu0 0.0
    %196 = vmatprep.subr.mxu0 0.0
    %197 = vmatpush2.msra.mxu0 0.0
    %198 = vmatprep.subr.mxu0 0.0
    %199 = vmatpush2.msra.mxu0 0.0
    %200 = vmatprep.subr.mxu0 0.0
    %201 = vmatpush2.msra.mxu0 0.0
    %202 = vmatprep.subr.mxu0 0.0
    %203 = vmatpush2.msra.mxu0 0.0
    %204 = vmatprep.subr.mxu0 0.0
    %205 = vmatpush2.msra.mxu0 0.0
    %206 = vmatprep.subr.mxu0 0.0
    %207 = vmatpush2.msra.mxu0 0.0
    %208 = vmatprep.subr.mxu0 0.0
    %209 = vmatpush2.msra.mxu0 0.0
    %210 = vmatprep.subr.mxu0 0.0
    %211 = vmatpush2.msra.mxu0 0.0
    %212 = vmatprep.subr.mxu0 0.0
    %213 = vmatpush2.msra.mxu0 0.0
    %214 = vmatprep.subr.mxu0 0.0
    %215 = vmatpush2.msra.mxu0 0.0
    %216 = vmatprep.subr.mxu0 0.0
    %217 = vmatpush2.msra.mxu0 0.0
    %218 = vmatprep.subr.mxu0 0.0
    %219 = vmatpush2.msra.mxu0 0.0
    %220 = vmatprep.subr.mxu0 0.0
    %221 = vmatpush2.msra.mxu0 0.0
    %222 = vmatprep.subr.mxu0 0.0
    %223 = vmatpush2.msra.mxu0 0.0
    %224 = vmatprep.mubr.f32.mxu0 0.0
    %225 = vmatmul.mubr.f32.gmra.mxu0 %v143
    %v226 = vpop.f32.mrf.mxu0
    %v227 = vadd.f32 0.0, %v226
    %v228 = vpop.f32.mrf.mxu0
    %229 = vdwg.mxu0
    %v230 = vpack.c.bf16 %v227, %v227
    %v231 = vld [vmem:[#allocation12] sm:$0xf]
    %v232 = vld [vmem:[#allocation12 + $0x4] sm:$0xf]
    %v233 = vld [vmem:[#allocation12 + $0x8] sm:$0xf]
    %v234 = vld [vmem:[#allocation12 + $0xc] sm:$0xf]
    %v235 = vld [vmem:[#allocation12 + $0x10] sm:$0xf]
    %v236 = vld [vmem:[#allocation12 + $0x14] sm:$0xf]
    %v237 = vld [vmem:[#allocation12 + $0x18] sm:$0xf]
    %v238 = vld [vmem:[#allocation12 + $0x1c] sm:$0xf]
    %v239 = vld [vmem:[#allocation12 + $0x20] sm:$0xf]
    %v240 = vld [vmem:[#allocation12 + $0x24] sm:$0xf]
    %v241 = vld [vmem:[#allocation12 + $0x28] sm:$0xf]
    %v242 = vld [vmem:[#allocation12 + $0x2c] sm:$0xf]
    %v243 = vld [vmem:[#allocation12 + $0x30] sm:$0xf]
    %v244 = vld [vmem:[#allocation12 + $0x34] sm:$0xf]
    %v245 = vld [vmem:[#allocation12 + $0x38] sm:$0xf]
    %v246 = vld [vmem:[#allocation12 + $0x3c] sm:$0xf]
    %v247 = vld [vmem:[#allocation7] sm:$0xff]
    %v248 = vpack.c.bf16 %v247, %v247
    %v249 = vld [vmem:[%s4] sm:$0xf]
    %v250 = vld [vmem:[%s4 + $0x4] sm:$0xf]
    %v251 = vld [vmem:[%s4 + $0x8] sm:$0xf]
    %v252 = vld [vmem:[%s4 + $0xc] sm:$0xf]
    %v257 = vunpack.c.l.b16 %v249
    %v258 = vunpack.c.l.b16 %v250
    %v259 = vunpack.c.l.b16 %v251
    %v260 = vunpack.c.l.b16 %v252
    %v261 = vpack.c.b16 %v258, %v257
    %v262 = vpack.c.b16 %v260, %v259
    %vm265 = vcmask 261120
    %v267 = vsel %vm265, %v248, 0
    %269 = vmatprep.subr.bf16.mxu0 0
    %270 = vmatpush1.bf16.msra.mxu0 0
    %271 = vmatprep.subr.bf16.mxu0 0
    %272 = vmatpush1.bf16.msra.mxu0 0
    %273 = vmatprep.subr.bf16.mxu0 0
    %274 = vmatpush1.bf16.msra.mxu0 0
    %275 = vmatprep.subr.bf16.mxu0 0
    %276 = vmatpush1.bf16.msra.mxu0 0
    %277 = vmatprep.subr.bf16.mxu0 0
    %278 = vmatpush1.bf16.msra.mxu0 0
    %279 = vmatprep.subr.bf16.mxu0 0
    %280 = vmatpush1.bf16.msra.mxu0 0
    %281 = vmatprep.subr.bf16.mxu0 0
    %282 = vmatpush1.bf16.msra.mxu0 %v262
    %283 = vmatprep.subr.bf16.mxu0 0
    %284 = vmatpush1.bf16.msra.mxu0 %v261
    %285 = vmatprep.subr.bf16.mxu0 0
    %286 = vmatpush2.bf16.msra.mxu0 0
    %287 = vmatprep.subr.bf16.mxu0 0
    %288 = vmatpush2.bf16.msra.mxu0 0
    %289 = vmatprep.subr.bf16.mxu0 0
    %290 = vmatpush2.bf16.msra.mxu0 0
    %291 = vmatprep.subr.bf16.mxu0 0
    %292 = vmatpush2.bf16.msra.mxu0 0
    %293 = vmatprep.subr.bf16.mxu0 0
    %294 = vmatpush2.bf16.msra.mxu0 0
    %295 = vmatprep.subr.bf16.mxu0 0
    %296 = vmatpush2.bf16.msra.mxu0 0
    %297 = vmatprep.subr.bf16.mxu0 0
    %298 = vmatpush2.bf16.msra.mxu0 0
    %299 = vmatprep.subr.bf16.mxu0 0
    %300 = vmatpush2.bf16.msra.mxu0 0
    %301 = vmatprep.mubr.bf16.mxu0 0
    %302 = vmatmul.mubr.bf16.gmra.mxu0 %v267
    %v303 = vpop.f32.mrf.mxu0
    %v304 = vadd.f32 0.0, %v303
    %v305 = vpop.f32.mrf.mxu0
    %v306 = vpop.f32.mrf.mxu0
    %v307 = vpop.f32.mrf.mxu0
    %308 = vdwg.mxu0
    %v325 = vunpack.c.l.b16 %v231
    %v326 = vunpack.c.l.b16 %v232
    %v327 = vunpack.c.l.b16 %v233
    %v328 = vunpack.c.l.b16 %v234
    %v329 = vunpack.c.l.b16 %v235
    %v330 = vunpack.c.l.b16 %v236
    %v331 = vunpack.c.l.b16 %v237
    %v332 = vunpack.c.l.b16 %v238
    %v333 = vunpack.c.l.b16 %v239
    %v334 = vunpack.c.l.b16 %v240
    %v335 = vunpack.c.l.b16 %v241
    %v336 = vunpack.c.l.b16 %v242
    %v337 = vunpack.c.l.b16 %v243
    %v338 = vunpack.c.l.b16 %v244
    %v339 = vunpack.c.l.b16 %v245
    %v340 = vunpack.c.l.b16 %v246
    %v341 = vpack.c.b16 %v326, %v325
    %v342 = vpack.c.b16 %v328, %v327
    %v343 = vpack.c.b16 %v330, %v329
    %v344 = vpack.c.b16 %v332, %v331
    %v345 = vpack.c.b16 %v334, %v333
    %v346 = vpack.c.b16 %v336, %v335
    %v347 = vpack.c.b16 %v338, %v337
    %v348 = vpack.c.b16 %v340, %v339
    %357 = vmatprep.subr.bf16.mxu0 0
    %358 = vmatpush1.bf16.msra.mxu0 %v348
    %359 = vmatprep.subr.bf16.mxu0 0
    %360 = vmatpush1.bf16.msra.mxu0 %v347
    %361 = vmatprep.subr.bf16.mxu0 0
    %362 = vmatpush1.bf16.msra.mxu0 %v346
    %363 = vmatprep.subr.bf16.mxu0 0
    %364 = vmatpush1.bf16.msra.mxu0 %v345
    %365 = vmatprep.subr.bf16.mxu0 0
    %366 = vmatpush1.bf16.msra.mxu0 %v344
    %367 = vmatprep.subr.bf16.mxu0 0
    %368 = vmatpush1.bf16.msra.mxu0 %v343
    %369 = vmatprep.subr.bf16.mxu0 0
    %370 = vmatpush1.bf16.msra.mxu0 %v342
    %371 = vmatprep.subr.bf16.mxu0 0
    %372 = vmatpush1.bf16.msra.mxu0 %v341
    %373 = vmatprep.subr.bf16.mxu0 0
    %374 = vmatpush2.bf16.msra.mxu0 0
    %375 = vmatprep.subr.bf16.mxu0 0
    %376 = vmatpush2.bf16.msra.mxu0 0
    %377 = vmatprep.subr.bf16.mxu0 0
    %378 = vmatpush2.bf16.msra.mxu0 0
    %379 = vmatprep.subr.bf16.mxu0 0
    %380 = vmatpush2.bf16.msra.mxu0 0
    %381 = vmatprep.subr.bf16.mxu0 0
    %382 = vmatpush2.bf16.msra.mxu0 0
    %383 = vmatprep.subr.bf16.mxu0 0
    %384 = vmatpush2.bf16.msra.mxu0 0
    %385 = vmatprep.subr.bf16.mxu0 0
    %386 = vmatpush2.bf16.msra.mxu0 0
    %387 = vmatprep.subr.bf16.mxu0 0
    %388 = vmatpush2.bf16.msra.mxu0 0
    %389 = vmatprep.mubr.bf16.mxu0 0
    %390 = vmatmul.mubr.bf16.gmra.mxu0 %v230
    %v391 = vpop.f32.mrf.mxu0
    %v392 = vadd.f32 %v304, %v391
    %v393 = vpop.f32.mrf.mxu0
    %v394 = vpop.f32.mrf.mxu0
    %v395 = vpop.f32.mrf.mxu0
    %396 = vdwg.mxu0
    %v397 = vlaneseq
    %v398 = vshrl.u32 %v397, 7
    %v399 = vsub.s32 0, %v398
    %v400 = vrot.slane %v127, %v399
    %v401 = vadd.f32 %v392, %v400
    %v402 = vmul.f32 %v401, 0.2
    %v403 = vmax.f32 %v401, %v402
    %v404 = vpack.c.bf16 %v403, %v403
    %s405 = smul.u32 4, 16
    %s406 = smul.u32 %s405, 2
    %s407 = sshll.u32 %s406, 4
    %408 = dma.done [#allocation6], %s407
    %v409 = vld [vmem:[#allocation2] sm:$0xff]
    %v410 = vld [vmem:[#allocation2 + $0x8] sm:$0xff]
    %v411 = vld [vmem:[#allocation2 + $0x10] sm:$0xff]
    %v412 = vld [vmem:[#allocation2 + $0x18] sm:$0xff]
    %v413 = vld [vmem:[#allocation2 + $0x20] sm:$0xff]
    %v414 = vld [vmem:[#allocation2 + $0x28] sm:$0xff]
    %v415 = vld [vmem:[#allocation2 + $0x30] sm:$0xff]
    %v416 = vld [vmem:[#allocation2 + $0x38] sm:$0xff]
    %v417 = vld [vmem:[#allocation2 + $0x40] sm:$0xff]
    %v418 = vld [vmem:[#allocation2 + $0x48] sm:$0xff]
    %v419 = vld [vmem:[#allocation2 + $0x50] sm:$0xff]
    %v420 = vld [vmem:[#allocation2 + $0x58] sm:$0xff]
    %v421 = vld [vmem:[#allocation2 + $0x60] sm:$0xff]
    %v422 = vld [vmem:[#allocation2 + $0x68] sm:$0xff]
    %v423 = vld [vmem:[#allocation2 + $0x70] sm:$0xff]
    %v424 = vld [vmem:[#allocation2 + $0x78] sm:$0xff]
    %v441 = vunpack.c.l.b16 %v409
    %v442 = vunpack.c.h.b16 %v409
    %v443 = vunpack.c.l.b16 %v410
    %v444 = vunpack.c.h.b16 %v410
    %v445 = vunpack.c.l.b16 %v411
    %v446 = vunpack.c.h.b16 %v411
    %v447 = vunpack.c.l.b16 %v412
    %v448 = vunpack.c.h.b16 %v412
    %v449 = vunpack.c.l.b16 %v413
    %v450 = vunpack.c.h.b16 %v413
    %v451 = vunpack.c.l.b16 %v414
    %v452 = vunpack.c.h.b16 %v414
    %v453 = vunpack.c.l.b16 %v415
    %v454 = vunpack.c.h.b16 %v415
    %v455 = vunpack.c.l.b16 %v416
    %v456 = vunpack.c.h.b16 %v416
    %v457 = vunpack.c.l.b16 %v417
    %v458 = vunpack.c.h.b16 %v417
    %v459 = vunpack.c.l.b16 %v418
    %v460 = vunpack.c.h.b16 %v418
    %v461 = vunpack.c.l.b16 %v419
    %v462 = vunpack.c.h.b16 %v419
    %v463 = vunpack.c.l.b16 %v420
    %v464 = vunpack.c.h.b16 %v420
    %v465 = vunpack.c.l.b16 %v421
    %v466 = vunpack.c.h.b16 %v421
    %v467 = vunpack.c.l.b16 %v422
    %v468 = vunpack.c.h.b16 %v422
    %v469 = vunpack.c.l.b16 %v423
    %v470 = vunpack.c.h.b16 %v423
    %v471 = vunpack.c.l.b16 %v424
    %v472 = vunpack.c.h.b16 %v424
    %v473 = vpack.c.b16 %v443, %v441
    %v474 = vpack.c.b16 %v444, %v442
    %v475 = vpack.c.b16 %v447, %v445
    %v476 = vpack.c.b16 %v448, %v446
    %v477 = vpack.c.b16 %v451, %v449
    %v478 = vpack.c.b16 %v452, %v450
    %v479 = vpack.c.b16 %v455, %v453
    %v480 = vpack.c.b16 %v456, %v454
    %v481 = vpack.c.b16 %v459, %v457
    %v482 = vpack.c.b16 %v460, %v458
    %v483 = vpack.c.b16 %v463, %v461
    %v484 = vpack.c.b16 %v464, %v462
    %v485 = vpack.c.b16 %v467, %v465
    %v486 = vpack.c.b16 %v468, %v466
    %v487 = vpack.c.b16 %v471, %v469
    %v488 = vpack.c.b16 %v472, %v470
    %505 = vmatprep.subr.bf16.mxu0 %v488
    %506 = vmatpush1.bf16.msra.mxu0 %v487
    %507 = vmatprep.subr.bf16.mxu0 %v486
    %508 = vmatpush1.bf16.msra.mxu0 %v485
    %509 = vmatprep.subr.bf16.mxu0 %v484
    %510 = vmatpush1.bf16.msra.mxu0 %v483
    %511 = vmatprep.subr.bf16.mxu0 %v482
    %512 = vmatpush1.bf16.msra.mxu0 %v481
    %513 = vmatprep.subr.bf16.mxu0 %v480
    %514 = vmatpush1.bf16.msra.mxu0 %v479
    %515 = vmatprep.subr.bf16.mxu0 %v478
    %516 = vmatpush1.bf16.msra.mxu0 %v477
    %517 = vmatprep.subr.bf16.mxu0 %v476
    %518 = vmatpush1.bf16.msra.mxu0 %v475
    %519 = vmatprep.subr.bf16.mxu0 %v474
    %520 = vmatpush1.bf16.msra.mxu0 %v473
    %521 = vmatprep.subr.bf16.mxu0 0
    %522 = vmatpush2.bf16.msra.mxu0 0
    %523 = vmatprep.subr.bf16.mxu0 0
    %524 = vmatpush2.bf16.msra.mxu0 0
    %525 = vmatprep.subr.bf16.mxu0 0
    %526 = vmatpush2.bf16.msra.mxu0 0
    %527 = vmatprep.subr.bf16.mxu0 0
    %528 = vmatpush2.bf16.msra.mxu0 0
    %529 = vmatprep.subr.bf16.mxu0 0
    %530 = vmatpush2.bf16.msra.mxu0 0
    %531 = vmatprep.subr.bf16.mxu0 0
    %532 = vmatpush2.bf16.msra.mxu0 0
    %533 = vmatprep.subr.bf16.mxu0 0
    %534 = vmatpush2.bf16.msra.mxu0 0
    %535 = vmatprep.subr.bf16.mxu0 0
    %536 = vmatpush2.bf16.msra.mxu0 0
    %537 = vmatprep.mubr.bf16.mxu0 0
    %538 = vmatmul.mubr.bf16.gmra.mxu0 %v404
    %v539 = vpop.f32.mrf.mxu0
    %v540 = vadd.f32 0.0, %v539
    %v541 = vpop.f32.mrf.mxu0
    %v542 = vadd.f32 0.0, %v541
    %v543 = vpop.f32.mrf.mxu0
    %v544 = vpop.f32.mrf.mxu0
    %545 = vdwg.mxu0
    %v546 = vrot.slane %v540, 4
    %v547 = vadd.f32 %v540, %v546
    %v548 = vrot.slane %v547, 2
    %v549 = vadd.f32 %v547, %v548
    %v550 = vrot.slane %v549, 1
    %v551 = vadd.f32 %v549, %v550
    %v552 = vrot.slane %v542, 4
    %v553 = vadd.f32 %v542, %v552
    %v554 = vrot.slane %v553, 2
    %v555 = vadd.f32 %v553, %v554
    %v556 = vrot.slane %v555, 1
    %v557 = vadd.f32 %v555, %v556
    %v558 = vrcp.pop 8.0
    %v559 = vmul.f32 %v551, %v558
    %v560 = vmul.f32 %v557, %v558
    %v561 = vmul.f32 %v540, %v540
    %v562 = vmul.f32 %v542, %v542
    %v563 = vrot.slane %v561, 4
    %v564 = vadd.f32 %v561, %v563
    %v565 = vrot.slane %v564, 2
    %v566 = vadd.f32 %v564, %v565
    %v567 = vrot.slane %v566, 1
    %v568 = vadd.f32 %v566, %v567
    %v569 = vrot.slane %v562, 4
    %v570 = vadd.f32 %v562, %v569
    %v571 = vrot.slane %v570, 2
    %v572 = vadd.f32 %v570, %v571
    %v573 = vrot.slane %v572, 1
    %v574 = vadd.f32 %v572, %v573
    %v575 = vmul.f32 %v568, %v558
    %v576 = vmul.f32 %v574, %v558
    %v577 = vmul.f32 %v559, %v559
    %v578 = vmul.f32 %v560, %v560
    %v579 = vsub.f32 %v575, %v577
    %v580 = vsub.f32 %v576, %v578
    %v581 = vadd.f32 %v579, 0.8
    %v582 = vadd.f32 %v580, 0.8
    %v583 = vrsqrt.pop %v581
    %v584 = vrsqrt.pop %v582
    %v585 = vmul.f32 %v127, %v583
    %v586 = vmul.f32 %v128, %v584
    %v587 = vmul.f32 %v585, %v559
    %v588 = vmul.f32 %v586, %v560
    %v591 = vrot.slane %v587, 7
    %v592 = vrot.slane %v588, 7
    %v595 = vsub.f32 %v127, %v591
    %v596 = vsub.f32 %v128, %v592
    %v597 = vlaneseq
    %v598 = vshrl.u32 %v597, 7
    %v599 = vsub.s32 1, %v598
    %v600 = vrot.slane %v585, %v599
    %v601 = vlaneseq
    %v602 = vshrl.u32 %v601, 7
    %v603 = vsub.s32 1, %v602
    %v604 = vrot.slane %v586, %v603
    %v605 = vmul.f32 %v540, %v600
    %v606 = vmul.f32 %v542, %v604
    %v607 = vlaneseq
    %v608 = vshrl.u32 %v607, 7
    %v609 = vsub.s32 2, %v608
    %v610 = vrot.slane %v595, %v609
    %v611 = vlaneseq
    %v612 = vshrl.u32 %v611, 7
    %v613 = vsub.s32 2, %v612
    %v614 = vrot.slane %v596, %v613
    %v615 = vadd.f32 %v605, %v610
    %v616 = vadd.f32 %v606, %v614
    %v617 = vmul.f32 %v615, 0.2
    %v618 = vmul.f32 %v616, 0.2
    %v619 = vmax.f32 %v615, %v617
    %v620 = vmax.f32 %v616, %v618
    %v621 = vpack.c.bf16 %v619, %v619
    %v622 = vpack.c.bf16 %v620, %v620
    %s623 = smul.u32 4, 32
    %s624 = smul.u32 %s623, 4
    %s625 = sshll.u32 %s624, 4
    %626 = dma.done %s91, %s625
    %v627 = vld [vmem:[#allocation3] sm:$0xff]
    %v628 = vld [vmem:[#allocation3 + $0x8] sm:$0xff]
    %v629 = vld [vmem:[#allocation3 + $0x10] sm:$0xff]
    %v630 = vld [vmem:[#allocation3 + $0x18] sm:$0xff]
    %v631 = vld [vmem:[#allocation3 + $0x20] sm:$0xff]
    %v632 = vld [vmem:[#allocation3 + $0x28] sm:$0xff]
    %v633 = vld [vmem:[#allocation3 + $0x30] sm:$0xff]
    %v634 = vld [vmem:[#allocation3 + $0x38] sm:$0xff]
    %v635 = vld [vmem:[#allocation3 + $0x40] sm:$0xff]
    %v636 = vld [vmem:[#allocation3 + $0x48] sm:$0xff]
    %v637 = vld [vmem:[#allocation3 + $0x50] sm:$0xff]
    %v638 = vld [vmem:[#allocation3 + $0x58] sm:$0xff]
    %v639 = vld [vmem:[#allocation3 + $0x60] sm:$0xff]
    %v640 = vld [vmem:[#allocation3 + $0x68] sm:$0xff]
    %v641 = vld [vmem:[#allocation3 + $0x70] sm:$0xff]
    %v642 = vld [vmem:[#allocation3 + $0x78] sm:$0xff]
    %v643 = vld [vmem:[#allocation3 + $0x80] sm:$0xff]
    %v644 = vld [vmem:[#allocation3 + $0x88] sm:$0xff]
    %v645 = vld [vmem:[#allocation3 + $0x90] sm:$0xff]
    %v646 = vld [vmem:[#allocation3 + $0x98] sm:$0xff]
    %v647 = vld [vmem:[#allocation3 + $0xa0] sm:$0xff]
    %v648 = vld [vmem:[#allocation3 + $0xa8] sm:$0xff]
    %v649 = vld [vmem:[#allocation3 + $0xb0] sm:$0xff]
    %v650 = vld [vmem:[#allocation3 + $0xb8] sm:$0xff]
    %v651 = vld [vmem:[#allocation3 + $0xc0] sm:$0xff]
    %v652 = vld [vmem:[#allocation3 + $0xc8] sm:$0xff]
    %v653 = vld [vmem:[#allocation3 + $0xd0] sm:$0xff]
    %v654 = vld [vmem:[#allocation3 + $0xd8] sm:$0xff]
    %v655 = vld [vmem:[#allocation3 + $0xe0] sm:$0xff]
    %v656 = vld [vmem:[#allocation3 + $0xe8] sm:$0xff]
    %v657 = vld [vmem:[#allocation3 + $0xf0] sm:$0xff]
    %v658 = vld [vmem:[#allocation3 + $0xf8] sm:$0xff]
    %v659 = vld [vmem:[#allocation3 + $0x100] sm:$0xff]
    %v660 = vld [vmem:[#allocation3 + $0x108] sm:$0xff]
    %v661 = vld [vmem:[#allocation3 + $0x110] sm:$0xff]
    %v662 = vld [vmem:[#allocation3 + $0x118] sm:$0xff]
    %v663 = vld [vmem:[#allocation3 + $0x120] sm:$0xff]
    %v664 = vld [vmem:[#allocation3 + $0x128] sm:$0xff]
    %v665 = vld [vmem:[#allocation3 + $0x130] sm:$0xff]
    %v666 = vld [vmem:[#allocation3 + $0x138] sm:$0xff]
    %v667 = vld [vmem:[#allocation3 + $0x140] sm:$0xff]
    %v668 = vld [vmem:[#allocation3 + $0x148] sm:$0xff]
    %v669 = vld [vmem:[#allocation3 + $0x150] sm:$0xff]
    %v670 = vld [vmem:[#allocation3 + $0x158] sm:$0xff]
    %v671 = vld [vmem:[#allocation3 + $0x160] sm:$0xff]
    %v672 = vld [vmem:[#allocation3 + $0x168] sm:$0xff]
    %v673 = vld [vmem:[#allocation3 + $0x170] sm:$0xff]
    %v674 = vld [vmem:[#allocation3 + $0x178] sm:$0xff]
    %v675 = vld [vmem:[#allocation3 + $0x180] sm:$0xff]
    %v676 = vld [vmem:[#allocation3 + $0x188] sm:$0xff]
    %v677 = vld [vmem:[#allocation3 + $0x190] sm:$0xff]
    %v678 = vld [vmem:[#allocation3 + $0x198] sm:$0xff]
    %v679 = vld [vmem:[#allocation3 + $0x1a0] sm:$0xff]
    %v680 = vld [vmem:[#allocation3 + $0x1a8] sm:$0xff]
    %v681 = vld [vmem:[#allocation3 + $0x1b0] sm:$0xff]
    %v682 = vld [vmem:[#allocation3 + $0x1b8] sm:$0xff]
    %v683 = vld [vmem:[#allocation3 + $0x1c0] sm:$0xff]
    %v684 = vld [vmem:[#allocation3 + $0x1c8] sm:$0xff]
    %v685 = vld [vmem:[#allocation3 + $0x1d0] sm:$0xff]
    %v686 = vld [vmem:[#allocation3 + $0x1d8] sm:$0xff]
    %v687 = vld [vmem:[#allocation3 + $0x1e0] sm:$0xff]
    %v688 = vld [vmem:[#allocation3 + $0x1e8] sm:$0xff]
    %v689 = vld [vmem:[#allocation3 + $0x1f0] sm:$0xff]
    %v690 = vld [vmem:[#allocation3 + $0x1f8] sm:$0xff]
    %v755 = vunpack.c.l.b16 %v627
    %v756 = vunpack.c.h.b16 %v627
    %v757 = vunpack.c.l.b16 %v628
    %v758 = vunpack.c.h.b16 %v628
    %v759 = vunpack.c.l.b16 %v629
    %v760 = vunpack.c.h.b16 %v629
    %v761 = vunpack.c.l.b16 %v630
    %v762 = vunpack.c.h.b16 %v630
    %v763 = vunpack.c.l.b16 %v631
    %v764 = vunpack.c.h.b16 %v631
    %v765 = vunpack.c.l.b16 %v632
    %v766 = vunpack.c.h.b16 %v632
    %v767 = vunpack.c.l.b16 %v633
    %v768 = vunpack.c.h.b16 %v633
    %v769 = vunpack.c.l.b16 %v634
    %v770 = vunpack.c.h.b16 %v634
    %v771 = vunpack.c.l.b16 %v635
    %v772 = vunpack.c.h.b16 %v635
    %v773 = vunpack.c.l.b16 %v636
    %v774 = vunpack.c.h.b16 %v636
    %v775 = vunpack.c.l.b16 %v637
    %v776 = vunpack.c.h.b16 %v637
    %v777 = vunpack.c.l.b16 %v638
    %v778 = vunpack.c.h.b16 %v638
    %v779 = vunpack.c.l.b16 %v639
    %v780 = vunpack.c.h.b16 %v639
    %v781 = vunpack.c.l.b16 %v640
    %v782 = vunpack.c.h.b16 %v640
    %v783 = vunpack.c.l.b16 %v641
    %v784 = vunpack.c.h.b16 %v641
    %v785 = vunpack.c.l.b16 %v642
    %v786 = vunpack.c.h.b16 %v642
    %v787 = vunpack.c.l.b16 %v643
    %v788 = vunpack.c.h.b16 %v643
    %v789 = vunpack.c.l.b16 %v644
    %v790 = vunpack.c.h.b16 %v644
    %v791 = vunpack.c.l.b16 %v645
    %v792 = vunpack.c.h.b16 %v645
    %v793 = vunpack.c.l.b16 %v646
    %v794 = vunpack.c.h.b16 %v646
    %v795 = vunpack.c.l.b16 %v647
    %v796 = vunpack.c.h.b16 %v647
    %v797 = vunpack.c.l.b16 %v648
    %v798 = vunpack.c.h.b16 %v648
    %v799 = vunpack.c.l.b16 %v649
    %v800 = vunpack.c.h.b16 %v649
    %v801 = vunpack.c.l.b16 %v650
    %v802 = vunpack.c.h.b16 %v650
    %v803 = vunpack.c.l.b16 %v651
    %v804 = vunpack.c.h.b16 %v651
    %v805 = vunpack.c.l.b16 %v652
    %v806 = vunpack.c.h.b16 %v652
    %v807 = vunpack.c.l.b16 %v653
    %v808 = vunpack.c.h.b16 %v653
    %v809 = vunpack.c.l.b16 %v654
    %v810 = vunpack.c.h.b16 %v654
    %v811 = vunpack.c.l.b16 %v655
    %v812 = vunpack.c.h.b16 %v655
    %v813 = vunpack.c.l.b16 %v656
    %v814 = vunpack.c.h.b16 %v656
    %v815 = vunpack.c.l.b16 %v657
    %v816 = vunpack.c.h.b16 %v657
    %v817 = vunpack.c.l.b16 %v658
    %v818 = vunpack.c.h.b16 %v658
    %v819 = vunpack.c.l.b16 %v659
    %v820 = vunpack.c.h.b16 %v659
    %v821 = vunpack.c.l.b16 %v660
    %v822 = vunpack.c.h.b16 %v660
    %v823 = vunpack.c.l.b16 %v661
    %v824 = vunpack.c.h.b16 %v661
    %v825 = vunpack.c.l.b16 %v662
    %v826 = vunpack.c.h.b16 %v662
    %v827 = vunpack.c.l.b16 %v663
    %v828 = vunpack.c.h.b16 %v663
    %v829 = vunpack.c.l.b16 %v664
    %v830 = vunpack.c.h.b16 %v664
    %v831 = vunpack.c.l.b16 %v665
    %v832 = vunpack.c.h.b16 %v665
    %v833 = vunpack.c.l.b16 %v666
    %v834 = vunpack.c.h.b16 %v666
    %v835 = vunpack.c.l.b16 %v667
    %v836 = vunpack.c.h.b16 %v667
    %v837 = vunpack.c.l.b16 %v668
    %v838 = vunpack.c.h.b16 %v668
    %v839 = vunpack.c.l.b16 %v669
    %v840 = vunpack.c.h.b16 %v669
    %v841 = vunpack.c.l.b16 %v670
    %v842 = vunpack.c.h.b16 %v670
    %v843 = vunpack.c.l.b16 %v671
    %v844 = vunpack.c.h.b16 %v671
    %v845 = vunpack.c.l.b16 %v672
    %v846 = vunpack.c.h.b16 %v672
    %v847 = vunpack.c.l.b16 %v673
    %v848 = vunpack.c.h.b16 %v673
    %v849 = vunpack.c.l.b16 %v674
    %v850 = vunpack.c.h.b16 %v674
    %v851 = vunpack.c.l.b16 %v675
    %v852 = vunpack.c.h.b16 %v675
    %v853 = vunpack.c.l.b16 %v676
    %v854 = vunpack.c.h.b16 %v676
    %v855 = vunpack.c.l.b16 %v677
    %v856 = vunpack.c.h.b16 %v677
    %v857 = vunpack.c.l.b16 %v678
    %v858 = vunpack.c.h.b16 %v678
    %v859 = vunpack.c.l.b16 %v679
    %v860 = vunpack.c.h.b16 %v679
    %v861 = vunpack.c.l.b16 %v680
    %v862 = vunpack.c.h.b16 %v680
    %v863 = vunpack.c.l.b16 %v681
    %v864 = vunpack.c.h.b16 %v681
    %v865 = vunpack.c.l.b16 %v682
    %v866 = vunpack.c.h.b16 %v682
    %v867 = vunpack.c.l.b16 %v683
    %v868 = vunpack.c.h.b16 %v683
    %v869 = vunpack.c.l.b16 %v684
    %v870 = vunpack.c.h.b16 %v684
    %v871 = vunpack.c.l.b16 %v685
    %v872 = vunpack.c.h.b16 %v685
    %v873 = vunpack.c.l.b16 %v686
    %v874 = vunpack.c.h.b16 %v686
    %v875 = vunpack.c.l.b16 %v687
    %v876 = vunpack.c.h.b16 %v687
    %v877 = vunpack.c.l.b16 %v688
    %v878 = vunpack.c.h.b16 %v688
    %v879 = vunpack.c.l.b16 %v689
    %v880 = vunpack.c.h.b16 %v689
    %v881 = vunpack.c.l.b16 %v690
    %v882 = vunpack.c.h.b16 %v690
    %v883 = vpack.c.b16 %v759, %v755
    %v884 = vpack.c.b16 %v760, %v756
    %v885 = vpack.c.b16 %v761, %v757
    %v886 = vpack.c.b16 %v762, %v758
    %v887 = vpack.c.b16 %v767, %v763
    %v888 = vpack.c.b16 %v768, %v764
    %v889 = vpack.c.b16 %v769, %v765
    %v890 = vpack.c.b16 %v770, %v766
    %v891 = vpack.c.b16 %v775, %v771
    %v892 = vpack.c.b16 %v776, %v772
    %v893 = vpack.c.b16 %v777, %v773
    %v894 = vpack.c.b16 %v778, %v774
    %v895 = vpack.c.b16 %v783, %v779
    %v896 = vpack.c.b16 %v784, %v780
    %v897 = vpack.c.b16 %v785, %v781
    %v898 = vpack.c.b16 %v786, %v782
    %v899 = vpack.c.b16 %v791, %v787
    %v900 = vpack.c.b16 %v792, %v788
    %v901 = vpack.c.b16 %v793, %v789
    %v902 = vpack.c.b16 %v794, %v790
    %v903 = vpack.c.b16 %v799, %v795
    %v904 = vpack.c.b16 %v800, %v796
    %v905 = vpack.c.b16 %v801, %v797
    %v906 = vpack.c.b16 %v802, %v798
    %v907 = vpack.c.b16 %v807, %v803
    %v908 = vpack.c.b16 %v808, %v804
    %v909 = vpack.c.b16 %v809, %v805
    %v910 = vpack.c.b16 %v810, %v806
    %v911 = vpack.c.b16 %v815, %v811
    %v912 = vpack.c.b16 %v816, %v812
    %v913 = vpack.c.b16 %v817, %v813
    %v914 = vpack.c.b16 %v818, %v814
    %v915 = vpack.c.b16 %v823, %v819
    %v916 = vpack.c.b16 %v824, %v820
    %v917 = vpack.c.b16 %v825, %v821
    %v918 = vpack.c.b16 %v826, %v822
    %v919 = vpack.c.b16 %v831, %v827
    %v920 = vpack.c.b16 %v832, %v828
    %v921 = vpack.c.b16 %v833, %v829
    %v922 = vpack.c.b16 %v834, %v830
    %v923 = vpack.c.b16 %v839, %v835
    %v924 = vpack.c.b16 %v840, %v836
    %v925 = vpack.c.b16 %v841, %v837
    %v926 = vpack.c.b16 %v842, %v838
    %v927 = vpack.c.b16 %v847, %v843
    %v928 = vpack.c.b16 %v848, %v844
    %v929 = vpack.c.b16 %v849, %v845
    %v930 = vpack.c.b16 %v850, %v846
    %v931 = vpack.c.b16 %v855, %v851
    %v932 = vpack.c.b16 %v856, %v852
    %v933 = vpack.c.b16 %v857, %v853
    %v934 = vpack.c.b16 %v858, %v854
    %v935 = vpack.c.b16 %v863, %v859
    %v936 = vpack.c.b16 %v864, %v860
    %v937 = vpack.c.b16 %v865, %v861
    %v938 = vpack.c.b16 %v866, %v862
    %v939 = vpack.c.b16 %v871, %v867
    %v940 = vpack.c.b16 %v872, %v868
    %v941 = vpack.c.b16 %v873, %v869
    %v942 = vpack.c.b16 %v874, %v870
    %v943 = vpack.c.b16 %v879, %v875
    %v944 = vpack.c.b16 %v880, %v876
    %v945 = vpack.c.b16 %v881, %v877
    %v946 = vpack.c.b16 %v882, %v878
    %1011 = vmatprep.subr.bf16.mxu0 %v912
    %1012 = vmatpush1.bf16.msra.mxu0 %v911
    %1013 = vmatprep.subr.bf16.mxu0 %v908
    %1014 = vmatpush1.bf16.msra.mxu0 %v907
    %1015 = vmatprep.subr.bf16.mxu0 %v904
    %1016 = vmatpush1.bf16.msra.mxu0 %v903
    %1017 = vmatprep.subr.bf16.mxu0 %v900
    %1018 = vmatpush1.bf16.msra.mxu0 %v899
    %1019 = vmatprep.subr.bf16.mxu0 %v896
    %1020 = vmatpush1.bf16.msra.mxu0 %v895
    %1021 = vmatprep.subr.bf16.mxu0 %v892
    %1022 = vmatpush1.bf16.msra.mxu0 %v891
    %1023 = vmatprep.subr.bf16.mxu0 %v888
    %1024 = vmatpush1.bf16.msra.mxu0 %v887
    %1025 = vmatprep.subr.bf16.mxu0 %v884
    %1026 = vmatpush1.bf16.msra.mxu0 %v883
    %1027 = vmatprep.subr.bf16.mxu0 %v944
    %1028 = vmatpush2.bf16.msra.mxu0 %v943
    %1029 = vmatprep.subr.bf16.mxu0 %v940
    %1030 = vmatpush2.bf16.msra.mxu0 %v939
    %1031 = vmatprep.subr.bf16.mxu0 %v936
    %1032 = vmatpush2.bf16.msra.mxu0 %v935
    %1033 = vmatprep.subr.bf16.mxu0 %v932
    %1034 = vmatpush2.bf16.msra.mxu0 %v931
    %1035 = vmatprep.subr.bf16.mxu0 %v928
    %1036 = vmatpush2.bf16.msra.mxu0 %v927
    %1037 = vmatprep.subr.bf16.mxu0 %v924
    %1038 = vmatpush2.bf16.msra.mxu0 %v923
    %1039 = vmatprep.subr.bf16.mxu0 %v920
    %1040 = vmatpush2.bf16.msra.mxu0 %v919
    %1041 = vmatprep.subr.bf16.mxu0 %v916
    %1042 = vmatpush2.bf16.msra.mxu0 %v915
    %1043 = vmatprep.mubr.bf16.mxu0 %v622
    %1044 = vmatmul.mubr.bf16.gmra.mxu0 %v621
    %v1045 = vpop.f32.mrf.mxu0
    %v1046 = vadd.f32 0.0, %v1045
    %v1047 = vpop.f32.mrf.mxu0
    %v1048 = vadd.f32 0.0, %v1047
    %v1049 = vpop.f32.mrf.mxu0
    %v1050 = vpop.f32.mrf.mxu0
    %1051 = vdwg.mxu0
    %1052 = vmatprep.subr.bf16.mxu0 %v914
    %1053 = vmatpush1.bf16.msra.mxu0 %v913
    %1054 = vmatprep.subr.bf16.mxu0 %v910
    %1055 = vmatpush1.bf16.msra.mxu0 %v909
    %1056 = vmatprep.subr.bf16.mxu0 %v906
    %1057 = vmatpush1.bf16.msra.mxu0 %v905
    %1058 = vmatprep.subr.bf16.mxu0 %v902
    %1059 = vmatpush1.bf16.msra.mxu0 %v901
    %1060 = vmatprep.subr.bf16.mxu0 %v898
    %1061 = vmatpush1.bf16.msra.mxu0 %v897
    %1062 = vmatprep.subr.bf16.mxu0 %v894
    %1063 = vmatpush1.bf16.msra.mxu0 %v893
    %1064 = vmatprep.subr.bf16.mxu0 %v890
    %1065 = vmatpush1.bf16.msra.mxu0 %v889
    %1066 = vmatprep.subr.bf16.mxu0 %v886
    %1067 = vmatpush1.bf16.msra.mxu0 %v885
    %1068 = vmatprep.subr.bf16.mxu0 %v946
    %1069 = vmatpush2.bf16.msra.mxu0 %v945
    %1070 = vmatprep.subr.bf16.mxu0 %v942
    %1071 = vmatpush2.bf16.msra.mxu0 %v941
    %1072 = vmatprep.subr.bf16.mxu0 %v938
    %1073 = vmatpush2.bf16.msra.mxu0 %v937
    %1074 = vmatprep.subr.bf16.mxu0 %v934
    %1075 = vmatpush2.bf16.msra.mxu0 %v933
    %1076 = vmatprep.subr.bf16.mxu0 %v930
    %1077 = vmatpush2.bf16.msra.mxu0 %v929
    %1078 = vmatprep.subr.bf16.mxu0 %v926
    %1079 = vmatpush2.bf16.msra.mxu0 %v925
    %1080 = vmatprep.subr.bf16.mxu0 %v922
    %1081 = vmatpush2.bf16.msra.mxu0 %v921
    %1082 = vmatprep.subr.bf16.mxu0 %v918
    %1083 = vmatpush2.bf16.msra.mxu0 %v917
    %1084 = vmatprep.mubr.bf16.mxu0 %v622
    %1085 = vmatmul.mubr.bf16.gmra.mxu0 %v621
    %v1086 = vpop.f32.mrf.mxu0
    %v1087 = vadd.f32 0.0, %v1086
    %v1088 = vpop.f32.mrf.mxu0
    %v1089 = vadd.f32 0.0, %v1088
    %v1090 = vpop.f32.mrf.mxu0
    %v1091 = vpop.f32.mrf.mxu0
    %1092 = vdwg.mxu0
    %v1093 = vrot.slane %v1046, 4
    %v1094 = vadd.f32 %v1046, %v1093
    %v1095 = vrot.slane %v1094, 2
    %v1096 = vadd.f32 %v1094, %v1095
    %v1097 = vrot.slane %v1096, 1
    %v1098 = vadd.f32 %v1096, %v1097
    %v1099 = vrot.slane %v1048, 4
    %v1100 = vadd.f32 %v1048, %v1099
    %v1101 = vrot.slane %v1100, 2
    %v1102 = vadd.f32 %v1100, %v1101
    %v1103 = vrot.slane %v1102, 1
    %v1104 = vadd.f32 %v1102, %v1103
    %v1105 = vrot.slane %v1087, 4
    %v1106 = vadd.f32 %v1087, %v1105
    %v1107 = vrot.slane %v1106, 2
    %v1108 = vadd.f32 %v1106, %v1107
    %v1109 = vrot.slane %v1108, 1
    %v1110 = vadd.f32 %v1108, %v1109
    %v1111 = vrot.slane %v1089, 4
    %v1112 = vadd.f32 %v1089, %v1111
    %v1113 = vrot.slane %v1112, 2
    %v1114 = vadd.f32 %v1112, %v1113
    %v1115 = vrot.slane %v1114, 1
    %v1116 = vadd.f32 %v1114, %v1115
    %v1117 = vmul.f32 %v1098, %v558
    %v1118 = vmul.f32 %v1104, %v558
    %v1119 = vmul.f32 %v1110, %v558
    %v1120 = vmul.f32 %v1116, %v558
    %v1121 = vmul.f32 %v1046, %v1046
    %v1122 = vmul.f32 %v1048, %v1048
    %v1123 = vmul.f32 %v1087, %v1087
    %v1124 = vmul.f32 %v1089, %v1089
    %v1125 = vrot.slane %v1121, 4
    %v1126 = vadd.f32 %v1121, %v1125
    %v1127 = vrot.slane %v1126, 2
    %v1128 = vadd.f32 %v1126, %v1127
    %v1129 = vrot.slane %v1128, 1
    %v1130 = vadd.f32 %v1128, %v1129
    %v1131 = vrot.slane %v1122, 4
    %v1132 = vadd.f32 %v1122, %v1131
    %v1133 = vrot.slane %v1132, 2
    %v1134 = vadd.f32 %v1132, %v1133
    %v1135 = vrot.slane %v1134, 1
    %v1136 = vadd.f32 %v1134, %v1135
    %v1137 = vrot.slane %v1123, 4
    %v1138 = vadd.f32 %v1123, %v1137
    %v1139 = vrot.slane %v1138, 2
    %v1140 = vadd.f32 %v1138, %v1139
    %v1141 = vrot.slane %v1140, 1
    %v1142 = vadd.f32 %v1140, %v1141
    %v1143 = vrot.slane %v1124, 4
    %v1144 = vadd.f32 %v1124, %v1143
    %v1145 = vrot.slane %v1144, 2
    %v1146 = vadd.f32 %v1144, %v1145
    %v1147 = vrot.slane %v1146, 1
    %v1148 = vadd.f32 %v1146, %v1147
    %v1149 = vmul.f32 %v1130, %v558
    %v1150 = vmul.f32 %v1136, %v558
    %v1151 = vmul.f32 %v1142, %v558
    %v1152 = vmul.f32 %v1148, %v558
    %v1153 = vmul.f32 %v1117, %v1117
    %v1154 = vmul.f32 %v1118, %v1118
    %v1155 = vmul.f32 %v1119, %v1119
    %v1156 = vmul.f32 %v1120, %v1120
    %v1157 = vsub.f32 %v1149, %v1153
    %v1158 = vsub.f32 %v1150, %v1154
    %v1159 = vsub.f32 %v1151, %v1155
    %v1160 = vsub.f32 %v1152, %v1156
    %v1161 = vadd.f32 %v1157, 0.8
    %v1162 = vadd.f32 %v1158, 0.8
    %v1163 = vadd.f32 %v1159, 0.8
    %v1164 = vadd.f32 %v1160, 0.8
    %v1165 = vrsqrt.pop %v1161
    %v1166 = vrsqrt.pop %v1162
    %v1167 = vrsqrt.pop %v1163
    %v1168 = vrsqrt.pop %v1164
    %v1169 = vmul.f32 %v127, %v1165
    %v1170 = vmul.f32 %v128, %v1166
    %v1171 = vmul.f32 %v129, %v1167
    %v1172 = vmul.f32 %v130, %v1168
    %v1173 = vmul.f32 %v1169, %v1117
    %v1174 = vmul.f32 %v1170, %v1118
    %v1175 = vmul.f32 %v1171, %v1119
    %v1176 = vmul.f32 %v1172, %v1120
    %v1181 = vrot.slane %v1173, 7
    %v1182 = vrot.slane %v1174, 7
    %v1183 = vrot.slane %v1175, 7
    %v1184 = vrot.slane %v1176, 7
    %v1189 = vsub.f32 %v127, %v1181
    %v1190 = vsub.f32 %v128, %v1182
    %v1191 = vsub.f32 %v129, %v1183
    %v1192 = vsub.f32 %v130, %v1184
    %v1193 = vlaneseq
    %v1194 = vshrl.u32 %v1193, 7
    %v1195 = vsub.s32 3, %v1194
    %v1196 = vrot.slane %v1169, %v1195
    %v1197 = vlaneseq
    %v1198 = vshrl.u32 %v1197, 7
    %v1199 = vsub.s32 3, %v1198
    %v1200 = vrot.slane %v1170, %v1199
    %v1201 = vlaneseq
    %v1202 = vshrl.u32 %v1201, 7
    %v1203 = vsub.s32 3, %v1202
    %v1204 = vrot.slane %v1171, %v1203
    %v1205 = vlaneseq
    %v1206 = vshrl.u32 %v1205, 7
    %v1207 = vsub.s32 3, %v1206
    %v1208 = vrot.slane %v1172, %v1207
    %v1209 = vmul.f32 %v1046, %v1196
    %v1210 = vmul.f32 %v1048, %v1200
    %v1211 = vmul.f32 %v1087, %v1204
    %v1212 = vmul.f32 %v1089, %v1208
    %v1213 = vlaneseq
    %v1214 = vshrl.u32 %v1213, 7
    %v1215 = vsub.s32 4, %v1214
    %v1216 = vrot.slane %v1189, %v1215
    %v1217 = vlaneseq
    %v1218 = vshrl.u32 %v1217, 7
    %v1219 = vsub.s32 4, %v1218
    %v1220 = vrot.slane %v1190, %v1219
    %v1221 = vlaneseq
    %v1222 = vshrl.u32 %v1221, 7
    %v1223 = vsub.s32 4, %v1222
    %v1224 = vrot.slane %v1191, %v1223
    %v1225 = vlaneseq
    %v1226 = vshrl.u32 %v1225, 7
    %v1227 = vsub.s32 4, %v1226
    %v1228 = vrot.slane %v1192, %v1227
    %v1229 = vadd.f32 %v1209, %v1216
    %v1230 = vadd.f32 %v1210, %v1220
    %v1231 = vadd.f32 %v1211, %v1224
    %v1232 = vadd.f32 %v1212, %v1228
    %v1233 = vmul.f32 %v1229, 0.2
    %v1234 = vmul.f32 %v1230, 0.2
    %v1235 = vmul.f32 %v1231, 0.2
    %v1236 = vmul.f32 %v1232, 0.2
    %v1237 = vmax.f32 %v1229, %v1233
    %v1238 = vmax.f32 %v1230, %v1234
    %v1239 = vmax.f32 %v1231, %v1235
    %v1240 = vmax.f32 %v1232, %v1236
    %v1241 = vpack.c.bf16 %v1237, %v1237
    %v1242 = vpack.c.bf16 %v1238, %v1238
    %v1243 = vpack.c.bf16 %v1239, %v1239
    %v1244 = vpack.c.bf16 %v1240, %v1240
    %s1245 = smul.u32 4, 64
    %s1246 = smul.u32 %s1245, 8
    %s1247 = sshll.u32 %s1246, 4
    %1248 = dma.done %s103, %s1247
    %v1249 = vld [vmem:[#allocation4] sm:$0xff]
    %v1250 = vld [vmem:[#allocation4 + $0x8] sm:$0xff]
    %v1251 = vld [vmem:[#allocation4 + $0x10] sm:$0xff]
    %v1252 = vld [vmem:[#allocation4 + $0x18] sm:$0xff]
    %v1253 = vld [vmem:[#allocation4 + $0x20] sm:$0xff]
    %v1254 = vld [vmem:[#allocation4 + $0x28] sm:$0xff]
    %v1255 = vld [vmem:[#allocation4 + $0x30] sm:$0xff]
    %v1256 = vld [vmem:[#allocation4 + $0x38] sm:$0xff]
    %v1257 = vld [vmem:[#allocation4 + $0x40] sm:$0xff]
    %v1258 = vld [vmem:[#allocation4 + $0x48] sm:$0xff]
    %v1259 = vld [vmem:[#allocation4 + $0x50] sm:$0xff]
    %v1260 = vld [vmem:[#allocation4 + $0x58] sm:$0xff]
    %v1261 = vld [vmem:[#allocation4 + $0x60] sm:$0xff]
    %v1262 = vld [vmem:[#allocation4 + $0x68] sm:$0xff]
    %v1263 = vld [vmem:[#allocation4 + $0x70] sm:$0xff]
    %v1264 = vld [vmem:[#allocation4 + $0x78] sm:$0xff]
    %v1265 = vld [vmem:[#allocation4 + $0x80] sm:$0xff]
    %v1266 = vld [vmem:[#allocation4 + $0x88] sm:$0xff]
    %v1267 = vld [vmem:[#allocation4 + $0x90] sm:$0xff]
    %v1268 = vld [vmem:[#allocation4 + $0x98] sm:$0xff]
    %v1269 = vld [vmem:[#allocation4 + $0xa0] sm:$0xff]
    %v1270 = vld [vmem:[#allocation4 + $0xa8] sm:$0xff]
    %v1271 = vld [vmem:[#allocation4 + $0xb0] sm:$0xff]
    %v1272 = vld [vmem:[#allocation4 + $0xb8] sm:$0xff]
    %v1273 = vld [vmem:[#allocation4 + $0xc0] sm:$0xff]
    %v1274 = vld [vmem:[#allocation4 + $0xc8] sm:$0xff]
    %v1275 = vld [vmem:[#allocation4 + $0xd0] sm:$0xff]
    %v1276 = vld [vmem:[#allocation4 + $0xd8] sm:$0xff]
    %v1277 = vld [vmem:[#allocation4 + $0xe0] sm:$0xff]
    %v1278 = vld [vmem:[#allocation4 + $0xe8] sm:$0xff]
    %v1279 = vld [vmem:[#allocation4 + $0xf0] sm:$0xff]
    %v1280 = vld [vmem:[#allocation4 + $0xf8] sm:$0xff]
    %v1281 = vld [vmem:[#allocation4 + $0x100] sm:$0xff]
    %v1282 = vld [vmem:[#allocation4 + $0x108] sm:$0xff]
    %v1283 = vld [vmem:[#allocation4 + $0x110] sm:$0xff]
    %v1284 = vld [vmem:[#allocation4 + $0x118] sm:$0xff]
    %v1285 = vld [vmem:[#allocation4 + $0x120] sm:$0xff]
    %v1286 = vld [vmem:[#allocation4 + $0x128] sm:$0xff]
    %v1287 = vld [vmem:[#allocation4 + $0x130] sm:$0xff]
    %v1288 = vld [vmem:[#allocation4 + $0x138] sm:$0xff]
    %v1289 = vld [vmem:[#allocation4 + $0x140] sm:$0xff]
    %v1290 = vld [vmem:[#allocation4 + $0x148] sm:$0xff]
    %v1291 = vld [vmem:[#allocation4 + $0x150] sm:$0xff]
    %v1292 = vld [vmem:[#allocation4 + $0x158] sm:$0xff]
    %v1293 = vld [vmem:[#allocation4 + $0x160] sm:$0xff]
    %v1294 = vld [vmem:[#allocation4 + $0x168] sm:$0xff]
    %v1295 = vld [vmem:[#allocation4 + $0x170] sm:$0xff]
    %v1296 = vld [vmem:[#allocation4 + $0x178] sm:$0xff]
    %v1297 = vld [vmem:[#allocation4 + $0x180] sm:$0xff]
    %v1298 = vld [vmem:[#allocation4 + $0x188] sm:$0xff]
    %v1299 = vld [vmem:[#allocation4 + $0x190] sm:$0xff]
    %v1300 = vld [vmem:[#allocation4 + $0x198] sm:$0xff]
    %v1301 = vld [vmem:[#allocation4 + $0x1a0] sm:$0xff]
    %v1302 = vld [vmem:[#allocation4 + $0x1a8] sm:$0xff]
    %v1303 = vld [vmem:[#allocation4 + $0x1b0] sm:$0xff]
    %v1304 = vld [vmem:[#allocation4 + $0x1b8] sm:$0xff]
    %v1305 = vld [vmem:[#allocation4 + $0x1c0] sm:$0xff]
    %v1306 = vld [vmem:[#allocation4 + $0x1c8] sm:$0xff]
    %v1307 = vld [vmem:[#allocation4 + $0x1d0] sm:$0xff]
    %v1308 = vld [vmem:[#allocation4 + $0x1d8] sm:$0xff]
    %v1309 = vld [vmem:[#allocation4 + $0x1e0] sm:$0xff]
    %v1310 = vld [vmem:[#allocation4 + $0x1e8] sm:$0xff]
    %v1311 = vld [vmem:[#allocation4 + $0x1f0] sm:$0xff]
    %v1312 = vld [vmem:[#allocation4 + $0x1f8] sm:$0xff]
    %v1313 = vld [vmem:[#allocation4 + $0x200] sm:$0xff]
    %v1314 = vld [vmem:[#allocation4 + $0x208] sm:$0xff]
    %v1315 = vld [vmem:[#allocation4 + $0x210] sm:$0xff]
    %v1316 = vld [vmem:[#allocation4 + $0x218] sm:$0xff]
    %v1317 = vld [vmem:[#allocation4 + $0x220] sm:$0xff]
    %v1318 = vld [vmem:[#allocation4 + $0x228] sm:$0xff]
    %v1319 = vld [vmem:[#allocation4 + $0x230] sm:$0xff]
    %v1320 = vld [vmem:[#allocation4 + $0x238] sm:$0xff]
    %v1321 = vld [vmem:[#allocation4 + $0x240] sm:$0xff]
    %v1322 = vld [vmem:[#allocation4 + $0x248] sm:$0xff]
    %v1323 = vld [vmem:[#allocation4 + $0x250] sm:$0xff]
    %v1324 = vld [vmem:[#allocation4 + $0x258] sm:$0xff]
    %v1325 = vld [vmem:[#allocation4 + $0x260] sm:$0xff]
    %v1326 = vld [vmem:[#allocation4 + $0x268] sm:$0xff]
    %v1327 = vld [vmem:[#allocation4 + $0x270] sm:$0xff]
    %v1328 = vld [vmem:[#allocation4 + $0x278] sm:$0xff]
    %v1329 = vld [vmem:[#allocation4 + $0x280] sm:$0xff]
    %v1330 = vld [vmem:[#allocation4 + $0x288] sm:$0xff]
    %v1331 = vld [vmem:[#allocation4 + $0x290] sm:$0xff]
    %v1332 = vld [vmem:[#allocation4 + $0x298] sm:$0xff]
    %v1333 = vld [vmem:[#allocation4 + $0x2a0] sm:$0xff]
    %v1334 = vld [vmem:[#allocation4 + $0x2a8] sm:$0xff]
    %v1335 = vld [vmem:[#allocation4 + $0x2b0] sm:$0xff]
    %v1336 = vld [vmem:[#allocation4 + $0x2b8] sm:$0xff]
    %v1337 = vld [vmem:[#allocation4 + $0x2c0] sm:$0xff]
    %v1338 = vld [vmem:[#allocation4 + $0x2c8] sm:$0xff]
    %v1339 = vld [vmem:[#allocation4 + $0x2d0] sm:$0xff]
    %v1340 = vld [vmem:[#allocation4 + $0x2d8] sm:$0xff]
    %v1341 = vld [vmem:[#allocation4 + $0x2e0] sm:$0xff]
    %v1342 = vld [vmem:[#allocation4 + $0x2e8] sm:$0xff]
    %v1343 = vld [vmem:[#allocation4 + $0x2f0] sm:$0xff]
    %v1344 = vld [vmem:[#allocation4 + $0x2f8] sm:$0xff]
    %v1345 = vld [vmem:[#allocation4 + $0x300] sm:$0xff]
    %v1346 = vld [vmem:[#allocation4 + $0x308] sm:$0xff]
    %v1347 = vld [vmem:[#allocation4 + $0x310] sm:$0xff]
    %v1348 = vld [vmem:[#allocation4 + $0x318] sm:$0xff]
    %v1349 = vld [vmem:[#allocation4 + $0x320] sm:$0xff]
    %v1350 = vld [vmem:[#allocation4 + $0x328] sm:$0xff]
    %v1351 = vld [vmem:[#allocation4 + $0x330] sm:$0xff]
    %v1352 = vld [vmem:[#allocation4 + $0x338] sm:$0xff]
    %v1353 = vld [vmem:[#allocation4 + $0x340] sm:$0xff]
    %v1354 = vld [vmem:[#allocation4 + $0x348] sm:$0xff]
    %v1355 = vld [vmem:[#allocation4 + $0x350] sm:$0xff]
    %v1356 = vld [vmem:[#allocation4 + $0x358] sm:$0xff]
    %v1357 = vld [vmem:[#allocation4 + $0x360] sm:$0xff]
    %v1358 = vld [vmem:[#allocation4 + $0x368] sm:$0xff]
    %v1359 = vld [vmem:[#allocation4 + $0x370] sm:$0xff]
    %v1360 = vld [vmem:[#allocation4 + $0x378] sm:$0xff]
    %v1361 = vld [vmem:[#allocation4 + $0x380] sm:$0xff]
    %v1362 = vld [vmem:[#allocation4 + $0x388] sm:$0xff]
    %v1363 = vld [vmem:[#allocation4 + $0x390] sm:$0xff]
    %v1364 = vld [vmem:[#allocation4 + $0x398] sm:$0xff]
    %v1365 = vld [vmem:[#allocation4 + $0x3a0] sm:$0xff]
    %v1366 = vld [vmem:[#allocation4 + $0x3a8] sm:$0xff]
    %v1367 = vld [vmem:[#allocation4 + $0x3b0] sm:$0xff]
    %v1368 = vld [vmem:[#allocation4 + $0x3b8] sm:$0xff]
    %v1369 = vld [vmem:[#allocation4 + $0x3c0] sm:$0xff]
    %v1370 = vld [vmem:[#allocation4 + $0x3c8] sm:$0xff]
    %v1371 = vld [vmem:[#allocation4 + $0x3d0] sm:$0xff]
    %v1372 = vld [vmem:[#allocation4 + $0x3d8] sm:$0xff]
    %v1373 = vld [vmem:[#allocation4 + $0x3e0] sm:$0xff]
    %v1374 = vld [vmem:[#allocation4 + $0x3e8] sm:$0xff]
    %v1375 = vld [vmem:[#allocation4 + $0x3f0] sm:$0xff]
    %v1376 = vld [vmem:[#allocation4 + $0x3f8] sm:$0xff]
    %v1377 = vld [vmem:[#allocation4 + $0x400] sm:$0xff]
    %v1378 = vld [vmem:[#allocation4 + $0x408] sm:$0xff]
    %v1379 = vld [vmem:[#allocation4 + $0x410] sm:$0xff]
    %v1380 = vld [vmem:[#allocation4 + $0x418] sm:$0xff]
    %v1381 = vld [vmem:[#allocation4 + $0x420] sm:$0xff]
    %v1382 = vld [vmem:[#allocation4 + $0x428] sm:$0xff]
    %v1383 = vld [vmem:[#allocation4 + $0x430] sm:$0xff]
    %v1384 = vld [vmem:[#allocation4 + $0x438] sm:$0xff]
    %v1385 = vld [vmem:[#allocation4 + $0x440] sm:$0xff]
    %v1386 = vld [vmem:[#allocation4 + $0x448] sm:$0xff]
    %v1387 = vld [vmem:[#allocation4 + $0x450] sm:$0xff]
    %v1388 = vld [vmem:[#allocation4 + $0x458] sm:$0xff]
    %v1389 = vld [vmem:[#allocation4 + $0x460] sm:$0xff]
    %v1390 = vld [vmem:[#allocation4 + $0x468] sm:$0xff]
    %v1391 = vld [vmem:[#allocation4 + $0x470] sm:$0xff]
    %v1392 = vld [vmem:[#allocation4 + $0x478] sm:$0xff]
    %v1393 = vld [vmem:[#allocation4 + $0x480] sm:$0xff]
    %v1394 = vld [vmem:[#allocation4 + $0x488] sm:$0xff]
    %v1395 = vld [vmem:[#allocation4 + $0x490] sm:$0xff]
    %v1396 = vld [vmem:[#allocation4 + $0x498] sm:$0xff]
    %v1397 = vld [vmem:[#allocation4 + $0x4a0] sm:$0xff]
    %v1398 = vld [vmem:[#allocation4 + $0x4a8] sm:$0xff]
    %v1399 = vld [vmem:[#allocation4 + $0x4b0] sm:$0xff]
    %v1400 = vld [vmem:[#allocation4 + $0x4b8] sm:$0xff]
    %v1401 = vld [vmem:[#allocation4 + $0x4c0] sm:$0xff]
    %v1402 = vld [vmem:[#allocation4 + $0x4c8] sm:$0xff]
    %v1403 = vld [vmem:[#allocation4 + $0x4d0] sm:$0xff]
    %v1404 = vld [vmem:[#allocation4 + $0x4d8] sm:$0xff]
    %v1405 = vld [vmem:[#allocation4 + $0x4e0] sm:$0xff]
    %v1406 = vld [vmem:[#allocation4 + $0x4e8] sm:$0xff]
    %v1407 = vld [vmem:[#allocation4 + $0x4f0] sm:$0xff]
    %v1408 = vld [vmem:[#allocation4 + $0x4f8] sm:$0xff]
    %v1409 = vld [vmem:[#allocation4 + $0x500] sm:$0xff]
    %v1410 = vld [vmem:[#allocation4 + $0x508] sm:$0xff]
    %v1411 = vld [vmem:[#allocation4 + $0x510] sm:$0xff]
    %v1412 = vld [vmem:[#allocation4 + $0x518] sm:$0xff]
    %v1413 = vld [vmem:[#allocation4 + $0x520] sm:$0xff]
    %v1414 = vld [vmem:[#allocation4 + $0x528] sm:$0xff]
    %v1415 = vld [vmem:[#allocation4 + $0x530] sm:$0xff]
    %v1416 = vld [vmem:[#allocation4 + $0x538] sm:$0xff]
    %v1417 = vld [vmem:[#allocation4 + $0x540] sm:$0xff]
    %v1418 = vld [vmem:[#allocation4 + $0x548] sm:$0xff]
    %v1419 = vld [vmem:[#allocation4 + $0x550] sm:$0xff]
    %v1420 = vld [vmem:[#allocation4 + $0x558] sm:$0xff]
    %v1421 = vld [vmem:[#allocation4 + $0x560] sm:$0xff]
    %v1422 = vld [vmem:[#allocation4 + $0x568] sm:$0xff]
    %v1423 = vld [vmem:[#allocation4 + $0x570] sm:$0xff]
    %v1424 = vld [vmem:[#allocation4 + $0x578] sm:$0xff]
    %v1425 = vld [vmem:[#allocation4 + $0x580] sm:$0xff]
    %v1426 = vld [vmem:[#allocation4 + $0x588] sm:$0xff]
    %v1427 = vld [vmem:[#allocation4 + $0x590] sm:$0xff]
    %v1428 = vld [vmem:[#allocation4 + $0x598] sm:$0xff]
    %v1429 = vld [vmem:[#allocation4 + $0x5a0] sm:$0xff]
    %v1430 = vld [vmem:[#allocation4 + $0x5a8] sm:$0xff]
    %v1431 = vld [vmem:[#allocation4 + $0x5b0] sm:$0xff]
    %v1432 = vld [vmem:[#allocation4 + $0x5b8] sm:$0xff]
    %v1433 = vld [vmem:[#allocation4 + $0x5c0] sm:$0xff]
    %v1434 = vld [vmem:[#allocation4 + $0x5c8] sm:$0xff]
    %v1435 = vld [vmem:[#allocation4 + $0x5d0] sm:$0xff]
    %v1436 = vld [vmem:[#allocation4 + $0x5d8] sm:$0xff]
    %v1437 = vld [vmem:[#allocation4 + $0x5e0] sm:$0xff]
    %v1438 = vld [vmem:[#allocation4 + $0x5e8] sm:$0xff]
    %v1439 = vld [vmem:[#allocation4 + $0x5f0] sm:$0xff]
    %v1440 = vld [vmem:[#allocation4 + $0x5f8] sm:$0xff]
    %v1441 = vld [vmem:[#allocation4 + $0x600] sm:$0xff]
    %v1442 = vld [vmem:[#allocation4 + $0x608] sm:$0xff]
    %v1443 = vld [vmem:[#allocation4 + $0x610] sm:$0xff]
    %v1444 = vld [vmem:[#allocation4 + $0x618] sm:$0xff]
    %v1445 = vld [vmem:[#allocation4 + $0x620] sm:$0xff]
    %v1446 = vld [vmem:[#allocation4 + $0x628] sm:$0xff]
    %v1447 = vld [vmem:[#allocation4 + $0x630] sm:$0xff]
    %v1448 = vld [vmem:[#allocation4 + $0x638] sm:$0xff]
    %v1449 = vld [vmem:[#allocation4 + $0x640] sm:$0xff]
    %v1450 = vld [vmem:[#allocation4 + $0x648] sm:$0xff]
    %v1451 = vld [vmem:[#allocation4 + $0x650] sm:$0xff]
    %v1452 = vld [vmem:[#allocation4 + $0x658] sm:$0xff]
    %v1453 = vld [vmem:[#allocation4 + $0x660] sm:$0xff]
    %v1454 = vld [vmem:[#allocation4 + $0x668] sm:$0xff]
    %v1455 = vld [vmem:[#allocation4 + $0x670] sm:$0xff]
    %v1456 = vld [vmem:[#allocation4 + $0x678] sm:$0xff]
    %v1457 = vld [vmem:[#allocation4 + $0x680] sm:$0xff]
    %v1458 = vld [vmem:[#allocation4 + $0x688] sm:$0xff]
    %v1459 = vld [vmem:[#allocation4 + $0x690] sm:$0xff]
    %v1460 = vld [vmem:[#allocation4 + $0x698] sm:$0xff]
    %v1461 = vld [vmem:[#allocation4 + $0x6a0] sm:$0xff]
    %v1462 = vld [vmem:[#allocation4 + $0x6a8] sm:$0xff]
    %v1463 = vld [vmem:[#allocation4 + $0x6b0] sm:$0xff]
    %v1464 = vld [vmem:[#allocation4 + $0x6b8] sm:$0xff]
    %v1465 = vld [vmem:[#allocation4 + $0x6c0] sm:$0xff]
    %v1466 = vld [vmem:[#allocation4 + $0x6c8] sm:$0xff]
    %v1467 = vld [vmem:[#allocation4 + $0x6d0] sm:$0xff]
    %v1468 = vld [vmem:[#allocation4 + $0x6d8] sm:$0xff]
    %v1469 = vld [vmem:[#allocation4 + $0x6e0] sm:$0xff]
    %v1470 = vld [vmem:[#allocation4 + $0x6e8] sm:$0xff]
    %v1471 = vld [vmem:[#allocation4 + $0x6f0] sm:$0xff]
    %v1472 = vld [vmem:[#allocation4 + $0x6f8] sm:$0xff]
    %v1473 = vld [vmem:[#allocation4 + $0x700] sm:$0xff]
    %v1474 = vld [vmem:[#allocation4 + $0x708] sm:$0xff]
    %v1475 = vld [vmem:[#allocation4 + $0x710] sm:$0xff]
    %v1476 = vld [vmem:[#allocation4 + $0x718] sm:$0xff]
    %v1477 = vld [vmem:[#allocation4 + $0x720] sm:$0xff]
    %v1478 = vld [vmem:[#allocation4 + $0x728] sm:$0xff]
    %v1479 = vld [vmem:[#allocation4 + $0x730] sm:$0xff]
    %v1480 = vld [vmem:[#allocation4 + $0x738] sm:$0xff]
    %v1481 = vld [vmem:[#allocation4 + $0x740] sm:$0xff]
    %v1482 = vld [vmem:[#allocation4 + $0x748] sm:$0xff]
    %v1483 = vld [vmem:[#allocation4 + $0x750] sm:$0xff]
    %v1484 = vld [vmem:[#allocation4 + $0x758] sm:$0xff]
    %v1485 = vld [vmem:[#allocation4 + $0x760] sm:$0xff]
    %v1486 = vld [vmem:[#allocation4 + $0x768] sm:$0xff]
    %v1487 = vld [vmem:[#allocation4 + $0x770] sm:$0xff]
    %v1488 = vld [vmem:[#allocation4 + $0x778] sm:$0xff]
    %v1489 = vld [vmem:[#allocation4 + $0x780] sm:$0xff]
    %v1490 = vld [vmem:[#allocation4 + $0x788] sm:$0xff]
    %v1491 = vld [vmem:[#allocation4 + $0x790] sm:$0xff]
    %v1492 = vld [vmem:[#allocation4 + $0x798] sm:$0xff]
    %v1493 = vld [vmem:[#allocation4 + $0x7a0] sm:$0xff]
    %v1494 = vld [vmem:[#allocation4 + $0x7a8] sm:$0xff]
    %v1495 = vld [vmem:[#allocation4 + $0x7b0] sm:$0xff]
    %v1496 = vld [vmem:[#allocation4 + $0x7b8] sm:$0xff]
    %v1497 = vld [vmem:[#allocation4 + $0x7c0] sm:$0xff]
    %v1498 = vld [vmem:[#allocation4 + $0x7c8] sm:$0xff]
    %v1499 = vld [vmem:[#allocation4 + $0x7d0] sm:$0xff]
    %v1500 = vld [vmem:[#allocation4 + $0x7d8] sm:$0xff]
    %v1501 = vld [vmem:[#allocation4 + $0x7e0] sm:$0xff]
    %v1502 = vld [vmem:[#allocation4 + $0x7e8] sm:$0xff]
    %v1503 = vld [vmem:[#allocation4 + $0x7f0] sm:$0xff]
    %v1504 = vld [vmem:[#allocation4 + $0x7f8] sm:$0xff]
    %v1761 = vunpack.c.l.b16 %v1249
    %v1762 = vunpack.c.h.b16 %v1249
    %v1763 = vunpack.c.l.b16 %v1250
    %v1764 = vunpack.c.h.b16 %v1250
    %v1765 = vunpack.c.l.b16 %v1251
    %v1766 = vunpack.c.h.b16 %v1251
    %v1767 = vunpack.c.l.b16 %v1252
    %v1768 = vunpack.c.h.b16 %v1252
    %v1769 = vunpack.c.l.b16 %v1253
    %v1770 = vunpack.c.h.b16 %v1253
    %v1771 = vunpack.c.l.b16 %v1254
    %v1772 = vunpack.c.h.b16 %v1254
    %v1773 = vunpack.c.l.b16 %v1255
    %v1774 = vunpack.c.h.b16 %v1255
    %v1775 = vunpack.c.l.b16 %v1256
    %v1776 = vunpack.c.h.b16 %v1256
    %v1777 = vunpack.c.l.b16 %v1257
    %v1778 = vunpack.c.h.b16 %v1257
    %v1779 = vunpack.c.l.b16 %v1258
    %v1780 = vunpack.c.h.b16 %v1258
    %v1781 = vunpack.c.l.b16 %v1259
    %v1782 = vunpack.c.h.b16 %v1259
    %v1783 = vunpack.c.l.b16 %v1260
    %v1784 = vunpack.c.h.b16 %v1260
    %v1785 = vunpack.c.l.b16 %v1261
    %v1786 = vunpack.c.h.b16 %v1261
    %v1787 = vunpack.c.l.b16 %v1262
    %v1788 = vunpack.c.h.b16 %v1262
    %v1789 = vunpack.c.l.b16 %v1263
    %v1790 = vunpack.c.h.b16 %v1263
    %v1791 = vunpack.c.l.b16 %v1264
    %v1792 = vunpack.c.h.b16 %v1264
    %v1793 = vunpack.c.l.b16 %v1265
    %v1794 = vunpack.c.h.b16 %v1265
    %v1795 = vunpack.c.l.b16 %v1266
    %v1796 = vunpack.c.h.b16 %v1266
    %v1797 = vunpack.c.l.b16 %v1267
    %v1798 = vunpack.c.h.b16 %v1267
    %v1799 = vunpack.c.l.b16 %v1268
    %v1800 = vunpack.c.h.b16 %v1268
    %v1801 = vunpack.c.l.b16 %v1269
    %v1802 = vunpack.c.h.b16 %v1269
    %v1803 = vunpack.c.l.b16 %v1270
    %v1804 = vunpack.c.h.b16 %v1270
    %v1805 = vunpack.c.l.b16 %v1271
    %v1806 = vunpack.c.h.b16 %v1271
    %v1807 = vunpack.c.l.b16 %v1272
    %v1808 = vunpack.c.h.b16 %v1272
    %v1809 = vunpack.c.l.b16 %v1273
    %v1810 = vunpack.c.h.b16 %v1273
    %v1811 = vunpack.c.l.b16 %v1274
    %v1812 = vunpack.c.h.b16 %v1274
    %v1813 = vunpack.c.l.b16 %v1275
    %v1814 = vunpack.c.h.b16 %v1275
    %v1815 = vunpack.c.l.b16 %v1276
    %v1816 = vunpack.c.h.b16 %v1276
    %v1817 = vunpack.c.l.b16 %v1277
    %v1818 = vunpack.c.h.b16 %v1277
    %v1819 = vunpack.c.l.b16 %v1278
    %v1820 = vunpack.c.h.b16 %v1278
    %v1821 = vunpack.c.l.b16 %v1279
    %v1822 = vunpack.c.h.b16 %v1279
    %v1823 = vunpack.c.l.b16 %v1280
    %v1824 = vunpack.c.h.b16 %v1280
    %v1825 = vunpack.c.l.b16 %v1281
    %v1826 = vunpack.c.h.b16 %v1281
    %v1827 = vunpack.c.l.b16 %v1282
    %v1828 = vunpack.c.h.b16 %v1282
    %v1829 = vunpack.c.l.b16 %v1283
    %v1830 = vunpack.c.h.b16 %v1283
    %v1831 = vunpack.c.l.b16 %v1284
    %v1832 = vunpack.c.h.b16 %v1284
    %v1833 = vunpack.c.l.b16 %v1285
    %v1834 = vunpack.c.h.b16 %v1285
    %v1835 = vunpack.c.l.b16 %v1286
    %v1836 = vunpack.c.h.b16 %v1286
    %v1837 = vunpack.c.l.b16 %v1287
    %v1838 = vunpack.c.h.b16 %v1287
    %v1839 = vunpack.c.l.b16 %v1288
    %v1840 = vunpack.c.h.b16 %v1288
    %v1841 = vunpack.c.l.b16 %v1289
    %v1842 = vunpack.c.h.b16 %v1289
    %v1843 = vunpack.c.l.b16 %v1290
    %v1844 = vunpack.c.h.b16 %v1290
    %v1845 = vunpack.c.l.b16 %v1291
    %v1846 = vunpack.c.h.b16 %v1291
    %v1847 = vunpack.c.l.b16 %v1292
    %v1848 = vunpack.c.h.b16 %v1292
    %v1849 = vunpack.c.l.b16 %v1293
    %v1850 = vunpack.c.h.b16 %v1293
    %v1851 = vunpack.c.l.b16 %v1294
    %v1852 = vunpack.c.h.b16 %v1294
    %v1853 = vunpack.c.l.b16 %v1295
    %v1854 = vunpack.c.h.b16 %v1295
    %v1855 = vunpack.c.l.b16 %v1296
    %v1856 = vunpack.c.h.b16 %v1296
    %v1857 = vunpack.c.l.b16 %v1297
    %v1858 = vunpack.c.h.b16 %v1297
    %v1859 = vunpack.c.l.b16 %v1298
    %v1860 = vunpack.c.h.b16 %v1298
    %v1861 = vunpack.c.l.b16 %v1299
    %v1862 = vunpack.c.h.b16 %v1299
    %v1863 = vunpack.c.l.b16 %v1300
    %v1864 = vunpack.c.h.b16 %v1300
    %v1865 = vunpack.c.l.b16 %v1301
    %v1866 = vunpack.c.h.b16 %v1301
    %v1867 = vunpack.c.l.b16 %v1302
    %v1868 = vunpack.c.h.b16 %v1302
    %v1869 = vunpack.c.l.b16 %v1303
    %v1870 = vunpack.c.h.b16 %v1303
    %v1871 = vunpack.c.l.b16 %v1304
    %v1872 = vunpack.c.h.b16 %v1304
    %v1873 = vunpack.c.l.b16 %v1305
    %v1874 = vunpack.c.h.b16 %v1305
    %v1875 = vunpack.c.l.b16 %v1306
    %v1876 = vunpack.c.h.b16 %v1306
    %v1877 = vunpack.c.l.b16 %v1307
    %v1878 = vunpack.c.h.b16 %v1307
    %v1879 = vunpack.c.l.b16 %v1308
    %v1880 = vunpack.c.h.b16 %v1308
    %v1881 = vunpack.c.l.b16 %v1309
    %v1882 = vunpack.c.h.b16 %v1309
    %v1883 = vunpack.c.l.b16 %v1310
    %v1884 = vunpack.c.h.b16 %v1310
    %v1885 = vunpack.c.l.b16 %v1311
    %v1886 = vunpack.c.h.b16 %v1311
    %v1887 = vunpack.c.l.b16 %v1312
    %v1888 = vunpack.c.h.b16 %v1312
    %v1889 = vunpack.c.l.b16 %v1313
    %v1890 = vunpack.c.h.b16 %v1313
    %v1891 = vunpack.c.l.b16 %v1314
    %v1892 = vunpack.c.h.b16 %v1314
    %v1893 = vunpack.c.l.b16 %v1315
    %v1894 = vunpack.c.h.b16 %v1315
    %v1895 = vunpack.c.l.b16 %v1316
    %v1896 = vunpack.c.h.b16 %v1316
    %v1897 = vunpack.c.l.b16 %v1317
    %v1898 = vunpack.c.h.b16 %v1317
    %v1899 = vunpack.c.l.b16 %v1318
    %v1900 = vunpack.c.h.b16 %v1318
    %v1901 = vunpack.c.l.b16 %v1319
    %v1902 = vunpack.c.h.b16 %v1319
    %v1903 = vunpack.c.l.b16 %v1320
    %v1904 = vunpack.c.h.b16 %v1320
    %v1905 = vunpack.c.l.b16 %v1321
    %v1906 = vunpack.c.h.b16 %v1321
    %v1907 = vunpack.c.l.b16 %v1322
    %v1908 = vunpack.c.h.b16 %v1322
    %v1909 = vunpack.c.l.b16 %v1323
    %v1910 = vunpack.c.h.b16 %v1323
    %v1911 = vunpack.c.l.b16 %v1324
    %v1912 = vunpack.c.h.b16 %v1324
    %v1913 = vunpack.c.l.b16 %v1325
    %v1914 = vunpack.c.h.b16 %v1325
    %v1915 = vunpack.c.l.b16 %v1326
    %v1916 = vunpack.c.h.b16 %v1326
    %v1917 = vunpack.c.l.b16 %v1327
    %v1918 = vunpack.c.h.b16 %v1327
    %v1919 = vunpack.c.l.b16 %v1328
    %v1920 = vunpack.c.h.b16 %v1328
    %v1921 = vunpack.c.l.b16 %v1329
    %v1922 = vunpack.c.h.b16 %v1329
    %v1923 = vunpack.c.l.b16 %v1330
    %v1924 = vunpack.c.h.b16 %v1330
    %v1925 = vunpack.c.l.b16 %v1331
    %v1926 = vunpack.c.h.b16 %v1331
    %v1927 = vunpack.c.l.b16 %v1332
    %v1928 = vunpack.c.h.b16 %v1332
    %v1929 = vunpack.c.l.b16 %v1333
    %v1930 = vunpack.c.h.b16 %v1333
    %v1931 = vunpack.c.l.b16 %v1334
    %v1932 = vunpack.c.h.b16 %v1334
    %v1933 = vunpack.c.l.b16 %v1335
    %v1934 = vunpack.c.h.b16 %v1335
    %v1935 = vunpack.c.l.b16 %v1336
    %v1936 = vunpack.c.h.b16 %v1336
    %v1937 = vunpack.c.l.b16 %v1337
    %v1938 = vunpack.c.h.b16 %v1337
    %v1939 = vunpack.c.l.b16 %v1338
    %v1940 = vunpack.c.h.b16 %v1338
    %v1941 = vunpack.c.l.b16 %v1339
    %v1942 = vunpack.c.h.b16 %v1339
    %v1943 = vunpack.c.l.b16 %v1340
    %v1944 = vunpack.c.h.b16 %v1340
    %v1945 = vunpack.c.l.b16 %v1341
    %v1946 = vunpack.c.h.b16 %v1341
    %v1947 = vunpack.c.l.b16 %v1342
    %v1948 = vunpack.c.h.b16 %v1342
    %v1949 = vunpack.c.l.b16 %v1343
    %v1950 = vunpack.c.h.b16 %v1343
    %v1951 = vunpack.c.l.b16 %v1344
    %v1952 = vunpack.c.h.b16 %v1344
    %v1953 = vunpack.c.l.b16 %v1345
    %v1954 = vunpack.c.h.b16 %v1345
    %v1955 = vunpack.c.l.b16 %v1346
    %v1956 = vunpack.c.h.b16 %v1346
    %v1957 = vunpack.c.l.b16 %v1347
    %v1958 = vunpack.c.h.b16 %v1347
    %v1959 = vunpack.c.l.b16 %v1348
    %v1960 = vunpack.c.h.b16 %v1348
    %v1961 = vunpack.c.l.b16 %v1349
    %v1962 = vunpack.c.h.b16 %v1349
    %v1963 = vunpack.c.l.b16 %v1350
    %v1964 = vunpack.c.h.b16 %v1350
    %v1965 = vunpack.c.l.b16 %v1351
    %v1966 = vunpack.c.h.b16 %v1351
    %v1967 = vunpack.c.l.b16 %v1352
    %v1968 = vunpack.c.h.b16 %v1352
    %v1969 = vunpack.c.l.b16 %v1353
    %v1970 = vunpack.c.h.b16 %v1353
    %v1971 = vunpack.c.l.b16 %v1354
    %v1972 = vunpack.c.h.b16 %v1354
    %v1973 = vunpack.c.l.b16 %v1355
    %v1974 = vunpack.c.h.b16 %v1355
    %v1975 = vunpack.c.l.b16 %v1356
    %v1976 = vunpack.c.h.b16 %v1356
    %v1977 = vunpack.c.l.b16 %v1357
    %v1978 = vunpack.c.h.b16 %v1357
    %v1979 = vunpack.c.l.b16 %v1358
    %v1980 = vunpack.c.h.b16 %v1358
    %v1981 = vunpack.c.l.b16 %v1359
    %v1982 = vunpack.c.h.b16 %v1359
    %v1983 = vunpack.c.l.b16 %v1360
    %v1984 = vunpack.c.h.b16 %v1360
    %v1985 = vunpack.c.l.b16 %v1361
    %v1986 = vunpack.c.h.b16 %v1361
    %v1987 = vunpack.c.l.b16 %v1362
    %v1988 = vunpack.c.h.b16 %v1362
    %v1989 = vunpack.c.l.b16 %v1363
    %v1990 = vunpack.c.h.b16 %v1363
    %v1991 = vunpack.c.l.b16 %v1364
    %v1992 = vunpack.c.h.b16 %v1364
    %v1993 = vunpack.c.l.b16 %v1365
    %v1994 = vunpack.c.h.b16 %v1365
    %v1995 = vunpack.c.l.b16 %v1366
    %v1996 = vunpack.c.h.b16 %v1366
    %v1997 = vunpack.c.l.b16 %v1367
    %v1998 = vunpack.c.h.b16 %v1367
    %v1999 = vunpack.c.l.b16 %v1368
    %v2000 = vunpack.c.h.b16 %v1368
    %v2001 = vunpack.c.l.b16 %v1369
    %v2002 = vunpack.c.h.b16 %v1369
    %v2003 = vunpack.c.l.b16 %v1370
    %v2004 = vunpack.c.h.b16 %v1370
    %v2005 = vunpack.c.l.b16 %v1371
    %v2006 = vunpack.c.h.b16 %v1371
    %v2007 = vunpack.c.l.b16 %v1372
    %v2008 = vunpack.c.h.b16 %v1372
    %v2009 = vunpack.c.l.b16 %v1373
    %v2010 = vunpack.c.h.b16 %v1373
    %v2011 = vunpack.c.l.b16 %v1374
    %v2012 = vunpack.c.h.b16 %v1374
    %v2013 = vunpack.c.l.b16 %v1375
    %v2014 = vunpack.c.h.b16 %v1375
    %v2015 = vunpack.c.l.b16 %v1376
    %v2016 = vunpack.c.h.b16 %v1376
    %v2017 = vunpack.c.l.b16 %v1377
    %v2018 = vunpack.c.h.b16 %v1377
    %v2019 = vunpack.c.l.b16 %v1378
    %v2020 = vunpack.c.h.b16 %v1378
    %v2021 = vunpack.c.l.b16 %v1379
    %v2022 = vunpack.c.h.b16 %v1379
    %v2023 = vunpack.c.l.b16 %v1380
    %v2024 = vunpack.c.h.b16 %v1380
    %v2025 = vunpack.c.l.b16 %v1381
    %v2026 = vunpack.c.h.b16 %v1381
    %v2027 = vunpack.c.l.b16 %v1382
    %v2028 = vunpack.c.h.b16 %v1382
    %v2029 = vunpack.c.l.b16 %v1383
    %v2030 = vunpack.c.h.b16 %v1383
    %v2031 = vunpack.c.l.b16 %v1384
    %v2032 = vunpack.c.h.b16 %v1384
    %v2033 = vunpack.c.l.b16 %v1385
    %v2034 = vunpack.c.h.b16 %v1385
    %v2035 = vunpack.c.l.b16 %v1386
    %v2036 = vunpack.c.h.b16 %v1386
    %v2037 = vunpack.c.l.b16 %v1387
    %v2038 = vunpack.c.h.b16 %v1387
    %v2039 = vunpack.c.l.b16 %v1388
    %v2040 = vunpack.c.h.b16 %v1388
    %v2041 = vunpack.c.l.b16 %v1389
    %v2042 = vunpack.c.h.b16 %v1389
    %v2043 = vunpack.c.l.b16 %v1390
    %v2044 = vunpack.c.h.b16 %v1390
    %v2045 = vunpack.c.l.b16 %v1391
    %v2046 = vunpack.c.h.b16 %v1391
    %v2047 = vunpack.c.l.b16 %v1392
    %v2048 = vunpack.c.h.b16 %v1392
    %v2049 = vunpack.c.l.b16 %v1393
    %v2050 = vunpack.c.h.b16 %v1393
    %v2051 = vunpack.c.l.b16 %v1394
    %v2052 = vunpack.c.h.b16 %v1394
    %v2053 = vunpack.c.l.b16 %v1395
    %v2054 = vunpack.c.h.b16 %v1395
    %v2055 = vunpack.c.l.b16 %v1396
    %v2056 = vunpack.c.h.b16 %v1396
    %v2057 = vunpack.c.l.b16 %v1397
    %v2058 = vunpack.c.h.b16 %v1397
    %v2059 = vunpack.c.l.b16 %v1398
    %v2060 = vunpack.c.h.b16 %v1398
    %v2061 = vunpack.c.l.b16 %v1399
    %v2062 = vunpack.c.h.b16 %v1399
    %v2063 = vunpack.c.l.b16 %v1400
    %v2064 = vunpack.c.h.b16 %v1400
    %v2065 = vunpack.c.l.b16 %v1401
    %v2066 = vunpack.c.h.b16 %v1401
    %v2067 = vunpack.c.l.b16 %v1402
    %v2068 = vunpack.c.h.b16 %v1402
    %v2069 = vunpack.c.l.b16 %v1403
    %v2070 = vunpack.c.h.b16 %v1403
    %v2071 = vunpack.c.l.b16 %v1404
    %v2072 = vunpack.c.h.b16 %v1404
    %v2073 = vunpack.c.l.b16 %v1405
    %v2074 = vunpack.c.h.b16 %v1405
    %v2075 = vunpack.c.l.b16 %v1406
    %v2076 = vunpack.c.h.b16 %v1406
    %v2077 = vunpack.c.l.b16 %v1407
    %v2078 = vunpack.c.h.b16 %v1407
    %v2079 = vunpack.c.l.b16 %v1408
    %v2080 = vunpack.c.h.b16 %v1408
    %v2081 = vunpack.c.l.b16 %v1409
    %v2082 = vunpack.c.h.b16 %v1409
    %v2083 = vunpack.c.l.b16 %v1410
    %v2084 = vunpack.c.h.b16 %v1410
    %v2085 = vunpack.c.l.b16 %v1411
    %v2086 = vunpack.c.h.b16 %v1411
    %v2087 = vunpack.c.l.b16 %v1412
    %v2088 = vunpack.c.h.b16 %v1412
    %v2089 = vunpack.c.l.b16 %v1413
    %v2090 = vunpack.c.h.b16 %v1413
    %v2091 = vunpack.c.l.b16 %v1414
    %v2092 = vunpack.c.h.b16 %v1414
    %v2093 = vunpack.c.l.b16 %v1415
    %v2094 = vunpack.c.h.b16 %v1415
    %v2095 = vunpack.c.l.b16 %v1416
    %v2096 = vunpack.c.h.b16 %v1416
    %v2097 = vunpack.c.l.b16 %v1417
    %v2098 = vunpack.c.h.b16 %v1417
    %v2099 = vunpack.c.l.b16 %v1418
    %v2100 = vunpack.c.h.b16 %v1418
    %v2101 = vunpack.c.l.b16 %v1419
    %v2102 = vunpack.c.h.b16 %v1419
    %v2103 = vunpack.c.l.b16 %v1420
    %v2104 = vunpack.c.h.b16 %v1420
    %v2105 = vunpack.c.l.b16 %v1421
    %v2106 = vunpack.c.h.b16 %v1421
    %v2107 = vunpack.c.l.b16 %v1422
    %v2108 = vunpack.c.h.b16 %v1422
    %v2109 = vunpack.c.l.b16 %v1423
    %v2110 = vunpack.c.h.b16 %v1423
    %v2111 = vunpack.c.l.b16 %v1424
    %v2112 = vunpack.c.h.b16 %v1424
    %v2113 = vunpack.c.l.b16 %v1425
    %v2114 = vunpack.c.h.b16 %v1425
    %v2115 = vunpack.c.l.b16 %v1426
    %v2116 = vunpack.c.h.b16 %v1426
    %v2117 = vunpack.c.l.b16 %v1427
    %v2118 = vunpack.c.h.b16 %v1427
    %v2119 = vunpack.c.l.b16 %v1428
    %v2120 = vunpack.c.h.b16 %v1428
    %v2121 = vunpack.c.l.b16 %v1429
    %v2122 = vunpack.c.h.b16 %v1429
    %v2123 = vunpack.c.l.b16 %v1430
    %v2124 = vunpack.c.h.b16 %v1430
    %v2125 = vunpack.c.l.b16 %v1431
    %v2126 = vunpack.c.h.b16 %v1431
    %v2127 = vunpack.c.l.b16 %v1432
    %v2128 = vunpack.c.h.b16 %v1432
    %v2129 = vunpack.c.l.b16 %v1433
    %v2130 = vunpack.c.h.b16 %v1433
    %v2131 = vunpack.c.l.b16 %v1434
    %v2132 = vunpack.c.h.b16 %v1434
    %v2133 = vunpack.c.l.b16 %v1435
    %v2134 = vunpack.c.h.b16 %v1435
    %v2135 = vunpack.c.l.b16 %v1436
    %v2136 = vunpack.c.h.b16 %v1436
    %v2137 = vunpack.c.l.b16 %v1437
    %v2138 = vunpack.c.h.b16 %v1437
    %v2139 = vunpack.c.l.b16 %v1438
    %v2140 = vunpack.c.h.b16 %v1438
    %v2141 = vunpack.c.l.b16 %v1439
    %v2142 = vunpack.c.h.b16 %v1439
    %v2143 = vunpack.c.l.b16 %v1440
    %v2144 = vunpack.c.h.b16 %v1440
    %v2145 = vunpack.c.l.b16 %v1441
    %v2146 = vunpack.c.h.b16 %v1441
    %v2147 = vunpack.c.l.b16 %v1442
    %v2148 = vunpack.c.h.b16 %v1442
    %v2149 = vunpack.c.l.b16 %v1443
    %v2150 = vunpack.c.h.b16 %v1443
    %v2151 = vunpack.c.l.b16 %v1444
    %v2152 = vunpack.c.h.b16 %v1444
    %v2153 = vunpack.c.l.b16 %v1445
    %v2154 = vunpack.c.h.b16 %v1445
    %v2155 = vunpack.c.l.b16 %v1446
    %v2156 = vunpack.c.h.b16 %v1446
    %v2157 = vunpack.c.l.b16 %v1447
    %v2158 = vunpack.c.h.b16 %v1447
    %v2159 = vunpack.c.l.b16 %v1448
    %v2160 = vunpack.c.h.b16 %v1448
    %v2161 = vunpack.c.l.b16 %v1449
    %v2162 = vunpack.c.h.b16 %v1449
    %v2163 = vunpack.c.l.b16 %v1450
    %v2164 = vunpack.c.h.b16 %v1450
    %v2165 = vunpack.c.l.b16 %v1451
    %v2166 = vunpack.c.h.b16 %v1451
    %v2167 = vunpack.c.l.b16 %v1452
    %v2168 = vunpack.c.h.b16 %v1452
    %v2169 = vunpack.c.l.b16 %v1453
    %v2170 = vunpack.c.h.b16 %v1453
    %v2171 = vunpack.c.l.b16 %v1454
    %v2172 = vunpack.c.h.b16 %v1454
    %v2173 = vunpack.c.l.b16 %v1455
    %v2174 = vunpack.c.h.b16 %v1455
    %v2175 = vunpack.c.l.b16 %v1456
    %v2176 = vunpack.c.h.b16 %v1456
    %v2177 = vunpack.c.l.b16 %v1457
    %v2178 = vunpack.c.h.b16 %v1457
    %v2179 = vunpack.c.l.b16 %v1458
    %v2180 = vunpack.c.h.b16 %v1458
    %v2181 = vunpack.c.l.b16 %v1459
    %v2182 = vunpack.c.h.b16 %v1459
    %v2183 = vunpack.c.l.b16 %v1460
    %v2184 = vunpack.c.h.b16 %v1460
    %v2185 = vunpack.c.l.b16 %v1461
    %v2186 = vunpack.c.h.b16 %v1461
    %v2187 = vunpack.c.l.b16 %v1462
    %v2188 = vunpack.c.h.b16 %v1462
    %v2189 = vunpack.c.l.b16 %v1463
    %v2190 = vunpack.c.h.b16 %v1463
    %v2191 = vunpack.c.l.b16 %v1464
    %v2192 = vunpack.c.h.b16 %v1464
    %v2193 = vunpack.c.l.b16 %v1465
    %v2194 = vunpack.c.h.b16 %v1465
    %v2195 = vunpack.c.l.b16 %v1466
    %v2196 = vunpack.c.h.b16 %v1466
    %v2197 = vunpack.c.l.b16 %v1467
    %v2198 = vunpack.c.h.b16 %v1467
    %v2199 = vunpack.c.l.b16 %v1468
    %v2200 = vunpack.c.h.b16 %v1468
    %v2201 = vunpack.c.l.b16 %v1469
    %v2202 = vunpack.c.h.b16 %v1469
    %v2203 = vunpack.c.l.b16 %v1470
    %v2204 = vunpack.c.h.b16 %v1470
    %v2205 = vunpack.c.l.b16 %v1471
    %v2206 = vunpack.c.h.b16 %v1471
    %v2207 = vunpack.c.l.b16 %v1472
    %v2208 = vunpack.c.h.b16 %v1472
    %v2209 = vunpack.c.l.b16 %v1473
    %v2210 = vunpack.c.h.b16 %v1473
    %v2211 = vunpack.c.l.b16 %v1474
    %v2212 = vunpack.c.h.b16 %v1474
    %v2213 = vunpack.c.l.b16 %v1475
    %v2214 = vunpack.c.h.b16 %v1475
    %v2215 = vunpack.c.l.b16 %v1476
    %v2216 = vunpack.c.h.b16 %v1476
    %v2217 = vunpack.c.l.b16 %v1477
    %v2218 = vunpack.c.h.b16 %v1477
    %v2219 = vunpack.c.l.b16 %v1478
    %v2220 = vunpack.c.h.b16 %v1478
    %v2221 = vunpack.c.l.b16 %v1479
    %v2222 = vunpack.c.h.b16 %v1479
    %v2223 = vunpack.c.l.b16 %v1480
    %v2224 = vunpack.c.h.b16 %v1480
    %v2225 = vunpack.c.l.b16 %v1481
    %v2226 = vunpack.c.h.b16 %v1481
    %v2227 = vunpack.c.l.b16 %v1482
    %v2228 = vunpack.c.h.b16 %v1482
    %v2229 = vunpack.c.l.b16 %v1483
    %v2230 = vunpack.c.h.b16 %v1483
    %v2231 = vunpack.c.l.b16 %v1484
    %v2232 = vunpack.c.h.b16 %v1484
    %v2233 = vunpack.c.l.b16 %v1485
    %v2234 = vunpack.c.h.b16 %v1485
    %v2235 = vunpack.c.l.b16 %v1486
    %v2236 = vunpack.c.h.b16 %v1486
    %v2237 = vunpack.c.l.b16 %v1487
    %v2238 = vunpack.c.h.b16 %v1487
    %v2239 = vunpack.c.l.b16 %v1488
    %v2240 = vunpack.c.h.b16 %v1488
    %v2241 = vunpack.c.l.b16 %v1489
    %v2242 = vunpack.c.h.b16 %v1489
    %v2243 = vunpack.c.l.b16 %v1490
    %v2244 = vunpack.c.h.b16 %v1490
    %v2245 = vunpack.c.l.b16 %v1491
    %v2246 = vunpack.c.h.b16 %v1491
    %v2247 = vunpack.c.l.b16 %v1492
    %v2248 = vunpack.c.h.b16 %v1492
    %v2249 = vunpack.c.l.b16 %v1493
    %v2250 = vunpack.c.h.b16 %v1493
    %v2251 = vunpack.c.l.b16 %v1494
    %v2252 = vunpack.c.h.b16 %v1494
    %v2253 = vunpack.c.l.b16 %v1495
    %v2254 = vunpack.c.h.b16 %v1495
    %v2255 = vunpack.c.l.b16 %v1496
    %v2256 = vunpack.c.h.b16 %v1496
    %v2257 = vunpack.c.l.b16 %v1497
    %v2258 = vunpack.c.h.b16 %v1497
    %v2259 = vunpack.c.l.b16 %v1498
    %v2260 = vunpack.c.h.b16 %v1498
    %v2261 = vunpack.c.l.b16 %v1499
    %v2262 = vunpack.c.h.b16 %v1499
    %v2263 = vunpack.c.l.b16 %v1500
    %v2264 = vunpack.c.h.b16 %v1500
    %v2265 = vunpack.c.l.b16 %v1501
    %v2266 = vunpack.c.h.b16 %v1501
    %v2267 = vunpack.c.l.b16 %v1502
    %v2268 = vunpack.c.h.b16 %v1502
    %v2269 = vunpack.c.l.b16 %v1503
    %v2270 = vunpack.c.h.b16 %v1503
    %v2271 = vunpack.c.l.b16 %v1504
    %v2272 = vunpack.c.h.b16 %v1504
    %v2273 = vpack.c.b16 %v1769, %v1761
    %v2274 = vpack.c.b16 %v1770, %v1762
    %v2275 = vpack.c.b16 %v1771, %v1763
    %v2276 = vpack.c.b16 %v1772, %v1764
    %v2277 = vpack.c.b16 %v1773, %v1765
    %v2278 = vpack.c.b16 %v1774, %v1766
    %v2279 = vpack.c.b16 %v1775, %v1767
    %v2280 = vpack.c.b16 %v1776, %v1768
    %v2281 = vpack.c.b16 %v1785, %v1777
    %v2282 = vpack.c.b16 %v1786, %v1778
    %v2283 = vpack.c.b16 %v1787, %v1779
    %v2284 = vpack.c.b16 %v1788, %v1780
    %v2285 = vpack.c.b16 %v1789, %v1781
    %v2286 = vpack.c.b16 %v1790, %v1782
    %v2287 = vpack.c.b16 %v1791, %v1783
    %v2288 = vpack.c.b16 %v1792, %v1784
    %v2289 = vpack.c.b16 %v1801, %v1793
    %v2290 = vpack.c.b16 %v1802, %v1794
    %v2291 = vpack.c.b16 %v1803, %v1795
    %v2292 = vpack.c.b16 %v1804, %v1796
    %v2293 = vpack.c.b16 %v1805, %v1797
    %v2294 = vpack.c.b16 %v1806, %v1798
    %v2295 = vpack.c.b16 %v1807, %v1799
    %v2296 = vpack.c.b16 %v1808, %v1800
    %v2297 = vpack.c.b16 %v1817, %v1809
    %v2298 = vpack.c.b16 %v1818, %v1810
    %v2299 = vpack.c.b16 %v1819, %v1811
    %v2300 = vpack.c.b16 %v1820, %v1812
    %v2301 = vpack.c.b16 %v1821, %v1813
    %v2302 = vpack.c.b16 %v1822, %v1814
    %v2303 = vpack.c.b16 %v1823, %v1815
    %v2304 = vpack.c.b16 %v1824, %v1816
    %v2305 = vpack.c.b16 %v1833, %v1825
    %v2306 = vpack.c.b16 %v1834, %v1826
    %v2307 = vpack.c.b16 %v1835, %v1827
    %v2308 = vpack.c.b16 %v1836, %v1828
    %v2309 = vpack.c.b16 %v1837, %v1829
    %v2310 = vpack.c.b16 %v1838, %v1830
    %v2311 = vpack.c.b16 %v1839, %v1831
    %v2312 = vpack.c.b16 %v1840, %v1832
    %v2313 = vpack.c.b16 %v1849, %v1841
    %v2314 = vpack.c.b16 %v1850, %v1842
    %v2315 = vpack.c.b16 %v1851, %v1843
    %v2316 = vpack.c.b16 %v1852, %v1844
    %v2317 = vpack.c.b16 %v1853, %v1845
    %v2318 = vpack.c.b16 %v1854, %v1846
    %v2319 = vpack.c.b16 %v1855, %v1847
    %v2320 = vpack.c.b16 %v1856, %v1848
    %v2321 = vpack.c.b16 %v1865, %v1857
    %v2322 = vpack.c.b16 %v1866, %v1858
    %v2323 = vpack.c.b16 %v1867, %v1859
    %v2324 = vpack.c.b16 %v1868, %v1860
    %v2325 = vpack.c.b16 %v1869, %v1861
    %v2326 = vpack.c.b16 %v1870, %v1862
    %v2327 = vpack.c.b16 %v1871, %v1863
    %v2328 = vpack.c.b16 %v1872, %v1864
    %v2329 = vpack.c.b16 %v1881, %v1873
    %v2330 = vpack.c.b16 %v1882, %v1874
    %v2331 = vpack.c.b16 %v1883, %v1875
    %v2332 = vpack.c.b16 %v1884, %v1876
    %v2333 = vpack.c.b16 %v1885, %v1877
    %v2334 = vpack.c.b16 %v1886, %v1878
    %v2335 = vpack.c.b16 %v1887, %v1879
    %v2336 = vpack.c.b16 %v1888, %v1880
    %v2337 = vpack.c.b16 %v1897, %v1889
    %v2338 = vpack.c.b16 %v1898, %v1890
    %v2339 = vpack.c.b16 %v1899, %v1891
    %v2340 = vpack.c.b16 %v1900, %v1892
    %v2341 = vpack.c.b16 %v1901, %v1893
    %v2342 = vpack.c.b16 %v1902, %v1894
    %v2343 = vpack.c.b16 %v1903, %v1895
    %v2344 = vpack.c.b16 %v1904, %v1896
    %v2345 = vpack.c.b16 %v1913, %v1905
    %v2346 = vpack.c.b16 %v1914, %v1906
    %v2347 = vpack.c.b16 %v1915, %v1907
    %v2348 = vpack.c.b16 %v1916, %v1908
    %v2349 = vpack.c.b16 %v1917, %v1909
    %v2350 = vpack.c.b16 %v1918, %v1910
    %v2351 = vpack.c.b16 %v1919, %v1911
    %v2352 = vpack.c.b16 %v1920, %v1912
    %v2353 = vpack.c.b16 %v1929, %v1921
    %v2354 = vpack.c.b16 %v1930, %v1922
    %v2355 = vpack.c.b16 %v1931, %v1923
    %v2356 = vpack.c.b16 %v1932, %v1924
    %v2357 = vpack.c.b16 %v1933, %v1925
    %v2358 = vpack.c.b16 %v1934, %v1926
    %v2359 = vpack.c.b16 %v1935, %v1927
    %v2360 = vpack.c.b16 %v1936, %v1928
    %v2361 = vpack.c.b16 %v1945, %v1937
    %v2362 = vpack.c.b16 %v1946, %v1938
    %v2363 = vpack.c.b16 %v1947, %v1939
    %v2364 = vpack.c.b16 %v1948, %v1940
    %v2365 = vpack.c.b16 %v1949, %v1941
    %v2366 = vpack.c.b16 %v1950, %v1942
    %v2367 = vpack.c.b16 %v1951, %v1943
    %v2368 = vpack.c.b16 %v1952, %v1944
    %v2369 = vpack.c.b16 %v1961, %v1953
    %v2370 = vpack.c.b16 %v1962, %v1954
    %v2371 = vpack.c.b16 %v1963, %v1955
    %v2372 = vpack.c.b16 %v1964, %v1956
    %v2373 = vpack.c.b16 %v1965, %v1957
    %v2374 = vpack.c.b16 %v1966, %v1958
    %v2375 = vpack.c.b16 %v1967, %v1959
    %v2376 = vpack.c.b16 %v1968, %v1960
    %v2377 = vpack.c.b16 %v1977, %v1969
    %v2378 = vpack.c.b16 %v1978, %v1970
    %v2379 = vpack.c.b16 %v1979, %v1971
    %v2380 = vpack.c.b16 %v1980, %v1972
    %v2381 = vpack.c.b16 %v1981, %v1973
    %v2382 = vpack.c.b16 %v1982, %v1974
    %v2383 = vpack.c.b16 %v1983, %v1975
    %v2384 = vpack.c.b16 %v1984, %v1976
    %v2385 = vpack.c.b16 %v1993, %v1985
    %v2386 = vpack.c.b16 %v1994, %v1986
    %v2387 = vpack.c.b16 %v1995, %v1987
    %v2388 = vpack.c.b16 %v1996, %v1988
    %v2389 = vpack.c.b16 %v1997, %v1989
    %v2390 = vpack.c.b16 %v1998, %v1990
    %v2391 = vpack.c.b16 %v1999, %v1991
    %v2392 = vpack.c.b16 %v2000, %v1992
    %v2393 = vpack.c.b16 %v2009, %v2001
    %v2394 = vpack.c.b16 %v2010, %v2002
    %v2395 = vpack.c.b16 %v2011, %v2003
    %v2396 = vpack.c.b16 %v2012, %v2004
    %v2397 = vpack.c.b16 %v2013, %v2005
    %v2398 = vpack.c.b16 %v2014, %v2006
    %v2399 = vpack.c.b16 %v2015, %v2007
    %v2400 = vpack.c.b16 %v2016, %v2008
    %v2401 = vpack.c.b16 %v2025, %v2017
    %v2402 = vpack.c.b16 %v2026, %v2018
    %v2403 = vpack.c.b16 %v2027, %v2019
    %v2404 = vpack.c.b16 %v2028, %v2020
    %v2405 = vpack.c.b16 %v2029, %v2021
    %v2406 = vpack.c.b16 %v2030, %v2022
    %v2407 = vpack.c.b16 %v2031, %v2023
    %v2408 = vpack.c.b16 %v2032, %v2024
    %v2409 = vpack.c.b16 %v2041, %v2033
    %v2410 = vpack.c.b16 %v2042, %v2034
    %v2411 = vpack.c.b16 %v2043, %v2035
    %v2412 = vpack.c.b16 %v2044, %v2036
    %v2413 = vpack.c.b16 %v2045, %v2037
    %v2414 = vpack.c.b16 %v2046, %v2038
    %v2415 = vpack.c.b16 %v2047, %v2039
    %v2416 = vpack.c.b16 %v2048, %v2040
    %v2417 = vpack.c.b16 %v2057, %v2049
    %v2418 = vpack.c.b16 %v2058, %v2050
    %v2419 = vpack.c.b16 %v2059, %v2051
    %v2420 = vpack.c.b16 %v2060, %v2052
    %v2421 = vpack.c.b16 %v2061, %v2053
    %v2422 = vpack.c.b16 %v2062, %v2054
    %v2423 = vpack.c.b16 %v2063, %v2055
    %v2424 = vpack.c.b16 %v2064, %v2056
    %v2425 = vpack.c.b16 %v2073, %v2065
    %v2426 = vpack.c.b16 %v2074, %v2066
    %v2427 = vpack.c.b16 %v2075, %v2067
    %v2428 = vpack.c.b16 %v2076, %v2068
    %v2429 = vpack.c.b16 %v2077, %v2069
    %v2430 = vpack.c.b16 %v2078, %v2070
    %v2431 = vpack.c.b16 %v2079, %v2071
    %v2432 = vpack.c.b16 %v2080, %v2072
    %v2433 = vpack.c.b16 %v2089, %v2081
    %v2434 = vpack.c.b16 %v2090, %v2082
    %v2435 = vpack.c.b16 %v2091, %v2083
    %v2436 = vpack.c.b16 %v2092, %v2084
    %v2437 = vpack.c.b16 %v2093, %v2085
    %v2438 = vpack.c.b16 %v2094, %v2086
    %v2439 = vpack.c.b16 %v2095, %v2087
    %v2440 = vpack.c.b16 %v2096, %v2088
    %v2441 = vpack.c.b16 %v2105, %v2097
    %v2442 = vpack.c.b16 %v2106, %v2098
    %v2443 = vpack.c.b16 %v2107, %v2099
    %v2444 = vpack.c.b16 %v2108, %v2100
    %v2445 = vpack.c.b16 %v2109, %v2101
    %v2446 = vpack.c.b16 %v2110, %v2102
    %v2447 = vpack.c.b16 %v2111, %v2103
    %v2448 = vpack.c.b16 %v2112, %v2104
    %v2449 = vpack.c.b16 %v2121, %v2113
    %v2450 = vpack.c.b16 %v2122, %v2114
    %v2451 = vpack.c.b16 %v2123, %v2115
    %v2452 = vpack.c.b16 %v2124, %v2116
    %v2453 = vpack.c.b16 %v2125, %v2117
    %v2454 = vpack.c.b16 %v2126, %v2118
    %v2455 = vpack.c.b16 %v2127, %v2119
    %v2456 = vpack.c.b16 %v2128, %v2120
    %v2457 = vpack.c.b16 %v2137, %v2129
    %v2458 = vpack.c.b16 %v2138, %v2130
    %v2459 = vpack.c.b16 %v2139, %v2131
    %v2460 = vpack.c.b16 %v2140, %v2132
    %v2461 = vpack.c.b16 %v2141, %v2133
    %v2462 = vpack.c.b16 %v2142, %v2134
    %v2463 = vpack.c.b16 %v2143, %v2135
    %v2464 = vpack.c.b16 %v2144, %v2136
    %v2465 = vpack.c.b16 %v2153, %v2145
    %v2466 = vpack.c.b16 %v2154, %v2146
    %v2467 = vpack.c.b16 %v2155, %v2147
    %v2468 = vpack.c.b16 %v2156, %v2148
    %v2469 = vpack.c.b16 %v2157, %v2149
    %v2470 = vpack.c.b16 %v2158, %v2150
    %v2471 = vpack.c.b16 %v2159, %v2151
    %v2472 = vpack.c.b16 %v2160, %v2152
    %v2473 = vpack.c.b16 %v2169, %v2161
    %v2474 = vpack.c.b16 %v2170, %v2162
    %v2475 = vpack.c.b16 %v2171, %v2163
    %v2476 = vpack.c.b16 %v2172, %v2164
    %v2477 = vpack.c.b16 %v2173, %v2165
    %v2478 = vpack.c.b16 %v2174, %v2166
    %v2479 = vpack.c.b16 %v2175, %v2167
    %v2480 = vpack.c.b16 %v2176, %v2168
    %v2481 = vpack.c.b16 %v2185, %v2177
    %v2482 = vpack.c.b16 %v2186, %v2178
    %v2483 = vpack.c.b16 %v2187, %v2179
    %v2484 = vpack.c.b16 %v2188, %v2180
    %v2485 = vpack.c.b16 %v2189, %v2181
    %v2486 = vpack.c.b16 %v2190, %v2182
    %v2487 = vpack.c.b16 %v2191, %v2183
    %v2488 = vpack.c.b16 %v2192, %v2184
    %v2489 = vpack.c.b16 %v2201, %v2193
    %v2490 = vpack.c.b16 %v2202, %v2194
    %v2491 = vpack.c.b16 %v2203, %v2195
    %v2492 = vpack.c.b16 %v2204, %v2196
    %v2493 = vpack.c.b16 %v2205, %v2197
    %v2494 = vpack.c.b16 %v2206, %v2198
    %v2495 = vpack.c.b16 %v2207, %v2199
    %v2496 = vpack.c.b16 %v2208, %v2200
    %v2497 = vpack.c.b16 %v2217, %v2209
    %v2498 = vpack.c.b16 %v2218, %v2210
    %v2499 = vpack.c.b16 %v2219, %v2211
    %v2500 = vpack.c.b16 %v2220, %v2212
    %v2501 = vpack.c.b16 %v2221, %v2213
    %v2502 = vpack.c.b16 %v2222, %v2214
    %v2503 = vpack.c.b16 %v2223, %v2215
    %v2504 = vpack.c.b16 %v2224, %v2216
    %v2505 = vpack.c.b16 %v2233, %v2225
    %v2506 = vpack.c.b16 %v2234, %v2226
    %v2507 = vpack.c.b16 %v2235, %v2227
    %v2508 = vpack.c.b16 %v2236, %v2228
    %v2509 = vpack.c.b16 %v2237, %v2229
    %v2510 = vpack.c.b16 %v2238, %v2230
    %v2511 = vpack.c.b16 %v2239, %v2231
    %v2512 = vpack.c.b16 %v2240, %v2232
    %v2513 = vpack.c.b16 %v2249, %v2241
    %v2514 = vpack.c.b16 %v2250, %v2242
    %v2515 = vpack.c.b16 %v2251, %v2243
    %v2516 = vpack.c.b16 %v2252, %v2244
    %v2517 = vpack.c.b16 %v2253, %v2245
    %v2518 = vpack.c.b16 %v2254, %v2246
    %v2519 = vpack.c.b16 %v2255, %v2247
    %v2520 = vpack.c.b16 %v2256, %v2248
    %v2521 = vpack.c.b16 %v2265, %v2257
    %v2522 = vpack.c.b16 %v2266, %v2258
    %v2523 = vpack.c.b16 %v2267, %v2259
    %v2524 = vpack.c.b16 %v2268, %v2260
    %v2525 = vpack.c.b16 %v2269, %v2261
    %v2526 = vpack.c.b16 %v2270, %v2262
    %v2527 = vpack.c.b16 %v2271, %v2263
    %v2528 = vpack.c.b16 %v2272, %v2264
    %2785 = vmatprep.subr.bf16.mxu0 %v2330
    %2786 = vmatpush1.bf16.msra.mxu0 %v2329
    %2787 = vmatprep.subr.bf16.mxu0 %v2322
    %2788 = vmatpush1.bf16.msra.mxu0 %v2321
    %2789 = vmatprep.subr.bf16.mxu0 %v2314
    %2790 = vmatpush1.bf16.msra.mxu0 %v2313
    %2791 = vmatprep.subr.bf16.mxu0 %v2306
    %2792 = vmatpush1.bf16.msra.mxu0 %v2305
    %2793 = vmatprep.subr.bf16.mxu0 %v2298
    %2794 = vmatpush1.bf16.msra.mxu0 %v2297
    %2795 = vmatprep.subr.bf16.mxu0 %v2290
    %2796 = vmatpush1.bf16.msra.mxu0 %v2289
    %2797 = vmatprep.subr.bf16.mxu0 %v2282
    %2798 = vmatpush1.bf16.msra.mxu0 %v2281
    %2799 = vmatprep.subr.bf16.mxu0 %v2274
    %2800 = vmatpush1.bf16.msra.mxu0 %v2273
    %2801 = vmatprep.subr.bf16.mxu0 %v2394
    %2802 = vmatpush2.bf16.msra.mxu0 %v2393
    %2803 = vmatprep.subr.bf16.mxu0 %v2386
    %2804 = vmatpush2.bf16.msra.mxu0 %v2385
    %2805 = vmatprep.subr.bf16.mxu0 %v2378
    %2806 = vmatpush2.bf16.msra.mxu0 %v2377
    %2807 = vmatprep.subr.bf16.mxu0 %v2370
    %2808 = vmatpush2.bf16.msra.mxu0 %v2369
    %2809 = vmatprep.subr.bf16.mxu0 %v2362
    %2810 = vmatpush2.bf16.msra.mxu0 %v2361
    %2811 = vmatprep.subr.bf16.mxu0 %v2354
    %2812 = vmatpush2.bf16.msra.mxu0 %v2353
    %2813 = vmatprep.subr.bf16.mxu0 %v2346
    %2814 = vmatpush2.bf16.msra.mxu0 %v2345
    %2815 = vmatprep.subr.bf16.mxu0 %v2338
    %2816 = vmatpush2.bf16.msra.mxu0 %v2337
    %2817 = vmatprep.mubr.bf16.mxu0 %v1242
    %2818 = vmatmul.mubr.bf16.gmra.mxu0 %v1241
    %v2819 = vpop.f32.mrf.mxu0
    %v2820 = vadd.f32 0.0, %v2819
    %v2821 = vpop.f32.mrf.mxu0
    %v2822 = vadd.f32 0.0, %v2821
    %v2823 = vpop.f32.mrf.mxu0
    %v2824 = vpop.f32.mrf.mxu0
    %2825 = vdwg.mxu0
    %2826 = vmatprep.subr.bf16.mxu0 %v2458
    %2827 = vmatpush1.bf16.msra.mxu0 %v2457
    %2828 = vmatprep.subr.bf16.mxu0 %v2450
    %2829 = vmatpush1.bf16.msra.mxu0 %v2449
    %2830 = vmatprep.subr.bf16.mxu0 %v2442
    %2831 = vmatpush1.bf16.msra.mxu0 %v2441
    %2832 = vmatprep.subr.bf16.mxu0 %v2434
    %2833 = vmatpush1.bf16.msra.mxu0 %v2433
    %2834 = vmatprep.subr.bf16.mxu0 %v2426
    %2835 = vmatpush1.bf16.msra.mxu0 %v2425
    %2836 = vmatprep.subr.bf16.mxu0 %v2418
    %2837 = vmatpush1.bf16.msra.mxu0 %v2417
    %2838 = vmatprep.subr.bf16.mxu0 %v2410
    %2839 = vmatpush1.bf16.msra.mxu0 %v2409
    %2840 = vmatprep.subr.bf16.mxu0 %v2402
    %2841 = vmatpush1.bf16.msra.mxu0 %v2401
    %2842 = vmatprep.subr.bf16.mxu0 %v2522
    %2843 = vmatpush2.bf16.msra.mxu0 %v2521
    %2844 = vmatprep.subr.bf16.mxu0 %v2514
    %2845 = vmatpush2.bf16.msra.mxu0 %v2513
    %2846 = vmatprep.subr.bf16.mxu0 %v2506
    %2847 = vmatpush2.bf16.msra.mxu0 %v2505
    %2848 = vmatprep.subr.bf16.mxu0 %v2498
    %2849 = vmatpush2.bf16.msra.mxu0 %v2497
    %2850 = vmatprep.subr.bf16.mxu0 %v2490
    %2851 = vmatpush2.bf16.msra.mxu0 %v2489
    %2852 = vmatprep.subr.bf16.mxu0 %v2482
    %2853 = vmatpush2.bf16.msra.mxu0 %v2481
    %2854 = vmatprep.subr.bf16.mxu0 %v2474
    %2855 = vmatpush2.bf16.msra.mxu0 %v2473
    %2856 = vmatprep.subr.bf16.mxu0 %v2466
    %2857 = vmatpush2.bf16.msra.mxu0 %v2465
    %2858 = vmatprep.mubr.bf16.mxu0 %v1244
    %2859 = vmatmul.mubr.bf16.gmra.mxu0 %v1243
    %v2860 = vpop.f32.mrf.mxu0
    %v2861 = vadd.f32 %v2820, %v2860
    %v2862 = vpop.f32.mrf.mxu0
    %v2863 = vadd.f32 %v2822, %v2862
    %v2864 = vpop.f32.mrf.mxu0
    %v2865 = vpop.f32.mrf.mxu0
    %2866 = vdwg.mxu0
    %2867 = vmatprep.subr.bf16.mxu0 %v2332
    %2868 = vmatpush1.bf16.msra.mxu0 %v2331
    %2869 = vmatprep.subr.bf16.mxu0 %v2324
    %2870 = vmatpush1.bf16.msra.mxu0 %v2323
    %2871 = vmatprep.subr.bf16.mxu0 %v2316
    %2872 = vmatpush1.bf16.msra.mxu0 %v2315
    %2873 = vmatprep.subr.bf16.mxu0 %v2308
    %2874 = vmatpush1.bf16.msra.mxu0 %v2307
    %2875 = vmatprep.subr.bf16.mxu0 %v2300
    %2876 = vmatpush1.bf16.msra.mxu0 %v2299
    %2877 = vmatprep.subr.bf16.mxu0 %v2292
    %2878 = vmatpush1.bf16.msra.mxu0 %v2291
    %2879 = vmatprep.subr.bf16.mxu0 %v2284
    %2880 = vmatpush1.bf16.msra.mxu0 %v2283
    %2881 = vmatprep.subr.bf16.mxu0 %v2276
    %2882 = vmatpush1.bf16.msra.mxu0 %v2275
    %2883 = vmatprep.subr.bf16.mxu0 %v2396
    %2884 = vmatpush2.bf16.msra.mxu0 %v2395
    %2885 = vmatprep.subr.bf16.mxu0 %v2388
    %2886 = vmatpush2.bf16.msra.mxu0 %v2387
    %2887 = vmatprep.subr.bf16.mxu0 %v2380
    %2888 = vmatpush2.bf16.msra.mxu0 %v2379
    %2889 = vmatprep.subr.bf16.mxu0 %v2372
    %2890 = vmatpush2.bf16.msra.mxu0 %v2371
    %2891 = vmatprep.subr.bf16.mxu0 %v2364
    %2892 = vmatpush2.bf16.msra.mxu0 %v2363
    %2893 = vmatprep.subr.bf16.mxu0 %v2356
    %2894 = vmatpush2.bf16.msra.mxu0 %v2355
    %2895 = vmatprep.subr.bf16.mxu0 %v2348
    %2896 = vmatpush2.bf16.msra.mxu0 %v2347
    %2897 = vmatprep.subr.bf16.mxu0 %v2340
    %2898 = vmatpush2.bf16.msra.mxu0 %v2339
    %2899 = vmatprep.mubr.bf16.mxu0 %v1242
    %2900 = vmatmul.mubr.bf16.gmra.mxu0 %v1241
    %v2901 = vpop.f32.mrf.mxu0
    %v2902 = vadd.f32 0.0, %v2901
    %v2903 = vpop.f32.mrf.mxu0
    %v2904 = vadd.f32 0.0, %v2903
    %v2905 = vpop.f32.mrf.mxu0
    %v2906 = vpop.f32.mrf.mxu0
    %2907 = vdwg.mxu0
    %2908 = vmatprep.subr.bf16.mxu0 %v2460
    %2909 = vmatpush1.bf16.msra.mxu0 %v2459
    %2910 = vmatprep.subr.bf16.mxu0 %v2452
    %2911 = vmatpush1.bf16.msra.mxu0 %v2451
    %2912 = vmatprep.subr.bf16.mxu0 %v2444
    %2913 = vmatpush1.bf16.msra.mxu0 %v2443
    %2914 = vmatprep.subr.bf16.mxu0 %v2436
    %2915 = vmatpush1.bf16.msra.mxu0 %v2435
    %2916 = vmatprep.subr.bf16.mxu0 %v2428
    %2917 = vmatpush1.bf16.msra.mxu0 %v2427
    %2918 = vmatprep.subr.bf16.mxu0 %v2420
    %2919 = vmatpush1.bf16.msra.mxu0 %v2419
    %2920 = vmatprep.subr.bf16.mxu0 %v2412
    %2921 = vmatpush1.bf16.msra.mxu0 %v2411
    %2922 = vmatprep.subr.bf16.mxu0 %v2404
    %2923 = vmatpush1.bf16.msra.mxu0 %v2403
    %2924 = vmatprep.subr.bf16.mxu0 %v2524
    %2925 = vmatpush2.bf16.msra.mxu0 %v2523
    %2926 = vmatprep.subr.bf16.mxu0 %v2516
    %2927 = vmatpush2.bf16.msra.mxu0 %v2515
    %2928 = vmatprep.subr.bf16.mxu0 %v2508
    %2929 = vmatpush2.bf16.msra.mxu0 %v2507
    %2930 = vmatprep.subr.bf16.mxu0 %v2500
    %2931 = vmatpush2.bf16.msra.mxu0 %v2499
    %2932 = vmatprep.subr.bf16.mxu0 %v2492
    %2933 = vmatpush2.bf16.msra.mxu0 %v2491
    %2934 = vmatprep.subr.bf16.mxu0 %v2484
    %2935 = vmatpush2.bf16.msra.mxu0 %v2483
    %2936 = vmatprep.subr.bf16.mxu0 %v2476
    %2937 = vmatpush2.bf16.msra.mxu0 %v2475
    %2938 = vmatprep.subr.bf16.mxu0 %v2468
    %2939 = vmatpush2.bf16.msra.mxu0 %v2467
    %2940 = vmatprep.mubr.bf16.mxu0 %v1244
    %2941 = vmatmul.mubr.bf16.gmra.mxu0 %v1243
    %v2942 = vpop.f32.mrf.mxu0
    %v2943 = vadd.f32 %v2902, %v2942
    %v2944 = vpop.f32.mrf.mxu0
    %v2945 = vadd.f32 %v2904, %v2944
    %v2946 = vpop.f32.mrf.mxu0
    %v2947 = vpop.f32.mrf.mxu0
    %2948 = vdwg.mxu0
    %2949 = vmatprep.subr.bf16.mxu0 %v2334
    %2950 = vmatpush1.bf16.msra.mxu0 %v2333
    %2951 = vmatprep.subr.bf16.mxu0 %v2326
    %2952 = vmatpush1.bf16.msra.mxu0 %v2325
    %2953 = vmatprep.subr.bf16.mxu0 %v2318
    %2954 = vmatpush1.bf16.msra.mxu0 %v2317
    %2955 = vmatprep.subr.bf16.mxu0 %v2310
    %2956 = vmatpush1.bf16.msra.mxu0 %v2309
    %2957 = vmatprep.subr.bf16.mxu0 %v2302
    %2958 = vmatpush1.bf16.msra.mxu0 %v2301
    %2959 = vmatprep.subr.bf16.mxu0 %v2294
    %2960 = vmatpush1.bf16.msra.mxu0 %v2293
    %2961 = vmatprep.subr.bf16.mxu0 %v2286
    %2962 = vmatpush1.bf16.msra.mxu0 %v2285
    %2963 = vmatprep.subr.bf16.mxu0 %v2278
    %2964 = vmatpush1.bf16.msra.mxu0 %v2277
    %2965 = vmatprep.subr.bf16.mxu0 %v2398
    %2966 = vmatpush2.bf16.msra.mxu0 %v2397
    %2967 = vmatprep.subr.bf16.mxu0 %v2390
    %2968 = vmatpush2.bf16.msra.mxu0 %v2389
    %2969 = vmatprep.subr.bf16.mxu0 %v2382
    %2970 = vmatpush2.bf16.msra.mxu0 %v2381
    %2971 = vmatprep.subr.bf16.mxu0 %v2374
    %2972 = vmatpush2.bf16.msra.mxu0 %v2373
    %2973 = vmatprep.subr.bf16.mxu0 %v2366
    %2974 = vmatpush2.bf16.msra.mxu0 %v2365
    %2975 = vmatprep.subr.bf16.mxu0 %v2358
    %2976 = vmatpush2.bf16.msra.mxu0 %v2357
    %2977 = vmatprep.subr.bf16.mxu0 %v2350
    %2978 = vmatpush2.bf16.msra.mxu0 %v2349
    %2979 = vmatprep.subr.bf16.mxu0 %v2342
    %2980 = vmatpush2.bf16.msra.mxu0 %v2341
    %2981 = vmatprep.mubr.bf16.mxu0 %v1242
    %2982 = vmatmul.mubr.bf16.gmra.mxu0 %v1241
    %v2983 = vpop.f32.mrf.mxu0
    %v2984 = vadd.f32 0.0, %v2983
    %v2985 = vpop.f32.mrf.mxu0
    %v2986 = vadd.f32 0.0, %v2985
    %v2987 = vpop.f32.mrf.mxu0
    %v2988 = vpop.f32.mrf.mxu0
    %2989 = vdwg.mxu0
    %2990 = vmatprep.subr.bf16.mxu0 %v2462
    %2991 = vmatpush1.bf16.msra.mxu0 %v2461
    %2992 = vmatprep.subr.bf16.mxu0 %v2454
    %2993 = vmatpush1.bf16.msra.mxu0 %v2453
    %2994 = vmatprep.subr.bf16.mxu0 %v2446
    %2995 = vmatpush1.bf16.msra.mxu0 %v2445
    %2996 = vmatprep.subr.bf16.mxu0 %v2438
    %2997 = vmatpush1.bf16.msra.mxu0 %v2437
    %2998 = vmatprep.subr.bf16.mxu0 %v2430
    %2999 = vmatpush1.bf16.msra.mxu0 %v2429
    %3000 = vmatprep.subr.bf16.mxu0 %v2422
    %3001 = vmatpush1.bf16.msra.mxu0 %v2421
    %3002 = vmatprep.subr.bf16.mxu0 %v2414
    %3003 = vmatpush1.bf16.msra.mxu0 %v2413
    %3004 = vmatprep.subr.bf16.mxu0 %v2406
    %3005 = vmatpush1.bf16.msra.mxu0 %v2405
    %3006 = vmatprep.subr.bf16.mxu0 %v2526
    %3007 = vmatpush2.bf16.msra.mxu0 %v2525
    %3008 = vmatprep.subr.bf16.mxu0 %v2518
    %3009 = vmatpush2.bf16.msra.mxu0 %v2517
    %3010 = vmatprep.subr.bf16.mxu0 %v2510
    %3011 = vmatpush2.bf16.msra.mxu0 %v2509
    %3012 = vmatprep.subr.bf16.mxu0 %v2502
    %3013 = vmatpush2.bf16.msra.mxu0 %v2501
    %3014 = vmatprep.subr.bf16.mxu0 %v2494
    %3015 = vmatpush2.bf16.msra.mxu0 %v2493
    %3016 = vmatprep.subr.bf16.mxu0 %v2486
    %3017 = vmatpush2.bf16.msra.mxu0 %v2485
    %3018 = vmatprep.subr.bf16.mxu0 %v2478
    %3019 = vmatpush2.bf16.msra.mxu0 %v2477
    %3020 = vmatprep.subr.bf16.mxu0 %v2470
    %3021 = vmatpush2.bf16.msra.mxu0 %v2469
    %3022 = vmatprep.mubr.bf16.mxu0 %v1244
    %3023 = vmatmul.mubr.bf16.gmra.mxu0 %v1243
    %v3024 = vpop.f32.mrf.mxu0
    %v3025 = vadd.f32 %v2984, %v3024
    %v3026 = vpop.f32.mrf.mxu0
    %v3027 = vadd.f32 %v2986, %v3026
    %v3028 = vpop.f32.mrf.mxu0
    %v3029 = vpop.f32.mrf.mxu0
    %3030 = vdwg.mxu0
    %3031 = vmatprep.subr.bf16.mxu0 %v2336
    %3032 = vmatpush1.bf16.msra.mxu0 %v2335
    %3033 = vmatprep.subr.bf16.mxu0 %v2328
    %3034 = vmatpush1.bf16.msra.mxu0 %v2327
    %3035 = vmatprep.subr.bf16.mxu0 %v2320
    %3036 = vmatpush1.bf16.msra.mxu0 %v2319
    %3037 = vmatprep.subr.bf16.mxu0 %v2312
    %3038 = vmatpush1.bf16.msra.mxu0 %v2311
    %3039 = vmatprep.subr.bf16.mxu0 %v2304
    %3040 = vmatpush1.bf16.msra.mxu0 %v2303
    %3041 = vmatprep.subr.bf16.mxu0 %v2296
    %3042 = vmatpush1.bf16.msra.mxu0 %v2295
    %3043 = vmatprep.subr.bf16.mxu0 %v2288
    %3044 = vmatpush1.bf16.msra.mxu0 %v2287
    %3045 = vmatprep.subr.bf16.mxu0 %v2280
    %3046 = vmatpush1.bf16.msra.mxu0 %v2279
    %3047 = vmatprep.subr.bf16.mxu0 %v2400
    %3048 = vmatpush2.bf16.msra.mxu0 %v2399
    %3049 = vmatprep.subr.bf16.mxu0 %v2392
    %3050 = vmatpush2.bf16.msra.mxu0 %v2391
    %3051 = vmatprep.subr.bf16.mxu0 %v2384
    %3052 = vmatpush2.bf16.msra.mxu0 %v2383
    %3053 = vmatprep.subr.bf16.mxu0 %v2376
    %3054 = vmatpush2.bf16.msra.mxu0 %v2375
    %3055 = vmatprep.subr.bf16.mxu0 %v2368
    %3056 = vmatpush2.bf16.msra.mxu0 %v2367
    %3057 = vmatprep.subr.bf16.mxu0 %v2360
    %3058 = vmatpush2.bf16.msra.mxu0 %v2359
    %3059 = vmatprep.subr.bf16.mxu0 %v2352
    %3060 = vmatpush2.bf16.msra.mxu0 %v2351
    %3061 = vmatprep.subr.bf16.mxu0 %v2344
    %3062 = vmatpush2.bf16.msra.mxu0 %v2343
    %3063 = vmatprep.mubr.bf16.mxu0 %v1242
    %3064 = vmatmul.mubr.bf16.gmra.mxu0 %v1241
    %v3065 = vpop.f32.mrf.mxu0
    %v3066 = vadd.f32 0.0, %v3065
    %v3067 = vpop.f32.mrf.mxu0
    %v3068 = vadd.f32 0.0, %v3067
    %v3069 = vpop.f32.mrf.mxu0
    %v3070 = vpop.f32.mrf.mxu0
    %3071 = vdwg.mxu0
    %3072 = vmatprep.subr.bf16.mxu0 %v2464
    %3073 = vmatpush1.bf16.msra.mxu0 %v2463
    %3074 = vmatprep.subr.bf16.mxu0 %v2456
    %3075 = vmatpush1.bf16.msra.mxu0 %v2455
    %3076 = vmatprep.subr.bf16.mxu0 %v2448
    %3077 = vmatpush1.bf16.msra.mxu0 %v2447
    %3078 = vmatprep.subr.bf16.mxu0 %v2440
    %3079 = vmatpush1.bf16.msra.mxu0 %v2439
    %3080 = vmatprep.subr.bf16.mxu0 %v2432
    %3081 = vmatpush1.bf16.msra.mxu0 %v2431
    %3082 = vmatprep.subr.bf16.mxu0 %v2424
    %3083 = vmatpush1.bf16.msra.mxu0 %v2423
    %3084 = vmatprep.subr.bf16.mxu0 %v2416
    %3085 = vmatpush1.bf16.msra.mxu0 %v2415
    %3086 = vmatprep.subr.bf16.mxu0 %v2408
    %3087 = vmatpush1.bf16.msra.mxu0 %v2407
    %3088 = vmatprep.subr.bf16.mxu0 %v2528
    %3089 = vmatpush2.bf16.msra.mxu0 %v2527
    %3090 = vmatprep.subr.bf16.mxu0 %v2520
    %3091 = vmatpush2.bf16.msra.mxu0 %v2519
    %3092 = vmatprep.subr.bf16.mxu0 %v2512
    %3093 = vmatpush2.bf16.msra.mxu0 %v2511
    %3094 = vmatprep.subr.bf16.mxu0 %v2504
    %3095 = vmatpush2.bf16.msra.mxu0 %v2503
    %3096 = vmatprep.subr.bf16.mxu0 %v2496
    %3097 = vmatpush2.bf16.msra.mxu0 %v2495
    %3098 = vmatprep.subr.bf16.mxu0 %v2488
    %3099 = vmatpush2.bf16.msra.mxu0 %v2487
    %3100 = vmatprep.subr.bf16.mxu0 %v2480
    %3101 = vmatpush2.bf16.msra.mxu0 %v2479
    %3102 = vmatprep.subr.bf16.mxu0 %v2472
    %3103 = vmatpush2.bf16.msra.mxu0 %v2471
    %3104 = vmatprep.mubr.bf16.mxu0 %v1244
    %3105 = vmatmul.mubr.bf16.gmra.mxu0 %v1243
    %v3106 = vpop.f32.mrf.mxu0
    %v3107 = vadd.f32 %v3066, %v3106
    %v3108 = vpop.f32.mrf.mxu0
    %v3109 = vadd.f32 %v3068, %v3108
    %v3110 = vpop.f32.mrf.mxu0
    %v3111 = vpop.f32.mrf.mxu0
    %3112 = vdwg.mxu0
    %v3113 = vrot.slane %v2861, 4
    %v3114 = vadd.f32 %v2861, %v3113
    %v3115 = vrot.slane %v3114, 2
    %v3116 = vadd.f32 %v3114, %v3115
    %v3117 = vrot.slane %v3116, 1
    %v3118 = vadd.f32 %v3116, %v3117
    %v3119 = vrot.slane %v2863, 4
    %v3120 = vadd.f32 %v2863, %v3119
    %v3121 = vrot.slane %v3120, 2
    %v3122 = vadd.f32 %v3120, %v3121
    %v3123 = vrot.slane %v3122, 1
    %v3124 = vadd.f32 %v3122, %v3123
    %v3125 = vrot.slane %v2943, 4
    %v3126 = vadd.f32 %v2943, %v3125
    %v3127 = vrot.slane %v3126, 2
    %v3128 = vadd.f32 %v3126, %v3127
    %v3129 = vrot.slane %v3128, 1
    %v3130 = vadd.f32 %v3128, %v3129
    %v3131 = vrot.slane %v2945, 4
    %v3132 = vadd.f32 %v2945, %v3131
    %v3133 = vrot.slane %v3132, 2
    %v3134 = vadd.f32 %v3132, %v3133
    %v3135 = vrot.slane %v3134, 1
    %v3136 = vadd.f32 %v3134, %v3135
    %v3137 = vrot.slane %v3025, 4
    %v3138 = vadd.f32 %v3025, %v3137
    %v3139 = vrot.slane %v3138, 2
    %v3140 = vadd.f32 %v3138, %v3139
    %v3141 = vrot.slane %v3140, 1
    %v3142 = vadd.f32 %v3140, %v3141
    %v3143 = vrot.slane %v3027, 4
    %v3144 = vadd.f32 %v3027, %v3143
    %v3145 = vrot.slane %v3144, 2
    %v3146 = vadd.f32 %v3144, %v3145
    %v3147 = vrot.slane %v3146, 1
    %v3148 = vadd.f32 %v3146, %v3147
    %v3149 = vrot.slane %v3107, 4
    %v3150 = vadd.f32 %v3107, %v3149
    %v3151 = vrot.slane %v3150, 2
    %v3152 = vadd.f32 %v3150, %v3151
    %v3153 = vrot.slane %v3152, 1
    %v3154 = vadd.f32 %v3152, %v3153
    %v3155 = vrot.slane %v3109, 4
    %v3156 = vadd.f32 %v3109, %v3155
    %v3157 = vrot.slane %v3156, 2
    %v3158 = vadd.f32 %v3156, %v3157
    %v3159 = vrot.slane %v3158, 1
    %v3160 = vadd.f32 %v3158, %v3159
    %v3161 = vmul.f32 %v3118, %v558
    %v3162 = vmul.f32 %v3124, %v558
    %v3163 = vmul.f32 %v3130, %v558
    %v3164 = vmul.f32 %v3136, %v558
    %v3165 = vmul.f32 %v3142, %v558
    %v3166 = vmul.f32 %v3148, %v558
    %v3167 = vmul.f32 %v3154, %v558
    %v3168 = vmul.f32 %v3160, %v558
    %v3169 = vmul.f32 %v2861, %v2861
    %v3170 = vmul.f32 %v2863, %v2863
    %v3171 = vmul.f32 %v2943, %v2943
    %v3172 = vmul.f32 %v2945, %v2945
    %v3173 = vmul.f32 %v3025, %v3025
    %v3174 = vmul.f32 %v3027, %v3027
    %v3175 = vmul.f32 %v3107, %v3107
    %v3176 = vmul.f32 %v3109, %v3109
    %v3177 = vrot.slane %v3169, 4
    %v3178 = vadd.f32 %v3169, %v3177
    %v3179 = vrot.slane %v3178, 2
    %v3180 = vadd.f32 %v3178, %v3179
    %v3181 = vrot.slane %v3180, 1
    %v3182 = vadd.f32 %v3180, %v3181
    %v3183 = vrot.slane %v3170, 4
    %v3184 = vadd.f32 %v3170, %v3183
    %v3185 = vrot.slane %v3184, 2
    %v3186 = vadd.f32 %v3184, %v3185
    %v3187 = vrot.slane %v3186, 1
    %v3188 = vadd.f32 %v3186, %v3187
    %v3189 = vrot.slane %v3171, 4
    %v3190 = vadd.f32 %v3171, %v3189
    %v3191 = vrot.slane %v3190, 2
    %v3192 = vadd.f32 %v3190, %v3191
    %v3193 = vrot.slane %v3192, 1
    %v3194 = vadd.f32 %v3192, %v3193
    %v3195 = vrot.slane %v3172, 4
    %v3196 = vadd.f32 %v3172, %v3195
    %v3197 = vrot.slane %v3196, 2
    %v3198 = vadd.f32 %v3196, %v3197
    %v3199 = vrot.slane %v3198, 1
    %v3200 = vadd.f32 %v3198, %v3199
    %v3201 = vrot.slane %v3173, 4
    %v3202 = vadd.f32 %v3173, %v3201
    %v3203 = vrot.slane %v3202, 2
    %v3204 = vadd.f32 %v3202, %v3203
    %v3205 = vrot.slane %v3204, 1
    %v3206 = vadd.f32 %v3204, %v3205
    %v3207 = vrot.slane %v3174, 4
    %v3208 = vadd.f32 %v3174, %v3207
    %v3209 = vrot.slane %v3208, 2
    %v3210 = vadd.f32 %v3208, %v3209
    %v3211 = vrot.slane %v3210, 1
    %v3212 = vadd.f32 %v3210, %v3211
    %v3213 = vrot.slane %v3175, 4
    %v3214 = vadd.f32 %v3175, %v3213
    %v3215 = vrot.slane %v3214, 2
    %v3216 = vadd.f32 %v3214, %v3215
    %v3217 = vrot.slane %v3216, 1
    %v3218 = vadd.f32 %v3216, %v3217
    %v3219 = vrot.slane %v3176, 4
    %v3220 = vadd.f32 %v3176, %v3219
    %v3221 = vrot.slane %v3220, 2
    %v3222 = vadd.f32 %v3220, %v3221
    %v3223 = vrot.slane %v3222, 1
    %v3224 = vadd.f32 %v3222, %v3223
    %v3225 = vmul.f32 %v3182, %v558
    %v3226 = vmul.f32 %v3188, %v558
    %v3227 = vmul.f32 %v3194, %v558
    %v3228 = vmul.f32 %v3200, %v558
    %v3229 = vmul.f32 %v3206, %v558
    %v3230 = vmul.f32 %v3212, %v558
    %v3231 = vmul.f32 %v3218, %v558
    %v3232 = vmul.f32 %v3224, %v558
    %v3233 = vmul.f32 %v3161, %v3161
    %v3234 = vmul.f32 %v3162, %v3162
    %v3235 = vmul.f32 %v3163, %v3163
    %v3236 = vmul.f32 %v3164, %v3164
    %v3237 = vmul.f32 %v3165, %v3165
    %v3238 = vmul.f32 %v3166, %v3166
    %v3239 = vmul.f32 %v3167, %v3167
    %v3240 = vmul.f32 %v3168, %v3168
    %v3241 = vsub.f32 %v3225, %v3233
    %v3242 = vsub.f32 %v3226, %v3234
    %v3243 = vsub.f32 %v3227, %v3235
    %v3244 = vsub.f32 %v3228, %v3236
    %v3245 = vsub.f32 %v3229, %v3237
    %v3246 = vsub.f32 %v3230, %v3238
    %v3247 = vsub.f32 %v3231, %v3239
    %v3248 = vsub.f32 %v3232, %v3240
    %v3249 = vadd.f32 %v3241, 0.8
    %v3250 = vadd.f32 %v3242, 0.8
    %v3251 = vadd.f32 %v3243, 0.8
    %v3252 = vadd.f32 %v3244, 0.8
    %v3253 = vadd.f32 %v3245, 0.8
    %v3254 = vadd.f32 %v3246, 0.8
    %v3255 = vadd.f32 %v3247, 0.8
    %v3256 = vadd.f32 %v3248, 0.8
    %v3257 = vrsqrt.pop %v3249
    %v3258 = vrsqrt.pop %v3250
    %v3259 = vrsqrt.pop %v3251
    %v3260 = vrsqrt.pop %v3252
    %v3261 = vrsqrt.pop %v3253
    %v3262 = vrsqrt.pop %v3254
    %v3263 = vrsqrt.pop %v3255
    %v3264 = vrsqrt.pop %v3256
    %v3265 = vmul.f32 %v127, %v3257
    %v3266 = vmul.f32 %v128, %v3258
    %v3267 = vmul.f32 %v129, %v3259
    %v3268 = vmul.f32 %v130, %v3260
    %v3269 = vmul.f32 %v131, %v3261
    %v3270 = vmul.f32 %v132, %v3262
    %v3271 = vmul.f32 %v133, %v3263
    %v3272 = vmul.f32 %v134, %v3264
    %v3273 = vmul.f32 %v3265, %v3161
    %v3274 = vmul.f32 %v3266, %v3162
    %v3275 = vmul.f32 %v3267, %v3163
    %v3276 = vmul.f32 %v3268, %v3164
    %v3277 = vmul.f32 %v3269, %v3165
    %v3278 = vmul.f32 %v3270, %v3166
    %v3279 = vmul.f32 %v3271, %v3167
    %v3280 = vmul.f32 %v3272, %v3168
    %v3289 = vrot.slane %v3273, 7
    %v3290 = vrot.slane %v3274, 7
    %v3291 = vrot.slane %v3275, 7
    %v3292 = vrot.slane %v3276, 7
    %v3293 = vrot.slane %v3277, 7
    %v3294 = vrot.slane %v3278, 7
    %v3295 = vrot.slane %v3279, 7
    %v3296 = vrot.slane %v3280, 7
    %v3305 = vsub.f32 %v127, %v3289
    %v3306 = vsub.f32 %v128, %v3290
    %v3307 = vsub.f32 %v129, %v3291
    %v3308 = vsub.f32 %v130, %v3292
    %v3309 = vsub.f32 %v131, %v3293
    %v3310 = vsub.f32 %v132, %v3294
    %v3311 = vsub.f32 %v133, %v3295
    %v3312 = vsub.f32 %v134, %v3296
    %v3313 = vlaneseq
    %v3314 = vshrl.u32 %v3313, 7
    %v3315 = vsub.s32 5, %v3314
    %v3316 = vrot.slane %v3265, %v3315
    %v3317 = vlaneseq
    %v3318 = vshrl.u32 %v3317, 7
    %v3319 = vsub.s32 5, %v3318
    %v3320 = vrot.slane %v3266, %v3319
    %v3321 = vlaneseq
    %v3322 = vshrl.u32 %v3321, 7
    %v3323 = vsub.s32 5, %v3322
    %v3324 = vrot.slane %v3267, %v3323
    %v3325 = vlaneseq
    %v3326 = vshrl.u32 %v3325, 7
    %v3327 = vsub.s32 5, %v3326
    %v3328 = vrot.slane %v3268, %v3327
    %v3329 = vlaneseq
    %v3330 = vshrl.u32 %v3329, 7
    %v3331 = vsub.s32 5, %v3330
    %v3332 = vrot.slane %v3269, %v3331
    %v3333 = vlaneseq
    %v3334 = vshrl.u32 %v3333, 7
    %v3335 = vsub.s32 5, %v3334
    %v3336 = vrot.slane %v3270, %v3335
    %v3337 = vlaneseq
    %v3338 = vshrl.u32 %v3337, 7
    %v3339 = vsub.s32 5, %v3338
    %v3340 = vrot.slane %v3271, %v3339
    %v3341 = vlaneseq
    %v3342 = vshrl.u32 %v3341, 7
    %v3343 = vsub.s32 5, %v3342
    %v3344 = vrot.slane %v3272, %v3343
    %v3345 = vmul.f32 %v2861, %v3316
    %v3346 = vmul.f32 %v2863, %v3320
    %v3347 = vmul.f32 %v2943, %v3324
    %v3348 = vmul.f32 %v2945, %v3328
    %v3349 = vmul.f32 %v3025, %v3332
    %v3350 = vmul.f32 %v3027, %v3336
    %v3351 = vmul.f32 %v3107, %v3340
    %v3352 = vmul.f32 %v3109, %v3344
    %v3353 = vlaneseq
    %v3354 = vshrl.u32 %v3353, 7
    %v3355 = vsub.s32 6, %v3354
    %v3356 = vrot.slane %v3305, %v3355
    %v3357 = vlaneseq
    %v3358 = vshrl.u32 %v3357, 7
    %v3359 = vsub.s32 6, %v3358
    %v3360 = vrot.slane %v3306, %v3359
    %v3361 = vlaneseq
    %v3362 = vshrl.u32 %v3361, 7
    %v3363 = vsub.s32 6, %v3362
    %v3364 = vrot.slane %v3307, %v3363
    %v3365 = vlaneseq
    %v3366 = vshrl.u32 %v3365, 7
    %v3367 = vsub.s32 6, %v3366
    %v3368 = vrot.slane %v3308, %v3367
    %v3369 = vlaneseq
    %v3370 = vshrl.u32 %v3369, 7
    %v3371 = vsub.s32 6, %v3370
    %v3372 = vrot.slane %v3309, %v3371
    %v3373 = vlaneseq
    %v3374 = vshrl.u32 %v3373, 7
    %v3375 = vsub.s32 6, %v3374
    %v3376 = vrot.slane %v3310, %v3375
    %v3377 = vlaneseq
    %v3378 = vshrl.u32 %v3377, 7
    %v3379 = vsub.s32 6, %v3378
    %v3380 = vrot.slane %v3311, %v3379
    %v3381 = vlaneseq
    %v3382 = vshrl.u32 %v3381, 7
    %v3383 = vsub.s32 6, %v3382
    %v3384 = vrot.slane %v3312, %v3383
    %v3385 = vadd.f32 %v3345, %v3356
    %v3386 = vadd.f32 %v3346, %v3360
    %v3387 = vadd.f32 %v3347, %v3364
    %v3388 = vadd.f32 %v3348, %v3368
    %v3389 = vadd.f32 %v3349, %v3372
    %v3390 = vadd.f32 %v3350, %v3376
    %v3391 = vadd.f32 %v3351, %v3380
    %v3392 = vadd.f32 %v3352, %v3384
    %v3393 = vmul.f32 %v3385, 0.2
    %v3394 = vmul.f32 %v3386, 0.2
    %v3395 = vmul.f32 %v3387, 0.2
    %v3396 = vmul.f32 %v3388, 0.2
    %v3397 = vmul.f32 %v3389, 0.2
    %v3398 = vmul.f32 %v3390, 0.2
    %v3399 = vmul.f32 %v3391, 0.2
    %v3400 = vmul.f32 %v3392, 0.2
    %v3401 = vmax.f32 %v3385, %v3393
    %v3402 = vmax.f32 %v3386, %v3394
    %v3403 = vmax.f32 %v3387, %v3395
    %v3404 = vmax.f32 %v3388, %v3396
    %v3405 = vmax.f32 %v3389, %v3397
    %v3406 = vmax.f32 %v3390, %v3398
    %v3407 = vmax.f32 %v3391, %v3399
    %v3408 = vmax.f32 %v3392, %v3400
    %v3409 = vpack.c.bf16 %v3401, %v3401
    %v3410 = vpack.c.bf16 %v3402, %v3402
    %v3411 = vpack.c.bf16 %v3403, %v3403
    %v3412 = vpack.c.bf16 %v3404, %v3404
    %v3413 = vpack.c.bf16 %v3405, %v3405
    %v3414 = vpack.c.bf16 %v3406, %v3406
    %v3415 = vpack.c.bf16 %v3407, %v3407
    %v3416 = vpack.c.bf16 %v3408, %v3408
    %s3417 = smul.u32 4, 128
    %s3418 = smul.u32 %s3417, 1
    %s3419 = sshll.u32 %s3418, 4
    %3420 = dma.done %s115, %s3419
    %v3421 = vld [vmem:[#allocation5] sm:$0xf]
    %v3422 = vld [vmem:[#allocation5 + $0x4] sm:$0xf]
    %v3423 = vld [vmem:[#allocation5 + $0x8] sm:$0xf]
    %v3424 = vld [vmem:[#allocation5 + $0xc] sm:$0xf]
    %v3425 = vld [vmem:[#allocation5 + $0x10] sm:$0xf]
    %v3426 = vld [vmem:[#allocation5 + $0x14] sm:$0xf]
    %v3427 = vld [vmem:[#allocation5 + $0x18] sm:$0xf]
    %v3428 = vld [vmem:[#allocation5 + $0x1c] sm:$0xf]
    %v3429 = vld [vmem:[#allocation5 + $0x20] sm:$0xf]
    %v3430 = vld [vmem:[#allocation5 + $0x24] sm:$0xf]
    %v3431 = vld [vmem:[#allocation5 + $0x28] sm:$0xf]
    %v3432 = vld [vmem:[#allocation5 + $0x2c] sm:$0xf]
    %v3433 = vld [vmem:[#allocation5 + $0x30] sm:$0xf]
    %v3434 = vld [vmem:[#allocation5 + $0x34] sm:$0xf]
    %v3435 = vld [vmem:[#allocation5 + $0x38] sm:$0xf]
    %v3436 = vld [vmem:[#allocation5 + $0x3c] sm:$0xf]
    %v3437 = vld [vmem:[#allocation5 + $0x40] sm:$0xf]
    %v3438 = vld [vmem:[#allocation5 + $0x44] sm:$0xf]
    %v3439 = vld [vmem:[#allocation5 + $0x48] sm:$0xf]
    %v3440 = vld [vmem:[#allocation5 + $0x4c] sm:$0xf]
    %v3441 = vld [vmem:[#allocation5 + $0x50] sm:$0xf]
    %v3442 = vld [vmem:[#allocation5 + $0x54] sm:$0xf]
    %v3443 = vld [vmem:[#allocation5 + $0x58] sm:$0xf]
    %v3444 = vld [vmem:[#allocation5 + $0x5c] sm:$0xf]
    %v3445 = vld [vmem:[#allocation5 + $0x60] sm:$0xf]
    %v3446 = vld [vmem:[#allocation5 + $0x64] sm:$0xf]
    %v3447 = vld [vmem:[#allocation5 + $0x68] sm:$0xf]
    %v3448 = vld [vmem:[#allocation5 + $0x6c] sm:$0xf]
    %v3449 = vld [vmem:[#allocation5 + $0x70] sm:$0xf]
    %v3450 = vld [vmem:[#allocation5 + $0x74] sm:$0xf]
    %v3451 = vld [vmem:[#allocation5 + $0x78] sm:$0xf]
    %v3452 = vld [vmem:[#allocation5 + $0x7c] sm:$0xf]
    %v3453 = vld [vmem:[#allocation5 + $0x80] sm:$0xf]
    %v3454 = vld [vmem:[#allocation5 + $0x84] sm:$0xf]
    %v3455 = vld [vmem:[#allocation5 + $0x88] sm:$0xf]
    %v3456 = vld [vmem:[#allocation5 + $0x8c] sm:$0xf]
    %v3457 = vld [vmem:[#allocation5 + $0x90] sm:$0xf]
    %v3458 = vld [vmem:[#allocation5 + $0x94] sm:$0xf]
    %v3459 = vld [vmem:[#allocation5 + $0x98] sm:$0xf]
    %v3460 = vld [vmem:[#allocation5 + $0x9c] sm:$0xf]
    %v3461 = vld [vmem:[#allocation5 + $0xa0] sm:$0xf]
    %v3462 = vld [vmem:[#allocation5 + $0xa4] sm:$0xf]
    %v3463 = vld [vmem:[#allocation5 + $0xa8] sm:$0xf]
    %v3464 = vld [vmem:[#allocation5 + $0xac] sm:$0xf]
    %v3465 = vld [vmem:[#allocation5 + $0xb0] sm:$0xf]
    %v3466 = vld [vmem:[#allocation5 + $0xb4] sm:$0xf]
    %v3467 = vld [vmem:[#allocation5 + $0xb8] sm:$0xf]
    %v3468 = vld [vmem:[#allocation5 + $0xbc] sm:$0xf]
    %v3469 = vld [vmem:[#allocation5 + $0xc0] sm:$0xf]
    %v3470 = vld [vmem:[#allocation5 + $0xc4] sm:$0xf]
    %v3471 = vld [vmem:[#allocation5 + $0xc8] sm:$0xf]
    %v3472 = vld [vmem:[#allocation5 + $0xcc] sm:$0xf]
    %v3473 = vld [vmem:[#allocation5 + $0xd0] sm:$0xf]
    %v3474 = vld [vmem:[#allocation5 + $0xd4] sm:$0xf]
    %v3475 = vld [vmem:[#allocation5 + $0xd8] sm:$0xf]
    %v3476 = vld [vmem:[#allocation5 + $0xdc] sm:$0xf]
    %v3477 = vld [vmem:[#allocation5 + $0xe0] sm:$0xf]
    %v3478 = vld [vmem:[#allocation5 + $0xe4] sm:$0xf]
    %v3479 = vld [vmem:[#allocation5 + $0xe8] sm:$0xf]
    %v3480 = vld [vmem:[#allocation5 + $0xec] sm:$0xf]
    %v3481 = vld [vmem:[#allocation5 + $0xf0] sm:$0xf]
    %v3482 = vld [vmem:[#allocation5 + $0xf4] sm:$0xf]
    %v3483 = vld [vmem:[#allocation5 + $0xf8] sm:$0xf]
    %v3484 = vld [vmem:[#allocation5 + $0xfc] sm:$0xf]
    %v3485 = vld [vmem:[#allocation5 + $0x100] sm:$0xf]
    %v3486 = vld [vmem:[#allocation5 + $0x104] sm:$0xf]
    %v3487 = vld [vmem:[#allocation5 + $0x108] sm:$0xf]
    %v3488 = vld [vmem:[#allocation5 + $0x10c] sm:$0xf]
    %v3489 = vld [vmem:[#allocation5 + $0x110] sm:$0xf]
    %v3490 = vld [vmem:[#allocation5 + $0x114] sm:$0xf]
    %v3491 = vld [vmem:[#allocation5 + $0x118] sm:$0xf]
    %v3492 = vld [vmem:[#allocation5 + $0x11c] sm:$0xf]
    %v3493 = vld [vmem:[#allocation5 + $0x120] sm:$0xf]
    %v3494 = vld [vmem:[#allocation5 + $0x124] sm:$0xf]
    %v3495 = vld [vmem:[#allocation5 + $0x128] sm:$0xf]
    %v3496 = vld [vmem:[#allocation5 + $0x12c] sm:$0xf]
    %v3497 = vld [vmem:[#allocation5 + $0x130] sm:$0xf]
    %v3498 = vld [vmem:[#allocation5 + $0x134] sm:$0xf]
    %v3499 = vld [vmem:[#allocation5 + $0x138] sm:$0xf]
    %v3500 = vld [vmem:[#allocation5 + $0x13c] sm:$0xf]
    %v3501 = vld [vmem:[#allocation5 + $0x140] sm:$0xf]
    %v3502 = vld [vmem:[#allocation5 + $0x144] sm:$0xf]
    %v3503 = vld [vmem:[#allocation5 + $0x148] sm:$0xf]
    %v3504 = vld [vmem:[#allocation5 + $0x14c] sm:$0xf]
    %v3505 = vld [vmem:[#allocation5 + $0x150] sm:$0xf]
    %v3506 = vld [vmem:[#allocation5 + $0x154] sm:$0xf]
    %v3507 = vld [vmem:[#allocation5 + $0x158] sm:$0xf]
    %v3508 = vld [vmem:[#allocation5 + $0x15c] sm:$0xf]
    %v3509 = vld [vmem:[#allocation5 + $0x160] sm:$0xf]
    %v3510 = vld [vmem:[#allocation5 + $0x164] sm:$0xf]
    %v3511 = vld [vmem:[#allocation5 + $0x168] sm:$0xf]
    %v3512 = vld [vmem:[#allocation5 + $0x16c] sm:$0xf]
    %v3513 = vld [vmem:[#allocation5 + $0x170] sm:$0xf]
    %v3514 = vld [vmem:[#allocation5 + $0x174] sm:$0xf]
    %v3515 = vld [vmem:[#allocation5 + $0x178] sm:$0xf]
    %v3516 = vld [vmem:[#allocation5 + $0x17c] sm:$0xf]
    %v3517 = vld [vmem:[#allocation5 + $0x180] sm:$0xf]
    %v3518 = vld [vmem:[#allocation5 + $0x184] sm:$0xf]
    %v3519 = vld [vmem:[#allocation5 + $0x188] sm:$0xf]
    %v3520 = vld [vmem:[#allocation5 + $0x18c] sm:$0xf]
    %v3521 = vld [vmem:[#allocation5 + $0x190] sm:$0xf]
    %v3522 = vld [vmem:[#allocation5 + $0x194] sm:$0xf]
    %v3523 = vld [vmem:[#allocation5 + $0x198] sm:$0xf]
    %v3524 = vld [vmem:[#allocation5 + $0x19c] sm:$0xf]
    %v3525 = vld [vmem:[#allocation5 + $0x1a0] sm:$0xf]
    %v3526 = vld [vmem:[#allocation5 + $0x1a4] sm:$0xf]
    %v3527 = vld [vmem:[#allocation5 + $0x1a8] sm:$0xf]
    %v3528 = vld [vmem:[#allocation5 + $0x1ac] sm:$0xf]
    %v3529 = vld [vmem:[#allocation5 + $0x1b0] sm:$0xf]
    %v3530 = vld [vmem:[#allocation5 + $0x1b4] sm:$0xf]
    %v3531 = vld [vmem:[#allocation5 + $0x1b8] sm:$0xf]
    %v3532 = vld [vmem:[#allocation5 + $0x1bc] sm:$0xf]
    %v3533 = vld [vmem:[#allocation5 + $0x1c0] sm:$0xf]
    %v3534 = vld [vmem:[#allocation5 + $0x1c4] sm:$0xf]
    %v3535 = vld [vmem:[#allocation5 + $0x1c8] sm:$0xf]
    %v3536 = vld [vmem:[#allocation5 + $0x1cc] sm:$0xf]
    %v3537 = vld [vmem:[#allocation5 + $0x1d0] sm:$0xf]
    %v3538 = vld [vmem:[#allocation5 + $0x1d4] sm:$0xf]
    %v3539 = vld [vmem:[#allocation5 + $0x1d8] sm:$0xf]
    %v3540 = vld [vmem:[#allocation5 + $0x1dc] sm:$0xf]
    %v3541 = vld [vmem:[#allocation5 + $0x1e0] sm:$0xf]
    %v3542 = vld [vmem:[#allocation5 + $0x1e4] sm:$0xf]
    %v3543 = vld [vmem:[#allocation5 + $0x1e8] sm:$0xf]
    %v3544 = vld [vmem:[#allocation5 + $0x1ec] sm:$0xf]
    %v3545 = vld [vmem:[#allocation5 + $0x1f0] sm:$0xf]
    %v3546 = vld [vmem:[#allocation5 + $0x1f4] sm:$0xf]
    %v3547 = vld [vmem:[#allocation5 + $0x1f8] sm:$0xf]
    %v3548 = vld [vmem:[#allocation5 + $0x1fc] sm:$0xf]
    %v3549 = vlaneseq
    %v3550 = vshrl.u32 %v3549, 7
    %v3551 = vsub.s32 7, %v3550
    %v3552 = vrot.slane %v127, %v3551
    %v3681 = vunpack.c.l.b16 %v3421
    %v3682 = vunpack.c.l.b16 %v3422
    %v3683 = vunpack.c.l.b16 %v3423
    %v3684 = vunpack.c.l.b16 %v3424
    %v3685 = vunpack.c.l.b16 %v3425
    %v3686 = vunpack.c.l.b16 %v3426
    %v3687 = vunpack.c.l.b16 %v3427
    %v3688 = vunpack.c.l.b16 %v3428
    %v3689 = vunpack.c.l.b16 %v3429
    %v3690 = vunpack.c.l.b16 %v3430
    %v3691 = vunpack.c.l.b16 %v3431
    %v3692 = vunpack.c.l.b16 %v3432
    %v3693 = vunpack.c.l.b16 %v3433
    %v3694 = vunpack.c.l.b16 %v3434
    %v3695 = vunpack.c.l.b16 %v3435
    %v3696 = vunpack.c.l.b16 %v3436
    %v3697 = vunpack.c.l.b16 %v3437
    %v3698 = vunpack.c.l.b16 %v3438
    %v3699 = vunpack.c.l.b16 %v3439
    %v3700 = vunpack.c.l.b16 %v3440
    %v3701 = vunpack.c.l.b16 %v3441
    %v3702 = vunpack.c.l.b16 %v3442
    %v3703 = vunpack.c.l.b16 %v3443
    %v3704 = vunpack.c.l.b16 %v3444
    %v3705 = vunpack.c.l.b16 %v3445
    %v3706 = vunpack.c.l.b16 %v3446
    %v3707 = vunpack.c.l.b16 %v3447
    %v3708 = vunpack.c.l.b16 %v3448
    %v3709 = vunpack.c.l.b16 %v3449
    %v3710 = vunpack.c.l.b16 %v3450
    %v3711 = vunpack.c.l.b16 %v3451
    %v3712 = vunpack.c.l.b16 %v3452
    %v3713 = vunpack.c.l.b16 %v3453
    %v3714 = vunpack.c.l.b16 %v3454
    %v3715 = vunpack.c.l.b16 %v3455
    %v3716 = vunpack.c.l.b16 %v3456
    %v3717 = vunpack.c.l.b16 %v3457
    %v3718 = vunpack.c.l.b16 %v3458
    %v3719 = vunpack.c.l.b16 %v3459
    %v3720 = vunpack.c.l.b16 %v3460
    %v3721 = vunpack.c.l.b16 %v3461
    %v3722 = vunpack.c.l.b16 %v3462
    %v3723 = vunpack.c.l.b16 %v3463
    %v3724 = vunpack.c.l.b16 %v3464
    %v3725 = vunpack.c.l.b16 %v3465
    %v3726 = vunpack.c.l.b16 %v3466
    %v3727 = vunpack.c.l.b16 %v3467
    %v3728 = vunpack.c.l.b16 %v3468
    %v3729 = vunpack.c.l.b16 %v3469
    %v3730 = vunpack.c.l.b16 %v3470
    %v3731 = vunpack.c.l.b16 %v3471
    %v3732 = vunpack.c.l.b16 %v3472
    %v3733 = vunpack.c.l.b16 %v3473
    %v3734 = vunpack.c.l.b16 %v3474
    %v3735 = vunpack.c.l.b16 %v3475
    %v3736 = vunpack.c.l.b16 %v3476
    %v3737 = vunpack.c.l.b16 %v3477
    %v3738 = vunpack.c.l.b16 %v3478
    %v3739 = vunpack.c.l.b16 %v3479
    %v3740 = vunpack.c.l.b16 %v3480
    %v3741 = vunpack.c.l.b16 %v3481
    %v3742 = vunpack.c.l.b16 %v3482
    %v3743 = vunpack.c.l.b16 %v3483
    %v3744 = vunpack.c.l.b16 %v3484
    %v3745 = vunpack.c.l.b16 %v3485
    %v3746 = vunpack.c.l.b16 %v3486
    %v3747 = vunpack.c.l.b16 %v3487
    %v3748 = vunpack.c.l.b16 %v3488
    %v3749 = vunpack.c.l.b16 %v3489
    %v3750 = vunpack.c.l.b16 %v3490
    %v3751 = vunpack.c.l.b16 %v3491
    %v3752 = vunpack.c.l.b16 %v3492
    %v3753 = vunpack.c.l.b16 %v3493
    %v3754 = vunpack.c.l.b16 %v3494
    %v3755 = vunpack.c.l.b16 %v3495
    %v3756 = vunpack.c.l.b16 %v3496
    %v3757 = vunpack.c.l.b16 %v3497
    %v3758 = vunpack.c.l.b16 %v3498
    %v3759 = vunpack.c.l.b16 %v3499
    %v3760 = vunpack.c.l.b16 %v3500
    %v3761 = vunpack.c.l.b16 %v3501
    %v3762 = vunpack.c.l.b16 %v3502
    %v3763 = vunpack.c.l.b16 %v3503
    %v3764 = vunpack.c.l.b16 %v3504
    %v3765 = vunpack.c.l.b16 %v3505
    %v3766 = vunpack.c.l.b16 %v3506
    %v3767 = vunpack.c.l.b16 %v3507
    %v3768 = vunpack.c.l.b16 %v3508
    %v3769 = vunpack.c.l.b16 %v3509
    %v3770 = vunpack.c.l.b16 %v3510
    %v3771 = vunpack.c.l.b16 %v3511
    %v3772 = vunpack.c.l.b16 %v3512
    %v3773 = vunpack.c.l.b16 %v3513
    %v3774 = vunpack.c.l.b16 %v3514
    %v3775 = vunpack.c.l.b16 %v3515
    %v3776 = vunpack.c.l.b16 %v3516
    %v3777 = vunpack.c.l.b16 %v3517
    %v3778 = vunpack.c.l.b16 %v3518
    %v3779 = vunpack.c.l.b16 %v3519
    %v3780 = vunpack.c.l.b16 %v3520
    %v3781 = vunpack.c.l.b16 %v3521
    %v3782 = vunpack.c.l.b16 %v3522
    %v3783 = vunpack.c.l.b16 %v3523
    %v3784 = vunpack.c.l.b16 %v3524
    %v3785 = vunpack.c.l.b16 %v3525
    %v3786 = vunpack.c.l.b16 %v3526
    %v3787 = vunpack.c.l.b16 %v3527
    %v3788 = vunpack.c.l.b16 %v3528
    %v3789 = vunpack.c.l.b16 %v3529
    %v3790 = vunpack.c.l.b16 %v3530
    %v3791 = vunpack.c.l.b16 %v3531
    %v3792 = vunpack.c.l.b16 %v3532
    %v3793 = vunpack.c.l.b16 %v3533
    %v3794 = vunpack.c.l.b16 %v3534
    %v3795 = vunpack.c.l.b16 %v3535
    %v3796 = vunpack.c.l.b16 %v3536
    %v3797 = vunpack.c.l.b16 %v3537
    %v3798 = vunpack.c.l.b16 %v3538
    %v3799 = vunpack.c.l.b16 %v3539
    %v3800 = vunpack.c.l.b16 %v3540
    %v3801 = vunpack.c.l.b16 %v3541
    %v3802 = vunpack.c.l.b16 %v3542
    %v3803 = vunpack.c.l.b16 %v3543
    %v3804 = vunpack.c.l.b16 %v3544
    %v3805 = vunpack.c.l.b16 %v3545
    %v3806 = vunpack.c.l.b16 %v3546
    %v3807 = vunpack.c.l.b16 %v3547
    %v3808 = vunpack.c.l.b16 %v3548
    %v3809 = vpack.c.b16 %v3682, %v3681
    %v3810 = vpack.c.b16 %v3684, %v3683
    %v3811 = vpack.c.b16 %v3686, %v3685
    %v3812 = vpack.c.b16 %v3688, %v3687
    %v3813 = vpack.c.b16 %v3690, %v3689
    %v3814 = vpack.c.b16 %v3692, %v3691
    %v3815 = vpack.c.b16 %v3694, %v3693
    %v3816 = vpack.c.b16 %v3696, %v3695
    %v3817 = vpack.c.b16 %v3698, %v3697
    %v3818 = vpack.c.b16 %v3700, %v3699
    %v3819 = vpack.c.b16 %v3702, %v3701
    %v3820 = vpack.c.b16 %v3704, %v3703
    %v3821 = vpack.c.b16 %v3706, %v3705
    %v3822 = vpack.c.b16 %v3708, %v3707
    %v3823 = vpack.c.b16 %v3710, %v3709
    %v3824 = vpack.c.b16 %v3712, %v3711
    %v3825 = vpack.c.b16 %v3714, %v3713
    %v3826 = vpack.c.b16 %v3716, %v3715
    %v3827 = vpack.c.b16 %v3718, %v3717
    %v3828 = vpack.c.b16 %v3720, %v3719
    %v3829 = vpack.c.b16 %v3722, %v3721
    %v3830 = vpack.c.b16 %v3724, %v3723
    %v3831 = vpack.c.b16 %v3726, %v3725
    %v3832 = vpack.c.b16 %v3728, %v3727
    %v3833 = vpack.c.b16 %v3730, %v3729
    %v3834 = vpack.c.b16 %v3732, %v3731
    %v3835 = vpack.c.b16 %v3734, %v3733
    %v3836 = vpack.c.b16 %v3736, %v3735
    %v3837 = vpack.c.b16 %v3738, %v3737
    %v3838 = vpack.c.b16 %v3740, %v3739
    %v3839 = vpack.c.b16 %v3742, %v3741
    %v3840 = vpack.c.b16 %v3744, %v3743
    %v3841 = vpack.c.b16 %v3746, %v3745
    %v3842 = vpack.c.b16 %v3748, %v3747
    %v3843 = vpack.c.b16 %v3750, %v3749
    %v3844 = vpack.c.b16 %v3752, %v3751
    %v3845 = vpack.c.b16 %v3754, %v3753
    %v3846 = vpack.c.b16 %v3756, %v3755
    %v3847 = vpack.c.b16 %v3758, %v3757
    %v3848 = vpack.c.b16 %v3760, %v3759
    %v3849 = vpack.c.b16 %v3762, %v3761
    %v3850 = vpack.c.b16 %v3764, %v3763
    %v3851 = vpack.c.b16 %v3766, %v3765
    %v3852 = vpack.c.b16 %v3768, %v3767
    %v3853 = vpack.c.b16 %v3770, %v3769
    %v3854 = vpack.c.b16 %v3772, %v3771
    %v3855 = vpack.c.b16 %v3774, %v3773
    %v3856 = vpack.c.b16 %v3776, %v3775
    %v3857 = vpack.c.b16 %v3778, %v3777
    %v3858 = vpack.c.b16 %v3780, %v3779
    %v3859 = vpack.c.b16 %v3782, %v3781
    %v3860 = vpack.c.b16 %v3784, %v3783
    %v3861 = vpack.c.b16 %v3786, %v3785
    %v3862 = vpack.c.b16 %v3788, %v3787
    %v3863 = vpack.c.b16 %v3790, %v3789
    %v3864 = vpack.c.b16 %v3792, %v3791
    %v3865 = vpack.c.b16 %v3794, %v3793
    %v3866 = vpack.c.b16 %v3796, %v3795
    %v3867 = vpack.c.b16 %v3798, %v3797
    %v3868 = vpack.c.b16 %v3800, %v3799
    %v3869 = vpack.c.b16 %v3802, %v3801
    %v3870 = vpack.c.b16 %v3804, %v3803
    %v3871 = vpack.c.b16 %v3806, %v3805
    %v3872 = vpack.c.b16 %v3808, %v3807
    %3937 = vmatprep.subr.bf16.mxu0 0
    %3938 = vmatpush1.bf16.msra.mxu0 %v3816
    %3939 = vmatprep.subr.bf16.mxu0 0
    %3940 = vmatpush1.bf16.msra.mxu0 %v3815
    %3941 = vmatprep.subr.bf16.mxu0 0
    %3942 = vmatpush1.bf16.msra.mxu0 %v3814
    %3943 = vmatprep.subr.bf16.mxu0 0
    %3944 = vmatpush1.bf16.msra.mxu0 %v3813
    %3945 = vmatprep.subr.bf16.mxu0 0
    %3946 = vmatpush1.bf16.msra.mxu0 %v3812
    %3947 = vmatprep.subr.bf16.mxu0 0
    %3948 = vmatpush1.bf16.msra.mxu0 %v3811
    %3949 = vmatprep.subr.bf16.mxu0 0
    %3950 = vmatpush1.bf16.msra.mxu0 %v3810
    %3951 = vmatprep.subr.bf16.mxu0 0
    %3952 = vmatpush1.bf16.msra.mxu0 %v3809
    %3953 = vmatprep.subr.bf16.mxu0 0
    %3954 = vmatpush2.bf16.msra.mxu0 %v3824
    %3955 = vmatprep.subr.bf16.mxu0 0
    %3956 = vmatpush2.bf16.msra.mxu0 %v3823
    %3957 = vmatprep.subr.bf16.mxu0 0
    %3958 = vmatpush2.bf16.msra.mxu0 %v3822
    %3959 = vmatprep.subr.bf16.mxu0 0
    %3960 = vmatpush2.bf16.msra.mxu0 %v3821
    %3961 = vmatprep.subr.bf16.mxu0 0
    %3962 = vmatpush2.bf16.msra.mxu0 %v3820
    %3963 = vmatprep.subr.bf16.mxu0 0
    %3964 = vmatpush2.bf16.msra.mxu0 %v3819
    %3965 = vmatprep.subr.bf16.mxu0 0
    %3966 = vmatpush2.bf16.msra.mxu0 %v3818
    %3967 = vmatprep.subr.bf16.mxu0 0
    %3968 = vmatpush2.bf16.msra.mxu0 %v3817
    %3969 = vmatprep.mubr.bf16.mxu0 %v3410
    %3970 = vmatmul.mubr.bf16.gmra.mxu0 %v3409
    %v3971 = vpop.f32.mrf.mxu0
    %v3972 = vadd.f32 %v3552, %v3971
    %v3973 = vpop.f32.mrf.mxu0
    %v3974 = vpop.f32.mrf.mxu0
    %v3975 = vpop.f32.mrf.mxu0
    %3976 = vdwg.mxu0
    %3977 = vmatprep.subr.bf16.mxu0 0
    %3978 = vmatpush1.bf16.msra.mxu0 %v3832
    %3979 = vmatprep.subr.bf16.mxu0 0
    %3980 = vmatpush1.bf16.msra.mxu0 %v3831
    %3981 = vmatprep.subr.bf16.mxu0 0
    %3982 = vmatpush1.bf16.msra.mxu0 %v3830
    %3983 = vmatprep.subr.bf16.mxu0 0
    %3984 = vmatpush1.bf16.msra.mxu0 %v3829
    %3985 = vmatprep.subr.bf16.mxu0 0
    %3986 = vmatpush1.bf16.msra.mxu0 %v3828
    %3987 = vmatprep.subr.bf16.mxu0 0
    %3988 = vmatpush1.bf16.msra.mxu0 %v3827
    %3989 = vmatprep.subr.bf16.mxu0 0
    %3990 = vmatpush1.bf16.msra.mxu0 %v3826
    %3991 = vmatprep.subr.bf16.mxu0 0
    %3992 = vmatpush1.bf16.msra.mxu0 %v3825
    %3993 = vmatprep.subr.bf16.mxu0 0
    %3994 = vmatpush2.bf16.msra.mxu0 %v3840
    %3995 = vmatprep.subr.bf16.mxu0 0
    %3996 = vmatpush2.bf16.msra.mxu0 %v3839
    %3997 = vmatprep.subr.bf16.mxu0 0
    %3998 = vmatpush2.bf16.msra.mxu0 %v3838
    %3999 = vmatprep.subr.bf16.mxu0 0
    %4000 = vmatpush2.bf16.msra.mxu0 %v3837
    %4001 = vmatprep.subr.bf16.mxu0 0
    %4002 = vmatpush2.bf16.msra.mxu0 %v3836
    %4003 = vmatprep.subr.bf16.mxu0 0
    %4004 = vmatpush2.bf16.msra.mxu0 %v3835
    %4005 = vmatprep.subr.bf16.mxu0 0
    %4006 = vmatpush2.bf16.msra.mxu0 %v3834
    %4007 = vmatprep.subr.bf16.mxu0 0
    %4008 = vmatpush2.bf16.msra.mxu0 %v3833
    %4009 = vmatprep.mubr.bf16.mxu0 %v3412
    %4010 = vmatmul.mubr.bf16.gmra.mxu0 %v3411
    %v4011 = vpop.f32.mrf.mxu0
    %v4012 = vadd.f32 %v3972, %v4011
    %v4013 = vpop.f32.mrf.mxu0
    %v4014 = vpop.f32.mrf.mxu0
    %v4015 = vpop.f32.mrf.mxu0
    %4016 = vdwg.mxu0
    %4017 = vmatprep.subr.bf16.mxu0 0
    %4018 = vmatpush1.bf16.msra.mxu0 %v3848
    %4019 = vmatprep.subr.bf16.mxu0 0
    %4020 = vmatpush1.bf16.msra.mxu0 %v3847
    %4021 = vmatprep.subr.bf16.mxu0 0
    %4022 = vmatpush1.bf16.msra.mxu0 %v3846
    %4023 = vmatprep.subr.bf16.mxu0 0
    %4024 = vmatpush1.bf16.msra.mxu0 %v3845
    %4025 = vmatprep.subr.bf16.mxu0 0
    %4026 = vmatpush1.bf16.msra.mxu0 %v3844
    %4027 = vmatprep.subr.bf16.mxu0 0
    %4028 = vmatpush1.bf16.msra.mxu0 %v3843
    %4029 = vmatprep.subr.bf16.mxu0 0
    %4030 = vmatpush1.bf16.msra.mxu0 %v3842
    %4031 = vmatprep.subr.bf16.mxu0 0
    %4032 = vmatpush1.bf16.msra.mxu0 %v3841
    %4033 = vmatprep.subr.bf16.mxu0 0
    %4034 = vmatpush2.bf16.msra.mxu0 %v3856
    %4035 = vmatprep.subr.bf16.mxu0 0
    %4036 = vmatpush2.bf16.msra.mxu0 %v3855
    %4037 = vmatprep.subr.bf16.mxu0 0
    %4038 = vmatpush2.bf16.msra.mxu0 %v3854
    %4039 = vmatprep.subr.bf16.mxu0 0
    %4040 = vmatpush2.bf16.msra.mxu0 %v3853
    %4041 = vmatprep.subr.bf16.mxu0 0
    %4042 = vmatpush2.bf16.msra.mxu0 %v3852
    %4043 = vmatprep.subr.bf16.mxu0 0
    %4044 = vmatpush2.bf16.msra.mxu0 %v3851
    %4045 = vmatprep.subr.bf16.mxu0 0
    %4046 = vmatpush2.bf16.msra.mxu0 %v3850
    %4047 = vmatprep.subr.bf16.mxu0 0
    %4048 = vmatpush2.bf16.msra.mxu0 %v3849
    %4049 = vmatprep.mubr.bf16.mxu0 %v3414
    %4050 = vmatmul.mubr.bf16.gmra.mxu0 %v3413
    %v4051 = vpop.f32.mrf.mxu0
    %v4052 = vadd.f32 %v4012, %v4051
    %v4053 = vpop.f32.mrf.mxu0
    %v4054 = vpop.f32.mrf.mxu0
    %v4055 = vpop.f32.mrf.mxu0
    %4056 = vdwg.mxu0
    %4057 = vmatprep.subr.bf16.mxu0 0
    %4058 = vmatpush1.bf16.msra.mxu0 %v3864
    %4059 = vmatprep.subr.bf16.mxu0 0
    %4060 = vmatpush1.bf16.msra.mxu0 %v3863
    %4061 = vmatprep.subr.bf16.mxu0 0
    %4062 = vmatpush1.bf16.msra.mxu0 %v3862
    %4063 = vmatprep.subr.bf16.mxu0 0
    %4064 = vmatpush1.bf16.msra.mxu0 %v3861
    %4065 = vmatprep.subr.bf16.mxu0 0
    %4066 = vmatpush1.bf16.msra.mxu0 %v3860
    %4067 = vmatprep.subr.bf16.mxu0 0
    %4068 = vmatpush1.bf16.msra.mxu0 %v3859
    %4069 = vmatprep.subr.bf16.mxu0 0
    %4070 = vmatpush1.bf16.msra.mxu0 %v3858
    %4071 = vmatprep.subr.bf16.mxu0 0
    %4072 = vmatpush1.bf16.msra.mxu0 %v3857
    %4073 = vmatprep.subr.bf16.mxu0 0
    %4074 = vmatpush2.bf16.msra.mxu0 %v3872
    %4075 = vmatprep.subr.bf16.mxu0 0
    %4076 = vmatpush2.bf16.msra.mxu0 %v3871
    %4077 = vmatprep.subr.bf16.mxu0 0
    %4078 = vmatpush2.bf16.msra.mxu0 %v3870
    %4079 = vmatprep.subr.bf16.mxu0 0
    %4080 = vmatpush2.bf16.msra.mxu0 %v3869
    %4081 = vmatprep.subr.bf16.mxu0 0
    %4082 = vmatpush2.bf16.msra.mxu0 %v3868
    %4083 = vmatprep.subr.bf16.mxu0 0
    %4084 = vmatpush2.bf16.msra.mxu0 %v3867
    %4085 = vmatprep.subr.bf16.mxu0 0
    %4086 = vmatpush2.bf16.msra.mxu0 %v3866
    %4087 = vmatprep.subr.bf16.mxu0 0
    %4088 = vmatpush2.bf16.msra.mxu0 %v3865
    %4089 = vmatprep.mubr.bf16.mxu0 %v3416
    %4090 = vmatmul.mubr.bf16.gmra.mxu0 %v3415
    %v4091 = vpop.f32.mrf.mxu0
    %v4092 = vadd.f32 %v4052, %v4091
    %v4093 = vpop.f32.mrf.mxu0
    %v4094 = vpop.f32.mrf.mxu0
    %v4095 = vpop.f32.mrf.mxu0
    %4096 = vdwg.mxu0
    %v4097 = vtanh.pop %v4092
    %4098 = vst [vmem:[#allocation15] sm:$0xff] %v4097
    // Predicated region
    $region58: #{tpu_custom_call.1} parent=1 // pred_check
      _
    $region59: #{tpu_custom_call.1} parent=1 // pred_check_branch
      %4100 = sbr.rel (0) target = $region61
    $region60: #{tpu_custom_call.1} parent=1 // pred_region
      %s4102 = ssub.s32 128, 128
      %4103 = vsyncadd [#allocation9], %s4102
      %s4105 = sshll.u32 [#allocation15], 4
      %s4106 = int_to_ptr.vmem [resolvable:$true] %s4105
      %4108 = dma.vmem_to_hbm [thread:$0]  %s4106, 128, %s10, [#allocation9]
    $region61: #{tpu_custom_call.1} parent=1 // pred_fallthru
      _
    // Predicated region
    $region62: #{tpu_custom_call.1} parent=1 // pred_check
      _
    $region63: #{tpu_custom_call.1} parent=1 // pred_check_branch
      %4110 = sbr.rel (0) target = $region65
    $region64: #{tpu_custom_call.1} parent=1 // pred_region
      %4111 = dma.done [#allocation9], 128
    $region65: #{tpu_custom_call.1} parent=1 // pred_fallthru
      _
    %4112 = vsyncpa [#allocation8], 1
    %4113 = vsyncpa [#allocation11], 1
    %4114 = vsyncpa [#allocation14], 1
    %4115 = vsyncpa [#allocation9], 1
  %4116 = vsyncmov [#allocation6]
  %s4117 = vpop.sfrf %4116
  %p4118 = scmp.eq.s32.totalorder %s4117, 0
  %p4119 = pneg %p4118
  %4121 = shalt.err (%p4119)
  %s4122 = scalar_lea.sflag [#allocation6], 1
  %4123 = vsyncmov %s4122
  %s4124 = vpop.sfrf %4123
  %p4125 = scmp.eq.s32.totalorder %s4124, 0
  %p4126 = pneg %p4125
  %4128 = shalt.err (%p4126)
  %s4129 = scalar_lea.sflag [#allocation6], 2
  %4130 = vsyncmov %s4129
  %s4131 = vpop.sfrf %4130
  %p4132 = scmp.eq.s32.totalorder %s4131, 0
  %p4133 = pneg %p4132
  %4135 = shalt.err (%p4133)
  %s4136 = scalar_lea.sflag [#allocation6], 3
  %4137 = vsyncmov %s4136
  %s4138 = vpop.sfrf %4137
  %p4139 = scmp.eq.s32.totalorder %s4138, 0
  %p4140 = pneg %p4139
  %4142 = shalt.err (%p4140)

</llo_original>
